<compile_context>
chip_gen: v7x
topology: tpu7x:2x2x1
jax: 0.10.0
libtpu: 0.0.40
codegen_flags: <defaults>
</compile_context>

<pallas_src>
import functools

import jax
import jax.numpy as jnp
from jax.experimental import pallas as pl
from jax.experimental.pallas import tpu as pltpu

N_EMBD = 384
BLOCK_SIZE = 256  # max causal extent in the torch module (only tril[:T,:T] is used)


# ---------------------------------------------------------------------------
# Fused kernel: one batch element per grid step.
#   qkv = x @ W_qkv              (single K=C bf16 MXU matmul; Q already scaled)
#   per head h: s = q_h k_h^T ; causal mask ; e = exp(s-m) ;
#               head_out = (e @ v_h) * 1/rowsum   (normalize AFTER PV matmul)
#               concat[:, h*hs:(h+1)*hs] = head_out (bf16)
#   y = concat @ W_proj + b_proj (single K=C bf16 MXU matmul)
# ---------------------------------------------------------------------------
def _mha_fused_kernel(x_ref, wqkv_ref, wproj_ref, bproj_ref, o_ref, *,
                      num_heads, head_size):
    x = x_ref[0]                      # (T, C) bf16
    wqkv = wqkv_ref[...]              # (C, 3C) bf16, cols = [Q*scale | K | V]
    T = x.shape[0]
    C = num_heads * head_size

    # Fused Q/K/V projection for all heads; cast to bf16 ONCE (single live copy
    # across the unrolled head loop instead of a (T,3C) f32 spill source).
    qkv = jnp.dot(x, wqkv, preferred_element_type=jnp.float32).astype(jnp.bfloat16)

    row = jax.lax.broadcasted_iota(jnp.int32, (T, T), 0)
    col = jax.lax.broadcasted_iota(jnp.int32, (T, T), 1)
    causal = col <= row

    head_outs = []
    for h in range(num_heads):        # static unroll over heads
        lo = h * head_size
        q = qkv[:, lo:lo + head_size]                    # (T, hs) bf16, pre-scaled
        k = qkv[:, C + lo:C + lo + head_size]            # (T, hs) bf16
        v = qkv[:, 2 * C + lo:2 * C + lo + head_size]    # (T, hs) bf16

        s = jax.lax.dot_general(q, k, (((1,), (1,)), ((), ())),
                                preferred_element_type=jnp.float32)  # (T, T) f32
        # Causal mask: diagonal is never masked, so each row max is finite
        # and exp(-inf - m) == 0 (no NaN risk for pure causal attention).
        s = jnp.where(causal, s, -jnp.inf)
        m = jnp.max(s, axis=-1, keepdims=True)           # f32
        e = jnp.exp(s - m)                                # f32, values in [0, 1]
        denom = jnp.sum(e, axis=-1, keepdims=True)        # f32 (keep f32!)

        # Un-normalized PV matmul, then normalize the (T, hs) result instead of
        # the (T, T) probabilities -> ~4x fewer VPU multiplies per head.
        pv = jnp.dot(e.astype(jnp.bfloat16), v,
                     preferred_element_type=jnp.float32)  # (T, hs) f32
        head_out = pv * pl.reciprocal(denom, approx=True) # (T, hs) f32
        head_outs.append(head_out.astype(jnp.bfloat16))

    # Single full-depth (K = C = 384) output projection for all heads.
    concat = jnp.concatenate(head_outs, axis=-1)          # (T, C) bf16
    y = jnp.dot(concat, wproj_ref[...],
                preferred_element_type=jnp.float32)        # (T, C) f32
    y = y + bproj_ref[...].astype(jnp.float32)
    o_ref[0] = y.astype(o_ref.dtype)


# ---------------------------------------------------------------------------
# One-time weight packing (hoisted out of the per-call wrapper).
# ---------------------------------------------------------------------------
def pack_mha_params(params):
    """Pack per-head weights for the fused kernel. Call ONCE, reuse per step."""
    num_heads, n_embd, head_size = params["wk"].shape
    C = num_heads * head_size
    assert C == n_embd

    # (nh, C, hs) -> (C, nh*hs), preserving torch.cat head order.
    def pack(w):
        return jnp.transpose(w, (1, 0, 2)).reshape(C, C)

    scale = jnp.float32(head_size) ** -0.5
    w_qkv = jnp.concatenate(
        [pack(params["wq"]) * scale,       # fold 1/sqrt(hs) into the Q columns
         pack(params["wk"]),
         pack(params["wv"])],
        axis=1).astype(jnp.bfloat16)                                   # (C, 3C)
    w_proj = params["w_proj"].astype(jnp.bfloat16)                     # (C, C)
    b_proj = params["b_proj"].reshape(1, C).astype(jnp.float32)        # (1, C)
    return {"w_qkv": w_qkv, "w_proj": w_proj, "b_proj": b_proj,
            "num_heads": num_heads, "head_size": head_size}


# ---------------------------------------------------------------------------
# Wrapper
# ---------------------------------------------------------------------------
def multi_head_attention(x, packed):
    """x: (B, T, C) float32. `packed` from pack_mha_params. Returns (B, T, C) f32."""
    B, T, C = x.shape
    num_heads, head_size = packed["num_heads"], packed["head_size"]
    assert num_heads * head_size == C
    assert T <= BLOCK_SIZE

    kernel = functools.partial(_mha_fused_kernel,
                               num_heads=num_heads, head_size=head_size)
    return pl.pallas_call(
        kernel,
        out_shape=jax.ShapeDtypeStruct((B, T, C), jnp.float32),
        grid_spec=pltpu.PrefetchScalarGridSpec(
            num_scalar_prefetch=0,
            grid=(B,),
            in_specs=[
                pl.BlockSpec((1, T, C), lambda b: (b, 0, 0)),
                pl.BlockSpec((C, 3 * C), lambda b: (0, 0)),   # weights stay resident
                pl.BlockSpec((C, C), lambda b: (0, 0)),
                pl.BlockSpec((1, C), lambda b: (0, 0)),
            ],
            out_specs=pl.BlockSpec((1, T, C), lambda b: (b, 0, 0)),
        ),
        compiler_params=pltpu.CompilerParams(
            dimension_semantics=("parallel",)),
    )(x.astype(jnp.bfloat16), packed["w_qkv"], packed["w_proj"], packed["b_proj"])


def init_params(key, num_heads, head_size, n_embd=N_EMBD):
    ks = jax.random.split(key, 5)
    scale = 1.0 / jnp.sqrt(jnp.float32(n_embd))
    # Stored already transposed to (in, out) convention: y = x @ W
    wk = jax.random.uniform(ks[0], (num_heads, n_embd, head_size), jnp.float32,
                            -scale, scale)
    wq = jax.random.uniform(ks[1], (num_heads, n_embd, head_size), jnp.float32,
                            -scale, scale)
    wv = jax.random.uniform(ks[2], (num_heads, n_embd, head_size), jnp.float32,
                            -scale, scale)
    w_proj = jax.random.uniform(ks[3], (n_embd, n_embd), jnp.float32, -scale, scale)
    b_proj = jax.random.uniform(ks[4], (1, n_embd), jnp.float32, -scale, scale)
    return {"wk": wk, "wq": wq, "wv": wv, "w_proj": w_proj, "b_proj": b_proj}


# Pure-JAX f32 reference for a sanity check.
def _reference(x, params):
    wk, wq, wv = params["wk"], params["wq"], params["wv"]
    head_size = wk.shape[2]
    k = jnp.einsum("btc,hcd->bhtd", x, wk)
    q = jnp.einsum("btc,hcd->bhtd", x, wq)
    v = jnp.einsum("btc,hcd->bhtd", x, wv)
    wei = jnp.einsum("bhtd,bhsd->bhts", q, k) * (head_size ** -0.5)
    T = x.shape[1]
    mask = jnp.tril(jnp.ones((T, T), bool))
    wei = jnp.where(mask, wei, -jnp.inf)
    wei = jax.nn.softmax(wei, axis=-1)
    out = jnp.einsum("bhts,bhsd->bhtd", wei, v)
    B = x.shape[0]
    cat = jnp.transpose(out, (0, 2, 1, 3)).reshape(B, T, -1)
    return cat @ params["w_proj"] + params["b_proj"]


if __name__ == "__main__":
    num_heads, head_size = 6, 64          # 6 * 64 = N_EMBD = 384
    B, T = 2, 8                           # small seq (<= BLOCK_SIZE)

    key = jax.random.PRNGKey(0)
    kx, kp = jax.random.split(key)
    x = jax.random.normal(kx, (B, T, N_EMBD), jnp.float32)
    params = init_params(kp, num_heads, head_size)

    packed = pack_mha_params(params)      # one-time packing (not per forward)
    out = multi_head_attention(x, packed)
    out = jax.block_until_ready(out)

    ref = _reference(x, params)
    assert out.shape == (B, T, N_EMBD), out.shape
    # Kernel runs matmuls in bf16 -> compare against the f32 reference loosely.
    max_err = float(jnp.max(jnp.abs(out - ref)))
    assert max_err < 5e-2, f"mismatch vs reference: max_err={max_err}"

    print("KERNEL_OK")
</pallas_src>

<mosaic_0001>
module attributes {stable_mosaic.version = 11 : i64} {
  func.func @_mha_fused_kernel(%arg0: i32, %arg1: memref<1x8x384xbf16, #tpu.memory_space<vmem>>, %arg2: memref<384x1152xbf16, #tpu.memory_space<vmem>>, %arg3: memref<384x384xbf16, #tpu.memory_space<vmem>>, %arg4: memref<1x384xf32, #tpu.memory_space<vmem>>, %arg5: memref<1x8x384xf32, #tpu.memory_space<vmem>>) attributes {dimension_semantics = [#tpu.dimension_semantics<parallel>], iteration_bounds = array<i64: 2>, scalar_prefetch = 0 : i64, scratch_operands = 0 : i64, tpu.core_type = #tpu.core_type<tc>, window_params = [{transform_indices = @transform_0, window_bounds = array<i64: 1, 8, 384>}, {pipeline_mode = #tpu.pipeline_mode<synchronous>, transform_indices = @transform_1, window_bounds = array<i64: 384, 1152>}, {pipeline_mode = #tpu.pipeline_mode<synchronous>, transform_indices = @transform_2, window_bounds = array<i64: 384, 384>}, {pipeline_mode = #tpu.pipeline_mode<synchronous>, transform_indices = @transform_3, window_bounds = array<i64: 1, 384>}, {transform_indices = @transform_4, window_bounds = array<i64: 1, 8, 384>}]} {
    %c0 = arith.constant 0 : index
    %c0_0 = arith.constant 0 : index
    %c0_1 = arith.constant 0 : index
    %0 = vector.load %arg1[%c0, %c0_0, %c0_1] : memref<1x8x384xbf16, #tpu.memory_space<vmem>>, vector<1x8x384xbf16>
    %1 = vector.shape_cast %0 : vector<1x8x384xbf16> to vector<8x384xbf16>
    %c0_2 = arith.constant 0 : index
    %c0_3 = arith.constant 0 : index
    %2 = vector.load %arg2[%c0_2, %c0_3] : memref<384x1152xbf16, #tpu.memory_space<vmem>>, vector<384x1152xbf16>
    %cst = arith.constant dense<0.000000e+00> : vector<8x1152xf32>
    %3 = tpu.matmul %1, %2, %cst {dimension_numbers = #tpu.dot_dimension_numbers<[1], [0], [0], [1], [0, 0, 1, 1], [], []>} : vector<8x384xbf16>, vector<384x1152xbf16>, vector<8x1152xf32> -> vector<8x1152xf32>
    %4 = arith.truncf %3 : vector<8x1152xf32> to vector<8x1152xbf16>
    %5 = tpu.iota {dimensions = array<i32: 0>} : vector<8x8xi32>
    %6 = tpu.iota {dimensions = array<i32: 1>} : vector<8x8xi32>
    %7 = arith.cmpi sle, %6, %5 : vector<8x8xi32>
    %8 = vector.extract_strided_slice %4 {offsets = [0, 0], sizes = [8, 64], strides = [1, 1]} : vector<8x1152xbf16> to vector<8x64xbf16>
    %9 = vector.extract_strided_slice %4 {offsets = [0, 384], sizes = [8, 64], strides = [1, 1]} : vector<8x1152xbf16> to vector<8x64xbf16>
    %10 = vector.extract_strided_slice %4 {offsets = [0, 768], sizes = [8, 64], strides = [1, 1]} : vector<8x1152xbf16> to vector<8x64xbf16>
    %cst_4 = arith.constant dense<0.000000e+00> : vector<8x8xf32>
    %11 = tpu.matmul %8, %9, %cst_4 {dimension_numbers = #tpu.dot_dimension_numbers<[1], [1], [0], [0], [0, 0, 1, 0], [], []>} : vector<8x64xbf16>, vector<8x64xbf16>, vector<8x8xf32> -> vector<8x8xf32>
    %cst_5 = arith.constant 0xFF800000 : f32
    %12 = vector.broadcast %cst_5 : f32 to vector<8x8xf32>
    %13 = arith.select %7, %11, %12 : vector<8x8xi1>, vector<8x8xf32>
    %cst_6 = arith.constant dense<0xFF800000> : vector<8xf32>
    %14 = vector.multi_reduction <maximumf>, %13, %cst_6 [1] : vector<8x8xf32> to vector<8xf32>
    %15 = vector.shape_cast %14 : vector<8xf32> to vector<8x1xf32>
    %16 = vector.broadcast %15 : vector<8x1xf32> to vector<8x8xf32>
    %17 = arith.subf %13, %16 : vector<8x8xf32>
    %18 = math.exp %17 : vector<8x8xf32>
    %cst_7 = arith.constant dense<0.000000e+00> : vector<8xf32>
    %19 = vector.multi_reduction <add>, %18, %cst_7 [1] : vector<8x8xf32> to vector<8xf32>
    %20 = vector.shape_cast %19 : vector<8xf32> to vector<8x1xf32>
    %21 = arith.truncf %18 : vector<8x8xf32> to vector<8x8xbf16>
    %cst_8 = arith.constant dense<0.000000e+00> : vector<8x64xf32>
    %22 = tpu.matmul %21, %10, %cst_8 {dimension_numbers = #tpu.dot_dimension_numbers<[1], [0], [0], [1], [0, 0, 1, 1], [], []>} : vector<8x8xbf16>, vector<8x64xbf16>, vector<8x64xf32> -> vector<8x64xf32>
    %23 = tpu.reciprocal %20 {approx = true} : vector<8x1xf32> -> vector<8x1xf32>
    %24 = vector.broadcast %23 : vector<8x1xf32> to vector<8x64xf32>
    %25 = arith.mulf %22, %24 : vector<8x64xf32>
    %26 = arith.truncf %25 : vector<8x64xf32> to vector<8x64xbf16>
    %27 = vector.extract_strided_slice %4 {offsets = [0, 64], sizes = [8, 64], strides = [1, 1]} : vector<8x1152xbf16> to vector<8x64xbf16>
    %28 = vector.extract_strided_slice %4 {offsets = [0, 448], sizes = [8, 64], strides = [1, 1]} : vector<8x1152xbf16> to vector<8x64xbf16>
    %29 = vector.extract_strided_slice %4 {offsets = [0, 832], sizes = [8, 64], strides = [1, 1]} : vector<8x1152xbf16> to vector<8x64xbf16>
    %cst_9 = arith.constant dense<0.000000e+00> : vector<8x8xf32>
    %30 = tpu.matmul %27, %28, %cst_9 {dimension_numbers = #tpu.dot_dimension_numbers<[1], [1], [0], [0], [0, 0, 1, 0], [], []>} : vector<8x64xbf16>, vector<8x64xbf16>, vector<8x8xf32> -> vector<8x8xf32>
    %cst_10 = arith.constant 0xFF800000 : f32
    %31 = vector.broadcast %cst_10 : f32 to vector<8x8xf32>
    %32 = arith.select %7, %30, %31 : vector<8x8xi1>, vector<8x8xf32>
    %cst_11 = arith.constant dense<0xFF800000> : vector<8xf32>
    %33 = vector.multi_reduction <maximumf>, %32, %cst_11 [1] : vector<8x8xf32> to vector<8xf32>
    %34 = vector.shape_cast %33 : vector<8xf32> to vector<8x1xf32>
    %35 = vector.broadcast %34 : vector<8x1xf32> to vector<8x8xf32>
    %36 = arith.subf %32, %35 : vector<8x8xf32>
    %37 = math.exp %36 : vector<8x8xf32>
    %cst_12 = arith.constant dense<0.000000e+00> : vector<8xf32>
    %38 = vector.multi_reduction <add>, %37, %cst_12 [1] : vector<8x8xf32> to vector<8xf32>
    %39 = vector.shape_cast %38 : vector<8xf32> to vector<8x1xf32>
    %40 = arith.truncf %37 : vector<8x8xf32> to vector<8x8xbf16>
    %cst_13 = arith.constant dense<0.000000e+00> : vector<8x64xf32>
    %41 = tpu.matmul %40, %29, %cst_13 {dimension_numbers = #tpu.dot_dimension_numbers<[1], [0], [0], [1], [0, 0, 1, 1], [], []>} : vector<8x8xbf16>, vector<8x64xbf16>, vector<8x64xf32> -> vector<8x64xf32>
    %42 = tpu.reciprocal %39 {approx = true} : vector<8x1xf32> -> vector<8x1xf32>
    %43 = vector.broadcast %42 : vector<8x1xf32> to vector<8x64xf32>
    %44 = arith.mulf %41, %43 : vector<8x64xf32>
    %45 = arith.truncf %44 : vector<8x64xf32> to vector<8x64xbf16>
    %46 = vector.extract_strided_slice %4 {offsets = [0, 128], sizes = [8, 64], strides = [1, 1]} : vector<8x1152xbf16> to vector<8x64xbf16>
    %47 = vector.extract_strided_slice %4 {offsets = [0, 512], sizes = [8, 64], strides = [1, 1]} : vector<8x1152xbf16> to vector<8x64xbf16>
    %48 = vector.extract_strided_slice %4 {offsets = [0, 896], sizes = [8, 64], strides = [1, 1]} : vector<8x1152xbf16> to vector<8x64xbf16>
    %cst_14 = arith.constant dense<0.000000e+00> : vector<8x8xf32>
    %49 = tpu.matmul %46, %47, %cst_14 {dimension_numbers = #tpu.dot_dimension_numbers<[1], [1], [0], [0], [0, 0, 1, 0], [], []>} : vector<8x64xbf16>, vector<8x64xbf16>, vector<8x8xf32> -> vector<8x8xf32>
    %cst_15 = arith.constant 0xFF800000 : f32
    %50 = vector.broadcast %cst_15 : f32 to vector<8x8xf32>
    %51 = arith.select %7, %49, %50 : vector<8x8xi1>, vector<8x8xf32>
    %cst_16 = arith.constant dense<0xFF800000> : vector<8xf32>
    %52 = vector.multi_reduction <maximumf>, %51, %cst_16 [1] : vector<8x8xf32> to vector<8xf32>
    %53 = vector.shape_cast %52 : vector<8xf32> to vector<8x1xf32>
    %54 = vector.broadcast %53 : vector<8x1xf32> to vector<8x8xf32>
    %55 = arith.subf %51, %54 : vector<8x8xf32>
    %56 = math.exp %55 : vector<8x8xf32>
    %cst_17 = arith.constant dense<0.000000e+00> : vector<8xf32>
    %57 = vector.multi_reduction <add>, %56, %cst_17 [1] : vector<8x8xf32> to vector<8xf32>
    %58 = vector.shape_cast %57 : vector<8xf32> to vector<8x1xf32>
    %59 = arith.truncf %56 : vector<8x8xf32> to vector<8x8xbf16>
    %cst_18 = arith.constant dense<0.000000e+00> : vector<8x64xf32>
    %60 = tpu.matmul %59, %48, %cst_18 {dimension_numbers = #tpu.dot_dimension_numbers<[1], [0], [0], [1], [0, 0, 1, 1], [], []>} : vector<8x8xbf16>, vector<8x64xbf16>, vector<8x64xf32> -> vector<8x64xf32>
    %61 = tpu.reciprocal %58 {approx = true} : vector<8x1xf32> -> vector<8x1xf32>
    %62 = vector.broadcast %61 : vector<8x1xf32> to vector<8x64xf32>
    %63 = arith.mulf %60, %62 : vector<8x64xf32>
    %64 = arith.truncf %63 : vector<8x64xf32> to vector<8x64xbf16>
    %65 = vector.extract_strided_slice %4 {offsets = [0, 192], sizes = [8, 64], strides = [1, 1]} : vector<8x1152xbf16> to vector<8x64xbf16>
    %66 = vector.extract_strided_slice %4 {offsets = [0, 576], sizes = [8, 64], strides = [1, 1]} : vector<8x1152xbf16> to vector<8x64xbf16>
    %67 = vector.extract_strided_slice %4 {offsets = [0, 960], sizes = [8, 64], strides = [1, 1]} : vector<8x1152xbf16> to vector<8x64xbf16>
    %cst_19 = arith.constant dense<0.000000e+00> : vector<8x8xf32>
    %68 = tpu.matmul %65, %66, %cst_19 {dimension_numbers = #tpu.dot_dimension_numbers<[1], [1], [0], [0], [0, 0, 1, 0], [], []>} : vector<8x64xbf16>, vector<8x64xbf16>, vector<8x8xf32> -> vector<8x8xf32>
    %cst_20 = arith.constant 0xFF800000 : f32
    %69 = vector.broadcast %cst_20 : f32 to vector<8x8xf32>
    %70 = arith.select %7, %68, %69 : vector<8x8xi1>, vector<8x8xf32>
    %cst_21 = arith.constant dense<0xFF800000> : vector<8xf32>
    %71 = vector.multi_reduction <maximumf>, %70, %cst_21 [1] : vector<8x8xf32> to vector<8xf32>
    %72 = vector.shape_cast %71 : vector<8xf32> to vector<8x1xf32>
    %73 = vector.broadcast %72 : vector<8x1xf32> to vector<8x8xf32>
    %74 = arith.subf %70, %73 : vector<8x8xf32>
    %75 = math.exp %74 : vector<8x8xf32>
    %cst_22 = arith.constant dense<0.000000e+00> : vector<8xf32>
    %76 = vector.multi_reduction <add>, %75, %cst_22 [1] : vector<8x8xf32> to vector<8xf32>
    %77 = vector.shape_cast %76 : vector<8xf32> to vector<8x1xf32>
    %78 = arith.truncf %75 : vector<8x8xf32> to vector<8x8xbf16>
    %cst_23 = arith.constant dense<0.000000e+00> : vector<8x64xf32>
    %79 = tpu.matmul %78, %67, %cst_23 {dimension_numbers = #tpu.dot_dimension_numbers<[1], [0], [0], [1], [0, 0, 1, 1], [], []>} : vector<8x8xbf16>, vector<8x64xbf16>, vector<8x64xf32> -> vector<8x64xf32>
    %80 = tpu.reciprocal %77 {approx = true} : vector<8x1xf32> -> vector<8x1xf32>
    %81 = vector.broadcast %80 : vector<8x1xf32> to vector<8x64xf32>
    %82 = arith.mulf %79, %81 : vector<8x64xf32>
    %83 = arith.truncf %82 : vector<8x64xf32> to vector<8x64xbf16>
    %84 = vector.extract_strided_slice %4 {offsets = [0, 256], sizes = [8, 64], strides = [1, 1]} : vector<8x1152xbf16> to vector<8x64xbf16>
    %85 = vector.extract_strided_slice %4 {offsets = [0, 640], sizes = [8, 64], strides = [1, 1]} : vector<8x1152xbf16> to vector<8x64xbf16>
    %86 = vector.extract_strided_slice %4 {offsets = [0, 1024], sizes = [8, 64], strides = [1, 1]} : vector<8x1152xbf16> to vector<8x64xbf16>
    %cst_24 = arith.constant dense<0.000000e+00> : vector<8x8xf32>
    %87 = tpu.matmul %84, %85, %cst_24 {dimension_numbers = #tpu.dot_dimension_numbers<[1], [1], [0], [0], [0, 0, 1, 0], [], []>} : vector<8x64xbf16>, vector<8x64xbf16>, vector<8x8xf32> -> vector<8x8xf32>
    %cst_25 = arith.constant 0xFF800000 : f32
    %88 = vector.broadcast %cst_25 : f32 to vector<8x8xf32>
    %89 = arith.select %7, %87, %88 : vector<8x8xi1>, vector<8x8xf32>
    %cst_26 = arith.constant dense<0xFF800000> : vector<8xf32>
    %90 = vector.multi_reduction <maximumf>, %89, %cst_26 [1] : vector<8x8xf32> to vector<8xf32>
    %91 = vector.shape_cast %90 : vector<8xf32> to vector<8x1xf32>
    %92 = vector.broadcast %91 : vector<8x1xf32> to vector<8x8xf32>
    %93 = arith.subf %89, %92 : vector<8x8xf32>
    %94 = math.exp %93 : vector<8x8xf32>
    %cst_27 = arith.constant dense<0.000000e+00> : vector<8xf32>
    %95 = vector.multi_reduction <add>, %94, %cst_27 [1] : vector<8x8xf32> to vector<8xf32>
    %96 = vector.shape_cast %95 : vector<8xf32> to vector<8x1xf32>
    %97 = arith.truncf %94 : vector<8x8xf32> to vector<8x8xbf16>
    %cst_28 = arith.constant dense<0.000000e+00> : vector<8x64xf32>
    %98 = tpu.matmul %97, %86, %cst_28 {dimension_numbers = #tpu.dot_dimension_numbers<[1], [0], [0], [1], [0, 0, 1, 1], [], []>} : vector<8x8xbf16>, vector<8x64xbf16>, vector<8x64xf32> -> vector<8x64xf32>
    %99 = tpu.reciprocal %96 {approx = true} : vector<8x1xf32> -> vector<8x1xf32>
    %100 = vector.broadcast %99 : vector<8x1xf32> to vector<8x64xf32>
    %101 = arith.mulf %98, %100 : vector<8x64xf32>
    %102 = arith.truncf %101 : vector<8x64xf32> to vector<8x64xbf16>
    %103 = vector.extract_strided_slice %4 {offsets = [0, 320], sizes = [8, 64], strides = [1, 1]} : vector<8x1152xbf16> to vector<8x64xbf16>
    %104 = vector.extract_strided_slice %4 {offsets = [0, 704], sizes = [8, 64], strides = [1, 1]} : vector<8x1152xbf16> to vector<8x64xbf16>
    %105 = vector.extract_strided_slice %4 {offsets = [0, 1088], sizes = [8, 64], strides = [1, 1]} : vector<8x1152xbf16> to vector<8x64xbf16>
    %cst_29 = arith.constant dense<0.000000e+00> : vector<8x8xf32>
    %106 = tpu.matmul %103, %104, %cst_29 {dimension_numbers = #tpu.dot_dimension_numbers<[1], [1], [0], [0], [0, 0, 1, 0], [], []>} : vector<8x64xbf16>, vector<8x64xbf16>, vector<8x8xf32> -> vector<8x8xf32>
    %cst_30 = arith.constant 0xFF800000 : f32
    %107 = vector.broadcast %cst_30 : f32 to vector<8x8xf32>
    %108 = arith.select %7, %106, %107 : vector<8x8xi1>, vector<8x8xf32>
    %cst_31 = arith.constant dense<0xFF800000> : vector<8xf32>
    %109 = vector.multi_reduction <maximumf>, %108, %cst_31 [1] : vector<8x8xf32> to vector<8xf32>
    %110 = vector.shape_cast %109 : vector<8xf32> to vector<8x1xf32>
    %111 = vector.broadcast %110 : vector<8x1xf32> to vector<8x8xf32>
    %112 = arith.subf %108, %111 : vector<8x8xf32>
    %113 = math.exp %112 : vector<8x8xf32>
    %cst_32 = arith.constant dense<0.000000e+00> : vector<8xf32>
    %114 = vector.multi_reduction <add>, %113, %cst_32 [1] : vector<8x8xf32> to vector<8xf32>
    %115 = vector.shape_cast %114 : vector<8xf32> to vector<8x1xf32>
    %116 = arith.truncf %113 : vector<8x8xf32> to vector<8x8xbf16>
    %cst_33 = arith.constant dense<0.000000e+00> : vector<8x64xf32>
    %117 = tpu.matmul %116, %105, %cst_33 {dimension_numbers = #tpu.dot_dimension_numbers<[1], [0], [0], [1], [0, 0, 1, 1], [], []>} : vector<8x8xbf16>, vector<8x64xbf16>, vector<8x64xf32> -> vector<8x64xf32>
    %118 = tpu.reciprocal %115 {approx = true} : vector<8x1xf32> -> vector<8x1xf32>
    %119 = vector.broadcast %118 : vector<8x1xf32> to vector<8x64xf32>
    %120 = arith.mulf %117, %119 : vector<8x64xf32>
    %121 = arith.truncf %120 : vector<8x64xf32> to vector<8x64xbf16>
    %122 = tpu.concatenate %26, %45, %64, %83, %102, %121 in 1 : vector<8x64xbf16>, vector<8x64xbf16>, vector<8x64xbf16>, vector<8x64xbf16>, vector<8x64xbf16>, vector<8x64xbf16> -> vector<8x384xbf16>
    %c0_34 = arith.constant 0 : index
    %c0_35 = arith.constant 0 : index
    %123 = vector.load %arg3[%c0_34, %c0_35] : memref<384x384xbf16, #tpu.memory_space<vmem>>, vector<384x384xbf16>
    %cst_36 = arith.constant dense<0.000000e+00> : vector<8x384xf32>
    %124 = tpu.matmul %122, %123, %cst_36 {dimension_numbers = #tpu.dot_dimension_numbers<[1], [0], [0], [1], [0, 0, 1, 1], [], []>} : vector<8x384xbf16>, vector<384x384xbf16>, vector<8x384xf32> -> vector<8x384xf32>
    %c0_37 = arith.constant 0 : index
    %c0_38 = arith.constant 0 : index
    %125 = vector.load %arg4[%c0_37, %c0_38] : memref<1x384xf32, #tpu.memory_space<vmem>>, vector<1x384xf32>
    %126 = vector.broadcast %125 : vector<1x384xf32> to vector<8x384xf32>
    %127 = arith.addf %124, %126 : vector<8x384xf32>
    %c0_39 = arith.constant 0 : index
    %c0_40 = arith.constant 0 : index
    %c0_41 = arith.constant 0 : index
    %128 = vector.load %arg5[%c0_39, %c0_40, %c0_41] : memref<1x8x384xf32, #tpu.memory_space<vmem>>, vector<1x8x384xf32>
    %129 = vector.shape_cast %128 : vector<1x8x384xf32> to vector<8x384xf32>
    %130 = vector.shape_cast %127 : vector<8x384xf32> to vector<1x8x384xf32>
    tpu.vector_store %arg5[%c0_39, %c0_40, %c0_41], %130 {strides = array<i32>} : memref<1x8x384xf32, #tpu.memory_space<vmem>>, vector<1x8x384xf32>,
    return
  }
  func.func @transform_0(%arg0: i32) -> (i32, i32, i32) {
    %c0_i32 = arith.constant 0 : i32
    %c0_i32_0 = arith.constant 0 : i32
    %c0_i32_1 = arith.constant 0 : i32
    return %arg0, %c0_i32, %c0_i32_0 : i32, i32, i32
  }
  func.func @transform_1(%arg0: i32) -> (i32, i32) {
    %c0_i32 = arith.constant 0 : i32
    %c0_i32_0 = arith.constant 0 : i32
    %c0_i32_1 = arith.constant 0 : i32
    return %c0_i32, %c0_i32_0 : i32, i32
  }
  func.func @transform_2(%arg0: i32) -> (i32, i32) {
    %c0_i32 = arith.constant 0 : i32
    %c0_i32_0 = arith.constant 0 : i32
    %c0_i32_1 = arith.constant 0 : i32
    return %c0_i32, %c0_i32_0 : i32, i32
  }
  func.func @transform_3(%arg0: i32) -> (i32, i32) {
    %c0_i32 = arith.constant 0 : i32
    %c0_i32_0 = arith.constant 0 : i32
    %c0_i32_1 = arith.constant 0 : i32
    return %c0_i32, %c0_i32_0 : i32, i32
  }
  func.func @transform_4(%arg0: i32) -> (i32, i32, i32) {
    %c0_i32 = arith.constant 0 : i32
    %c0_i32_0 = arith.constant 0 : i32
    %c0_i32_1 = arith.constant 0 : i32
    return %arg0, %c0_i32, %c0_i32_0 : i32, i32, i32
  }
}

</mosaic_0001>

<llo_original>
// kernel: tpu_custom_call.1
$region0: #{tpu_custom_call.1}
  #allocation0 [shape = 'u32[]', space=smem, size = 0x4, offset = 0x4, fixed_abs, tag = 'smem constant byte address 0x4 - core index']
  #allocation1 [shape = 'u32[144,128]{1,0:T(1,128)}', space=vmem, size = 0x12000, scoped, tag = 'internal scratch']
  %s0 = inlined_call_operand.hbm [shape: bf16[2,8,384], index: 0, kind: input, shape index: {}]
  %s1 = inlined_call_operand.hbm [shape: bf16[384,1152], index: 1, kind: input, shape index: {}]
  %s2 = inlined_call_operand.hbm [shape: bf16[384,384], index: 2, kind: input, shape index: {}]
  %s3 = inlined_call_operand.vmem [shape: f32[1,384], index: 3, kind: input, shape index: {}]
  %s4 = inlined_call_operand.hbm [shape: f32[2,8,384], index: 4, kind: output, shape index: {}]
  %s5 = sld [smem:[#allocation0]]
  $region61: #{tpu_custom_call.1} parent=0
    _
  %s7 = ssub.s32 1, %s5
  %s8 = scalar_select 0, %s7, %s5
  $region1: #{tpu_custom_call.1} parent=0
    #allocation2 [shape = 'u8[12288]{0}', space=vmem, size = 0x3000, scoped, tag = 'input window, operand 0']
    #allocation3 [shape = 's32[2]{0}', space=sflag, size = 0x8, scoped, tag = 'scoped memory for tpu_custom_call.1']
    #allocation4 [shape = 's32[2]{0}', space=sflag, size = 0x8, scoped, tag = 'scoped memory for tpu_custom_call.1']
    #allocation5 [shape = 'u8[884736]{0}', space=vmem, size = 0xd8000, scoped, tag = 'input window, operand 1, single buffered']
    #allocation6 [shape = 's32[1]{0}', space=sflag, size = 0x4, scoped, tag = 'scoped memory for tpu_custom_call.1']
    #allocation7 [shape = 'u8[294912]{0}', space=vmem, size = 0x48000, scoped, tag = 'input window, operand 2, single buffered']
    #allocation8 [shape = 'u8[24576]{0}', space=vmem, size = 0x6000, scoped, tag = 'output window, operand 0']
    %9 = vsyncpa [#allocation3], 0
    %s10 = scalar_lea.sflag [#allocation3], 1
    %11 = vsyncpa %s10, 0
    %12 = vsyncpa [#allocation6], 0
    %13 = vsyncpa [#allocation4], 0
    %s14 = scalar_lea.sflag [#allocation4], 1
    %15 = vsyncpa %s14, 0
    loop: start=0, step=1, limit=4
    $region2: #{tpu_custom_call.1} parent=1 // loop_pre_header
      _
    $region3: #{tpu_custom_call.1} parent=1 // loop_header
      %s17 = sphi 0, %s21
      %p18 = scmp.ge.s32.totalorder %s17, 4
      %s27 = sphi 0, %s29
      %s30 = sphi 0, %s27
      %s31 = sphi 0, %s30
      %s47 = sphi 0, %s31
      %s51 = sphi 0, %s51
      %s53 = sphi 0, %s51
      %s54 = sphi 0, %s53
      %s68 = sphi 0, %s54
      %s72 = sphi 0, %s72
      %s74 = sphi 0, %s72
      %s75 = sphi 0, %s74
      %s89 = sphi 0, %s75
      %s93 = sphi 0, %s93
      %s95 = sphi 0, %s93
      %s96 = sphi 0, %s95
      %s110 = sphi 0, %s96
      %s116 = sphi 0, %s118
      %s119 = sphi 0, %s116
      %s120 = sphi 0, %s119
      %s136 = sphi 0, %s120
    $region4: #{tpu_custom_call.1} parent=1 // loop_header_branch
      %20 = sbr.rel (%p18) target = $region8
    $region5: #{tpu_custom_call.1} parent=1 // loop_body
      %s22 = ssub.s32 %s17, 1
      %s23 = ssub.s32 %s17, 2
      %s24 = sadd.s32 %s17, 1
      %s25 = ssub.s32 %s17, %s24
      %p26 = scmp.eq.s32.totalorder %s25, 0
      %s28 = sadd.s32 %s27, 1
      %s29 = scalar_select %p26, %s27, %s28
      %p32 = pneg %p26
      %p33 = scmp.eq.s32.totalorder %s17, 1
      %p34 = por %p32, %p33
      %p35 = scmp.ne.s32.totalorder %s27, %s30
      %p36 = scmp.eq.s32.totalorder %s17, 0
      %p37 = por %p35, %p36
      %p38 = scmp.ne.s32.totalorder %s27, %s30
      %p39 = scmp.eq.s32.totalorder %s22, 1
      %p40 = por %p38, %p39
      %p41 = scmp.ne.s32.totalorder %s30, %s31
      %p42 = scmp.eq.s32.totalorder %s22, 0
      %p43 = por %p41, %p42
      %p44 = scmp.ne.s32.totalorder %s30, %s31
      %p45 = scmp.eq.s32.totalorder %s23, 1
      %p46 = por %p44, %p45
      %p48 = scmp.ne.s32.totalorder %s31, %s47
      %p49 = scmp.eq.s32.totalorder %s23, 0
      %p50 = por %p48, %p49
      %s52 = sadd.s32 %s51, 1
      %p55 = scmp.eq.s32.totalorder %s17, 1
      %p56 = scmp.ne.s32.totalorder %s51, %s53
      %p57 = scmp.eq.s32.totalorder %s17, 0
      %p58 = por %p56, %p57
      %p59 = scmp.ne.s32.totalorder %s51, %s53
      %p60 = scmp.eq.s32.totalorder %s22, 1
      %p61 = por %p59, %p60
      %p62 = scmp.ne.s32.totalorder %s53, %s54
      %p63 = scmp.eq.s32.totalorder %s22, 0
      %p64 = por %p62, %p63
      %p65 = scmp.ne.s32.totalorder %s53, %s54
      %p66 = scmp.eq.s32.totalorder %s23, 1
      %p67 = por %p65, %p66
      %p69 = scmp.ne.s32.totalorder %s54, %s68
      %p70 = scmp.eq.s32.totalorder %s23, 0
      %p71 = por %p69, %p70
      %s73 = sadd.s32 %s72, 1
      %p76 = scmp.eq.s32.totalorder %s17, 1
      %p77 = scmp.ne.s32.totalorder %s72, %s74
      %p78 = scmp.eq.s32.totalorder %s17, 0
      %p79 = por %p77, %p78
      %p80 = scmp.ne.s32.totalorder %s72, %s74
      %p81 = scmp.eq.s32.totalorder %s22, 1
      %p82 = por %p80, %p81
      %p83 = scmp.ne.s32.totalorder %s74, %s75
      %p84 = scmp.eq.s32.totalorder %s22, 0
      %p85 = por %p83, %p84
      %p86 = scmp.ne.s32.totalorder %s74, %s75
      %p87 = scmp.eq.s32.totalorder %s23, 1
      %p88 = por %p86, %p87
      %p90 = scmp.ne.s32.totalorder %s75, %s89
      %p91 = scmp.eq.s32.totalorder %s23, 0
      %p92 = por %p90, %p91
      %s94 = sadd.s32 %s93, 1
      %p97 = scmp.eq.s32.totalorder %s17, 1
      %p98 = scmp.ne.s32.totalorder %s93, %s95
      %p99 = scmp.eq.s32.totalorder %s17, 0
      %p100 = por %p98, %p99
      %p101 = scmp.ne.s32.totalorder %s93, %s95
      %p102 = scmp.eq.s32.totalorder %s22, 1
      %p103 = por %p101, %p102
      %p104 = scmp.ne.s32.totalorder %s95, %s96
      %p105 = scmp.eq.s32.totalorder %s22, 0
      %p106 = por %p104, %p105
      %p107 = scmp.ne.s32.totalorder %s95, %s96
      %p108 = scmp.eq.s32.totalorder %s23, 1
      %p109 = por %p107, %p108
      %p111 = scmp.ne.s32.totalorder %s96, %s110
      %p112 = scmp.eq.s32.totalorder %s23, 0
      %p113 = por %p111, %p112
      %s114 = ssub.s32 %s17, %s24
      %p115 = scmp.eq.s32.totalorder %s114, 0
      %s117 = sadd.s32 %s116, 1
      %s118 = scalar_select %p115, %s116, %s117
      %p121 = pneg %p115
      %p122 = scmp.eq.s32.totalorder %s17, 1
      %p123 = por %p121, %p122
      %p124 = scmp.ne.s32.totalorder %s116, %s119
      %p125 = scmp.eq.s32.totalorder %s17, 0
      %p126 = por %p124, %p125
      %p127 = scmp.ne.s32.totalorder %s116, %s119
      %p128 = scmp.eq.s32.totalorder %s22, 1
      %p129 = por %p127, %p128
      %p130 = scmp.ne.s32.totalorder %s119, %s120
      %p131 = scmp.eq.s32.totalorder %s22, 0
      %p132 = por %p130, %p131
      %p133 = scmp.ne.s32.totalorder %s119, %s120
      %p134 = scmp.eq.s32.totalorder %s23, 1
      %p135 = por %p133, %p134
      %p137 = scmp.ne.s32.totalorder %s120, %s136
      %p138 = scmp.eq.s32.totalorder %s23, 0
      %p139 = por %p137, %p138
      %p140 = scmp.le.s32.totalorder 1, %s17
      %p141 = scmp.lt.s32.totalorder %s17, 3
      %p142 = pnand %p140, %p141
      %p143 = pneg %p142
      // Predicated region
      $region9: #{tpu_custom_call.1} parent=5 // pred_check
        _
      $region10: #{tpu_custom_call.1} parent=5 // pred_check_branch
        %145 = sbr.rel (%p142) target = $region12
      $region11: #{tpu_custom_call.1} parent=5 // pred_region
        %s146 = ssub.s32 %s17, 1
        // Predicated region
        $region13: #{tpu_custom_call.1} parent=11 // pred_check
          %p147 = pneg %p64
        $region14: #{tpu_custom_call.1} parent=11 // pred_check_branch
          %149 = sbr.rel (%p147) target = $region16
        $region15: #{tpu_custom_call.1} parent=11 // pred_region
          %s151 = ssub.s32 27648, 27648
          %152 = vsyncadd [#allocation6], %s151
          %s153 = sshll.u32 [#allocation5], 4
          %s154 = int_to_ptr.vmem [resolvable:$true] %s153
          %159 = dma.hbm_to_vmem [thread:$0]  %s1, 27648, %s154, [#allocation6], 576, 576, 36
        $region16: #{tpu_custom_call.1} parent=11 // pred_fallthru
          _
        // Predicated region
        $region17: #{tpu_custom_call.1} parent=11 // pred_check
          %p160 = pneg %p85
        $region18: #{tpu_custom_call.1} parent=11 // pred_check_branch
          %162 = sbr.rel (%p160) target = $region20
        $region19: #{tpu_custom_call.1} parent=11 // pred_region
          %s164 = ssub.s32 9216, 9216
          %165 = vsyncadd [#allocation6], %s164
          %s166 = sshll.u32 [#allocation7], 4
          %s167 = int_to_ptr.vmem [resolvable:$true] %s166
          %172 = dma.hbm_to_vmem [thread:$0]  %s2, 9216, %s167, [#allocation6], 192, 192, 12
        $region20: #{tpu_custom_call.1} parent=11 // pred_fallthru
          _
        // Predicated region
        $region21: #{tpu_custom_call.1} parent=11 // pred_check
          %p173 = pneg %p106
        $region22: #{tpu_custom_call.1} parent=11 // pred_check_branch
          %175 = sbr.rel (%p173) target = $region24
        $region23: #{tpu_custom_call.1} parent=11 // pred_region
          _
        $region24: #{tpu_custom_call.1} parent=11 // pred_fallthru
          _
      $region12: #{tpu_custom_call.1} parent=5 // pred_fallthru
        _
      %p176 = scmp.lt.s32.totalorder %s17, 2
      // Predicated region
      $region25: #{tpu_custom_call.1} parent=5 // pred_check
        %p177 = pneg %p176
      $region26: #{tpu_custom_call.1} parent=5 // pred_check_branch
        %179 = sbr.rel (%p177) target = $region28
      $region27: #{tpu_custom_call.1} parent=5 // pred_region
        // Predicated region
        $region29: #{tpu_custom_call.1} parent=27 // pred_check
          %p180 = pneg %p37
        $region30: #{tpu_custom_call.1} parent=27 // pred_check_branch
          %182 = sbr.rel (%p180) target = $region32
        $region31: #{tpu_custom_call.1} parent=27 // pred_region
          %s183 = sand.u32 %s27, 1
          %s184 = scalar_lea.sflag [#allocation3], %s183
          %s185 = sand.u32 %s27, 1
          %s186 = smul.addr %s185, 12
          %s187 = scalar_lea.vmem [#allocation2], %s186
          %s189 = ssub.s32 192, 192
          %190 = vsyncadd %s184, %s189
          %s191 = smul.addr %s17, 3
          %s192 = smul.addr %s191, 64
          %s193 = scalar_lea.hbm %s0, %s192
          %s195 = sshll.u32 %s187, 4
          %s196 = int_to_ptr.vmem [resolvable:$true] %s195
          %198 = dma.hbm_to_vmem [thread:$0]  %s193, 192, %s196, %s184
        $region32: #{tpu_custom_call.1} parent=27 // pred_fallthru
          _
      $region28: #{tpu_custom_call.1} parent=5 // pred_fallthru
        _
      %p199 = scmp.le.s32.totalorder 1, %s17
      %p200 = scmp.lt.s32.totalorder %s17, 3
      %p201 = pnand %p199, %p200
      %p202 = pneg %p201
      // Predicated region
      $region33: #{tpu_custom_call.1} parent=5 // pred_check
        _
      $region34: #{tpu_custom_call.1} parent=5 // pred_check_branch
        %204 = sbr.rel (%p201) target = $region36
      $region35: #{tpu_custom_call.1} parent=5 // pred_region
        %s205 = ssub.s32 %s17, 1
        %s206 = sand.u32 %s30, 1
        %s207 = scalar_lea.sflag [#allocation3], %s206
        %s208 = sand.u32 %s30, 1
        %s209 = smul.addr %s208, 12
        %s210 = scalar_lea.vmem [#allocation2], %s209
        // Predicated region
        $region37: #{tpu_custom_call.1} parent=35 // pred_check
          %p211 = pneg %p43
        $region38: #{tpu_custom_call.1} parent=35 // pred_check_branch
          %213 = sbr.rel (%p211) target = $region40
        $region39: #{tpu_custom_call.1} parent=35 // pred_region
          %214 = dma.done %s207, 192
        $region40: #{tpu_custom_call.1} parent=35 // pred_fallthru
          _
        // Predicated region
        $region41: #{tpu_custom_call.1} parent=35 // pred_check
          %p215 = pneg %p64
        $region42: #{tpu_custom_call.1} parent=35 // pred_check_branch
          %217 = sbr.rel (%p215) target = $region44
        $region43: #{tpu_custom_call.1} parent=35 // pred_region
          %218 = dma.done [#allocation6], 27648
        $region44: #{tpu_custom_call.1} parent=35 // pred_fallthru
          _
        // Predicated region
        $region45: #{tpu_custom_call.1} parent=35 // pred_check
          %p219 = pneg %p85
        $region46: #{tpu_custom_call.1} parent=35 // pred_check_branch
          %221 = sbr.rel (%p219) target = $region48
        $region47: #{tpu_custom_call.1} parent=35 // pred_region
          %222 = dma.done [#allocation6], 9216
        $region48: #{tpu_custom_call.1} parent=35 // pred_fallthru
          _
        %s223 = sand.u32 %s30, 1
        %s224 = scalar_lea.sflag [#allocation3], %s223
        %s225 = sand.u32 %s30, 1
        %s226 = smul.addr %s225, 12
        %s227 = scalar_lea.vmem [#allocation2], %s226
        %p228 = pneg %p43
        %p229 = pneg %p40
        %p230 = pneg %p64
        %p231 = pneg %p61
        %p232 = pneg %p85
        %p233 = pneg %p82
        %p234 = pneg %p106
        %p235 = pneg %p103
        %p236 = pneg %p132
        %p237 = pneg %p129
        %s238 = sand.u32 %s119, 1
        %s239 = scalar_lea.sflag [#allocation4], %s238
        %s240 = sand.u32 %s119, 1
        %s241 = smul.addr %s240, 24
        %s242 = scalar_lea.vmem [#allocation8], %s241
        %v244 = vld [vmem:[%s210] sm:$0xff]
        %v245 = vld [vmem:[%s210 + $0x8] sm:$0xf]
        %v246 = vld [vmem:[#allocation5] sm:$0xff]
        %v247 = vld [vmem:[#allocation5 + $0x8] sm:$0xff]
        %v248 = vld [vmem:[#allocation5 + $0x10] sm:$0xff]
        %v249 = vld [vmem:[#allocation5 + $0x18] sm:$0xff]
        %v250 = vld [vmem:[#allocation5 + $0x20] sm:$0xf]
        %v251 = vld [vmem:[#allocation5 + $0x24] sm:$0xff]
        %v252 = vld [vmem:[#allocation5 + $0x2c] sm:$0xff]
        %v253 = vld [vmem:[#allocation5 + $0x34] sm:$0xff]
        %v254 = vld [vmem:[#allocation5 + $0x3c] sm:$0xff]
        %v255 = vld [vmem:[#allocation5 + $0x44] sm:$0xf]
        %v256 = vld [vmem:[#allocation5 + $0x48] sm:$0xff]
        %v257 = vld [vmem:[#allocation5 + $0x50] sm:$0xff]
        %v258 = vld [vmem:[#allocation5 + $0x58] sm:$0xff]
        %v259 = vld [vmem:[#allocation5 + $0x60] sm:$0xff]
        %v260 = vld [vmem:[#allocation5 + $0x68] sm:$0xf]
        %v261 = vld [vmem:[#allocation5 + $0x6c] sm:$0xff]
        %v262 = vld [vmem:[#allocation5 + $0x74] sm:$0xff]
        %v263 = vld [vmem:[#allocation5 + $0x7c] sm:$0xff]
        %v264 = vld [vmem:[#allocation5 + $0x84] sm:$0xff]
        %v265 = vld [vmem:[#allocation5 + $0x8c] sm:$0xf]
        %v266 = vld [vmem:[#allocation5 + $0x90] sm:$0xff]
        %v267 = vld [vmem:[#allocation5 + $0x98] sm:$0xff]
        %v268 = vld [vmem:[#allocation5 + $0xa0] sm:$0xff]
        %v269 = vld [vmem:[#allocation5 + $0xa8] sm:$0xff]
        %v270 = vld [vmem:[#allocation5 + $0xb0] sm:$0xf]
        %v271 = vld [vmem:[#allocation5 + $0xb4] sm:$0xff]
        %v272 = vld [vmem:[#allocation5 + $0xbc] sm:$0xff]
        %v273 = vld [vmem:[#allocation5 + $0xc4] sm:$0xff]
        %v274 = vld [vmem:[#allocation5 + $0xcc] sm:$0xff]
        %v275 = vld [vmem:[#allocation5 + $0xd4] sm:$0xf]
        %v276 = vld [vmem:[#allocation5 + $0xd8] sm:$0xff]
        %v277 = vld [vmem:[#allocation5 + $0xe0] sm:$0xff]
        %v278 = vld [vmem:[#allocation5 + $0xe8] sm:$0xff]
        %v279 = vld [vmem:[#allocation5 + $0xf0] sm:$0xff]
        %v280 = vld [vmem:[#allocation5 + $0xf8] sm:$0xf]
        %v281 = vld [vmem:[#allocation5 + $0xfc] sm:$0xff]
        %v282 = vld [vmem:[#allocation5 + $0x104] sm:$0xff]
        %v283 = vld [vmem:[#allocation5 + $0x10c] sm:$0xff]
        %v284 = vld [vmem:[#allocation5 + $0x114] sm:$0xff]
        %v285 = vld [vmem:[#allocation5 + $0x11c] sm:$0xf]
        %v286 = vld [vmem:[#allocation5 + $0x120] sm:$0xff]
        %v287 = vld [vmem:[#allocation5 + $0x128] sm:$0xff]
        %v288 = vld [vmem:[#allocation5 + $0x130] sm:$0xff]
        %v289 = vld [vmem:[#allocation5 + $0x138] sm:$0xff]
        %v290 = vld [vmem:[#allocation5 + $0x140] sm:$0xf]
        %v291 = vld [vmem:[#allocation5 + $0x144] sm:$0xff]
        %v292 = vld [vmem:[#allocation5 + $0x14c] sm:$0xff]
        %v293 = vld [vmem:[#allocation5 + $0x154] sm:$0xff]
        %v294 = vld [vmem:[#allocation5 + $0x15c] sm:$0xff]
        %v295 = vld [vmem:[#allocation5 + $0x164] sm:$0xf]
        %v296 = vld [vmem:[#allocation5 + $0x168] sm:$0xff]
        %v297 = vld [vmem:[#allocation5 + $0x170] sm:$0xff]
        %v298 = vld [vmem:[#allocation5 + $0x178] sm:$0xff]
        %v299 = vld [vmem:[#allocation5 + $0x180] sm:$0xff]
        %v300 = vld [vmem:[#allocation5 + $0x188] sm:$0xf]
        %v301 = vld [vmem:[#allocation5 + $0x18c] sm:$0xff]
        %v302 = vld [vmem:[#allocation5 + $0x194] sm:$0xff]
        %v303 = vld [vmem:[#allocation5 + $0x19c] sm:$0xff]
        %v304 = vld [vmem:[#allocation5 + $0x1a4] sm:$0xff]
        %v305 = vld [vmem:[#allocation5 + $0x1ac] sm:$0xf]
        %v306 = vld [vmem:[#allocation5 + $0x1b0] sm:$0xff]
        %v307 = vld [vmem:[#allocation5 + $0x1b8] sm:$0xff]
        %v308 = vld [vmem:[#allocation5 + $0x1c0] sm:$0xff]
        %v309 = vld [vmem:[#allocation5 + $0x1c8] sm:$0xff]
        %v310 = vld [vmem:[#allocation5 + $0x1d0] sm:$0xf]
        %v311 = vld [vmem:[#allocation5 + $0x1d4] sm:$0xff]
        %v312 = vld [vmem:[#allocation5 + $0x1dc] sm:$0xff]
        %v313 = vld [vmem:[#allocation5 + $0x1e4] sm:$0xff]
        %v314 = vld [vmem:[#allocation5 + $0x1ec] sm:$0xff]
        %v315 = vld [vmem:[#allocation5 + $0x1f4] sm:$0xf]
        %v316 = vld [vmem:[#allocation5 + $0x1f8] sm:$0xff]
        %v317 = vld [vmem:[#allocation5 + $0x200] sm:$0xff]
        %v318 = vld [vmem:[#allocation5 + $0x208] sm:$0xff]
        %v319 = vld [vmem:[#allocation5 + $0x210] sm:$0xff]
        %v320 = vld [vmem:[#allocation5 + $0x218] sm:$0xf]
        %v321 = vld [vmem:[#allocation5 + $0x21c] sm:$0xff]
        %v322 = vld [vmem:[#allocation5 + $0x224] sm:$0xff]
        %v323 = vld [vmem:[#allocation5 + $0x22c] sm:$0xff]
        %v324 = vld [vmem:[#allocation5 + $0x234] sm:$0xff]
        %v325 = vld [vmem:[#allocation5 + $0x23c] sm:$0xf]
        %v326 = vld [vmem:[#allocation5 + $0x240] sm:$0xff]
        %v327 = vld [vmem:[#allocation5 + $0x248] sm:$0xff]
        %v328 = vld [vmem:[#allocation5 + $0x250] sm:$0xff]
        %v329 = vld [vmem:[#allocation5 + $0x258] sm:$0xff]
        %v330 = vld [vmem:[#allocation5 + $0x260] sm:$0xf]
        %v331 = vld [vmem:[#allocation5 + $0x264] sm:$0xff]
        %v332 = vld [vmem:[#allocation5 + $0x26c] sm:$0xff]
        %v333 = vld [vmem:[#allocation5 + $0x274] sm:$0xff]
        %v334 = vld [vmem:[#allocation5 + $0x27c] sm:$0xff]
        %v335 = vld [vmem:[#allocation5 + $0x284] sm:$0xf]
        %v336 = vld [vmem:[#allocation5 + $0x288] sm:$0xff]
        %v337 = vld [vmem:[#allocation5 + $0x290] sm:$0xff]
        %v338 = vld [vmem:[#allocation5 + $0x298] sm:$0xff]
        %v339 = vld [vmem:[#allocation5 + $0x2a0] sm:$0xff]
        %v340 = vld [vmem:[#allocation5 + $0x2a8] sm:$0xf]
        %v341 = vld [vmem:[#allocation5 + $0x2ac] sm:$0xff]
        %v342 = vld [vmem:[#allocation5 + $0x2b4] sm:$0xff]
        %v343 = vld [vmem:[#allocation5 + $0x2bc] sm:$0xff]
        %v344 = vld [vmem:[#allocation5 + $0x2c4] sm:$0xff]
        %v345 = vld [vmem:[#allocation5 + $0x2cc] sm:$0xf]
        %v346 = vld [vmem:[#allocation5 + $0x2d0] sm:$0xff]
        %v347 = vld [vmem:[#allocation5 + $0x2d8] sm:$0xff]
        %v348 = vld [vmem:[#allocation5 + $0x2e0] sm:$0xff]
        %v349 = vld [vmem:[#allocation5 + $0x2e8] sm:$0xff]
        %v350 = vld [vmem:[#allocation5 + $0x2f0] sm:$0xf]
        %v351 = vld [vmem:[#allocation5 + $0x2f4] sm:$0xff]
        %v352 = vld [vmem:[#allocation5 + $0x2fc] sm:$0xff]
        %v353 = vld [vmem:[#allocation5 + $0x304] sm:$0xff]
        %v354 = vld [vmem:[#allocation5 + $0x30c] sm:$0xff]
        %v355 = vld [vmem:[#allocation5 + $0x314] sm:$0xf]
        %v356 = vld [vmem:[#allocation5 + $0x318] sm:$0xff]
        %v357 = vld [vmem:[#allocation5 + $0x320] sm:$0xff]
        %v358 = vld [vmem:[#allocation5 + $0x328] sm:$0xff]
        %v359 = vld [vmem:[#allocation5 + $0x330] sm:$0xff]
        %v360 = vld [vmem:[#allocation5 + $0x338] sm:$0xf]
        %v361 = vld [vmem:[#allocation5 + $0x33c] sm:$0xff]
        %v362 = vld [vmem:[#allocation5 + $0x344] sm:$0xff]
        %v363 = vld [vmem:[#allocation5 + $0x34c] sm:$0xff]
        %v364 = vld [vmem:[#allocation5 + $0x354] sm:$0xff]
        %v365 = vld [vmem:[#allocation5 + $0x35c] sm:$0xf]
        %v366 = vld [vmem:[#allocation5 + $0x360] sm:$0xff]
        %v367 = vld [vmem:[#allocation5 + $0x368] sm:$0xff]
        %v368 = vld [vmem:[#allocation5 + $0x370] sm:$0xff]
        %v369 = vld [vmem:[#allocation5 + $0x378] sm:$0xff]
        %v370 = vld [vmem:[#allocation5 + $0x380] sm:$0xf]
        %v371 = vld [vmem:[#allocation5 + $0x384] sm:$0xff]
        %v372 = vld [vmem:[#allocation5 + $0x38c] sm:$0xff]
        %v373 = vld [vmem:[#allocation5 + $0x394] sm:$0xff]
        %v374 = vld [vmem:[#allocation5 + $0x39c] sm:$0xff]
        %v375 = vld [vmem:[#allocation5 + $0x3a4] sm:$0xf]
        %v376 = vld [vmem:[#allocation5 + $0x3a8] sm:$0xff]
        %v377 = vld [vmem:[#allocation5 + $0x3b0] sm:$0xff]
        %v378 = vld [vmem:[#allocation5 + $0x3b8] sm:$0xff]
        %v379 = vld [vmem:[#allocation5 + $0x3c0] sm:$0xff]
        %v380 = vld [vmem:[#allocation5 + $0x3c8] sm:$0xf]
        %v381 = vld [vmem:[#allocation5 + $0x3cc] sm:$0xff]
        %v382 = vld [vmem:[#allocation5 + $0x3d4] sm:$0xff]
        %v383 = vld [vmem:[#allocation5 + $0x3dc] sm:$0xff]
        %v384 = vld [vmem:[#allocation5 + $0x3e4] sm:$0xff]
        %v385 = vld [vmem:[#allocation5 + $0x3ec] sm:$0xf]
        %v386 = vld [vmem:[#allocation5 + $0x3f0] sm:$0xff]
        %v387 = vld [vmem:[#allocation5 + $0x3f8] sm:$0xff]
        %v388 = vld [vmem:[#allocation5 + $0x400] sm:$0xff]
        %v389 = vld [vmem:[#allocation5 + $0x408] sm:$0xff]
        %v390 = vld [vmem:[#allocation5 + $0x410] sm:$0xf]
        %v391 = vld [vmem:[#allocation5 + $0x414] sm:$0xff]
        %v392 = vld [vmem:[#allocation5 + $0x41c] sm:$0xff]
        %v393 = vld [vmem:[#allocation5 + $0x424] sm:$0xff]
        %v394 = vld [vmem:[#allocation5 + $0x42c] sm:$0xff]
        %v395 = vld [vmem:[#allocation5 + $0x434] sm:$0xf]
        %v396 = vld [vmem:[#allocation5 + $0x438] sm:$0xff]
        %v397 = vld [vmem:[#allocation5 + $0x440] sm:$0xff]
        %v398 = vld [vmem:[#allocation5 + $0x448] sm:$0xff]
        %v399 = vld [vmem:[#allocation5 + $0x450] sm:$0xff]
        %v400 = vld [vmem:[#allocation5 + $0x458] sm:$0xf]
        %v401 = vld [vmem:[#allocation5 + $0x45c] sm:$0xff]
        %v402 = vld [vmem:[#allocation5 + $0x464] sm:$0xff]
        %v403 = vld [vmem:[#allocation5 + $0x46c] sm:$0xff]
        %v404 = vld [vmem:[#allocation5 + $0x474] sm:$0xff]
        %v405 = vld [vmem:[#allocation5 + $0x47c] sm:$0xf]
        %v406 = vld [vmem:[#allocation5 + $0x480] sm:$0xff]
        %v407 = vld [vmem:[#allocation5 + $0x488] sm:$0xff]
        %v408 = vld [vmem:[#allocation5 + $0x490] sm:$0xff]
        %v409 = vld [vmem:[#allocation5 + $0x498] sm:$0xff]
        %v410 = vld [vmem:[#allocation5 + $0x4a0] sm:$0xf]
        %v411 = vld [vmem:[#allocation5 + $0x4a4] sm:$0xff]
        %v412 = vld [vmem:[#allocation5 + $0x4ac] sm:$0xff]
        %v413 = vld [vmem:[#allocation5 + $0x4b4] sm:$0xff]
        %v414 = vld [vmem:[#allocation5 + $0x4bc] sm:$0xff]
        %v415 = vld [vmem:[#allocation5 + $0x4c4] sm:$0xf]
        %v416 = vld [vmem:[#allocation5 + $0x4c8] sm:$0xff]
        %v417 = vld [vmem:[#allocation5 + $0x4d0] sm:$0xff]
        %v418 = vld [vmem:[#allocation5 + $0x4d8] sm:$0xff]
        %v419 = vld [vmem:[#allocation5 + $0x4e0] sm:$0xff]
        %v420 = vld [vmem:[#allocation5 + $0x4e8] sm:$0xf]
        %v421 = vld [vmem:[#allocation5 + $0x4ec] sm:$0xff]
        %v422 = vld [vmem:[#allocation5 + $0x4f4] sm:$0xff]
        %v423 = vld [vmem:[#allocation5 + $0x4fc] sm:$0xff]
        %v424 = vld [vmem:[#allocation5 + $0x504] sm:$0xff]
        %v425 = vld [vmem:[#allocation5 + $0x50c] sm:$0xf]
        %v426 = vld [vmem:[#allocation5 + $0x510] sm:$0xff]
        %v427 = vld [vmem:[#allocation5 + $0x518] sm:$0xff]
        %v428 = vld [vmem:[#allocation5 + $0x520] sm:$0xff]
        %v429 = vld [vmem:[#allocation5 + $0x528] sm:$0xff]
        %v430 = vld [vmem:[#allocation5 + $0x530] sm:$0xf]
        %v431 = vld [vmem:[#allocation5 + $0x534] sm:$0xff]
        %v432 = vld [vmem:[#allocation5 + $0x53c] sm:$0xff]
        %v433 = vld [vmem:[#allocation5 + $0x544] sm:$0xff]
        %v434 = vld [vmem:[#allocation5 + $0x54c] sm:$0xff]
        %v435 = vld [vmem:[#allocation5 + $0x554] sm:$0xf]
        %v436 = vld [vmem:[#allocation5 + $0x558] sm:$0xff]
        %v437 = vld [vmem:[#allocation5 + $0x560] sm:$0xff]
        %v438 = vld [vmem:[#allocation5 + $0x568] sm:$0xff]
        %v439 = vld [vmem:[#allocation5 + $0x570] sm:$0xff]
        %v440 = vld [vmem:[#allocation5 + $0x578] sm:$0xf]
        %v441 = vld [vmem:[#allocation5 + $0x57c] sm:$0xff]
        %v442 = vld [vmem:[#allocation5 + $0x584] sm:$0xff]
        %v443 = vld [vmem:[#allocation5 + $0x58c] sm:$0xff]
        %v444 = vld [vmem:[#allocation5 + $0x594] sm:$0xff]
        %v445 = vld [vmem:[#allocation5 + $0x59c] sm:$0xf]
        %v446 = vld [vmem:[#allocation5 + $0x5a0] sm:$0xff]
        %v447 = vld [vmem:[#allocation5 + $0x5a8] sm:$0xff]
        %v448 = vld [vmem:[#allocation5 + $0x5b0] sm:$0xff]
        %v449 = vld [vmem:[#allocation5 + $0x5b8] sm:$0xff]
        %v450 = vld [vmem:[#allocation5 + $0x5c0] sm:$0xf]
        %v451 = vld [vmem:[#allocation5 + $0x5c4] sm:$0xff]
        %v452 = vld [vmem:[#allocation5 + $0x5cc] sm:$0xff]
        %v453 = vld [vmem:[#allocation5 + $0x5d4] sm:$0xff]
        %v454 = vld [vmem:[#allocation5 + $0x5dc] sm:$0xff]
        %v455 = vld [vmem:[#allocation5 + $0x5e4] sm:$0xf]
        %v456 = vld [vmem:[#allocation5 + $0x5e8] sm:$0xff]
        %v457 = vld [vmem:[#allocation5 + $0x5f0] sm:$0xff]
        %v458 = vld [vmem:[#allocation5 + $0x5f8] sm:$0xff]
        %v459 = vld [vmem:[#allocation5 + $0x600] sm:$0xff]
        %v460 = vld [vmem:[#allocation5 + $0x608] sm:$0xf]
        %v461 = vld [vmem:[#allocation5 + $0x60c] sm:$0xff]
        %v462 = vld [vmem:[#allocation5 + $0x614] sm:$0xff]
        %v463 = vld [vmem:[#allocation5 + $0x61c] sm:$0xff]
        %v464 = vld [vmem:[#allocation5 + $0x624] sm:$0xff]
        %v465 = vld [vmem:[#allocation5 + $0x62c] sm:$0xf]
        %v466 = vld [vmem:[#allocation5 + $0x630] sm:$0xff]
        %v467 = vld [vmem:[#allocation5 + $0x638] sm:$0xff]
        %v468 = vld [vmem:[#allocation5 + $0x640] sm:$0xff]
        %v469 = vld [vmem:[#allocation5 + $0x648] sm:$0xff]
        %v470 = vld [vmem:[#allocation5 + $0x650] sm:$0xf]
        %v471 = vld [vmem:[#allocation5 + $0x654] sm:$0xff]
        %v472 = vld [vmem:[#allocation5 + $0x65c] sm:$0xff]
        %v473 = vld [vmem:[#allocation5 + $0x664] sm:$0xff]
        %v474 = vld [vmem:[#allocation5 + $0x66c] sm:$0xff]
        %v475 = vld [vmem:[#allocation5 + $0x674] sm:$0xf]
        %v476 = vld [vmem:[#allocation5 + $0x678] sm:$0xff]
        %v477 = vld [vmem:[#allocation5 + $0x680] sm:$0xff]
        %v478 = vld [vmem:[#allocation5 + $0x688] sm:$0xff]
        %v479 = vld [vmem:[#allocation5 + $0x690] sm:$0xff]
        %v480 = vld [vmem:[#allocation5 + $0x698] sm:$0xf]
        %v481 = vld [vmem:[#allocation5 + $0x69c] sm:$0xff]
        %v482 = vld [vmem:[#allocation5 + $0x6a4] sm:$0xff]
        %v483 = vld [vmem:[#allocation5 + $0x6ac] sm:$0xff]
        %v484 = vld [vmem:[#allocation5 + $0x6b4] sm:$0xff]
        %v485 = vld [vmem:[#allocation5 + $0x6bc] sm:$0xf]
        %v488 = vunpack.c.l.b16 %v244
        %v489 = vunpack.c.h.b16 %v244
        %v490 = vunpack.c.l.b16 %v245
        %v491 = vpack.c.b16 %v488, %v488
        %v492 = vpack.c.b16 %v489, %v489
        %v493 = vpack.c.b16 %v490, %v490
        %v737 = vunpack.c.l.b16 %v246
        %v738 = vunpack.c.h.b16 %v246
        %v739 = vunpack.c.l.b16 %v247
        %v740 = vunpack.c.h.b16 %v247
        %v741 = vunpack.c.l.b16 %v248
        %v742 = vunpack.c.h.b16 %v248
        %v743 = vunpack.c.l.b16 %v249
        %v744 = vunpack.c.h.b16 %v249
        %v745 = vunpack.c.l.b16 %v250
        %v746 = vunpack.c.l.b16 %v251
        %v747 = vunpack.c.h.b16 %v251
        %v748 = vunpack.c.l.b16 %v252
        %v749 = vunpack.c.h.b16 %v252
        %v750 = vunpack.c.l.b16 %v253
        %v751 = vunpack.c.h.b16 %v253
        %v752 = vunpack.c.l.b16 %v254
        %v753 = vunpack.c.h.b16 %v254
        %v754 = vunpack.c.l.b16 %v255
        %v755 = vunpack.c.l.b16 %v256
        %v756 = vunpack.c.h.b16 %v256
        %v757 = vunpack.c.l.b16 %v257
        %v758 = vunpack.c.h.b16 %v257
        %v759 = vunpack.c.l.b16 %v258
        %v760 = vunpack.c.h.b16 %v258
        %v761 = vunpack.c.l.b16 %v259
        %v762 = vunpack.c.h.b16 %v259
        %v763 = vunpack.c.l.b16 %v260
        %v764 = vunpack.c.l.b16 %v261
        %v765 = vunpack.c.h.b16 %v261
        %v766 = vunpack.c.l.b16 %v262
        %v767 = vunpack.c.h.b16 %v262
        %v768 = vunpack.c.l.b16 %v263
        %v769 = vunpack.c.h.b16 %v263
        %v770 = vunpack.c.l.b16 %v264
        %v771 = vunpack.c.h.b16 %v264
        %v772 = vunpack.c.l.b16 %v265
        %v773 = vunpack.c.l.b16 %v266
        %v774 = vunpack.c.h.b16 %v266
        %v775 = vunpack.c.l.b16 %v267
        %v776 = vunpack.c.h.b16 %v267
        %v777 = vunpack.c.l.b16 %v268
        %v778 = vunpack.c.h.b16 %v268
        %v779 = vunpack.c.l.b16 %v269
        %v780 = vunpack.c.h.b16 %v269
        %v781 = vunpack.c.l.b16 %v270
        %v782 = vunpack.c.l.b16 %v271
        %v783 = vunpack.c.h.b16 %v271
        %v784 = vunpack.c.l.b16 %v272
        %v785 = vunpack.c.h.b16 %v272
        %v786 = vunpack.c.l.b16 %v273
        %v787 = vunpack.c.h.b16 %v273
        %v788 = vunpack.c.l.b16 %v274
        %v789 = vunpack.c.h.b16 %v274
        %v790 = vunpack.c.l.b16 %v275
        %v791 = vunpack.c.l.b16 %v276
        %v792 = vunpack.c.h.b16 %v276
        %v793 = vunpack.c.l.b16 %v277
        %v794 = vunpack.c.h.b16 %v277
        %v795 = vunpack.c.l.b16 %v278
        %v796 = vunpack.c.h.b16 %v278
        %v797 = vunpack.c.l.b16 %v279
        %v798 = vunpack.c.h.b16 %v279
        %v799 = vunpack.c.l.b16 %v280
        %v800 = vunpack.c.l.b16 %v281
        %v801 = vunpack.c.h.b16 %v281
        %v802 = vunpack.c.l.b16 %v282
        %v803 = vunpack.c.h.b16 %v282
        %v804 = vunpack.c.l.b16 %v283
        %v805 = vunpack.c.h.b16 %v283
        %v806 = vunpack.c.l.b16 %v284
        %v807 = vunpack.c.h.b16 %v284
        %v808 = vunpack.c.l.b16 %v285
        %v809 = vunpack.c.l.b16 %v286
        %v810 = vunpack.c.h.b16 %v286
        %v811 = vunpack.c.l.b16 %v287
        %v812 = vunpack.c.h.b16 %v287
        %v813 = vunpack.c.l.b16 %v288
        %v814 = vunpack.c.h.b16 %v288
        %v815 = vunpack.c.l.b16 %v289
        %v816 = vunpack.c.h.b16 %v289
        %v817 = vunpack.c.l.b16 %v290
        %v818 = vunpack.c.l.b16 %v291
        %v819 = vunpack.c.h.b16 %v291
        %v820 = vunpack.c.l.b16 %v292
        %v821 = vunpack.c.h.b16 %v292
        %v822 = vunpack.c.l.b16 %v293
        %v823 = vunpack.c.h.b16 %v293
        %v824 = vunpack.c.l.b16 %v294
        %v825 = vunpack.c.h.b16 %v294
        %v826 = vunpack.c.l.b16 %v295
        %v827 = vunpack.c.l.b16 %v296
        %v828 = vunpack.c.h.b16 %v296
        %v829 = vunpack.c.l.b16 %v297
        %v830 = vunpack.c.h.b16 %v297
        %v831 = vunpack.c.l.b16 %v298
        %v832 = vunpack.c.h.b16 %v298
        %v833 = vunpack.c.l.b16 %v299
        %v834 = vunpack.c.h.b16 %v299
        %v835 = vunpack.c.l.b16 %v300
        %v836 = vunpack.c.l.b16 %v301
        %v837 = vunpack.c.h.b16 %v301
        %v838 = vunpack.c.l.b16 %v302
        %v839 = vunpack.c.h.b16 %v302
        %v840 = vunpack.c.l.b16 %v303
        %v841 = vunpack.c.h.b16 %v303
        %v842 = vunpack.c.l.b16 %v304
        %v843 = vunpack.c.h.b16 %v304
        %v844 = vunpack.c.l.b16 %v305
        %v845 = vunpack.c.l.b16 %v306
        %v846 = vunpack.c.h.b16 %v306
        %v847 = vunpack.c.l.b16 %v307
        %v848 = vunpack.c.h.b16 %v307
        %v849 = vunpack.c.l.b16 %v308
        %v850 = vunpack.c.h.b16 %v308
        %v851 = vunpack.c.l.b16 %v309
        %v852 = vunpack.c.h.b16 %v309
        %v853 = vunpack.c.l.b16 %v310
        %v854 = vunpack.c.l.b16 %v311
        %v855 = vunpack.c.h.b16 %v311
        %v856 = vunpack.c.l.b16 %v312
        %v857 = vunpack.c.h.b16 %v312
        %v858 = vunpack.c.l.b16 %v313
        %v859 = vunpack.c.h.b16 %v313
        %v860 = vunpack.c.l.b16 %v314
        %v861 = vunpack.c.h.b16 %v314
        %v862 = vunpack.c.l.b16 %v315
        %v863 = vunpack.c.l.b16 %v316
        %v864 = vunpack.c.h.b16 %v316
        %v865 = vunpack.c.l.b16 %v317
        %v866 = vunpack.c.h.b16 %v317
        %v867 = vunpack.c.l.b16 %v318
        %v868 = vunpack.c.h.b16 %v318
        %v869 = vunpack.c.l.b16 %v319
        %v870 = vunpack.c.h.b16 %v319
        %v871 = vunpack.c.l.b16 %v320
        %v872 = vunpack.c.l.b16 %v321
        %v873 = vunpack.c.h.b16 %v321
        %v874 = vunpack.c.l.b16 %v322
        %v875 = vunpack.c.h.b16 %v322
        %v876 = vunpack.c.l.b16 %v323
        %v877 = vunpack.c.h.b16 %v323
        %v878 = vunpack.c.l.b16 %v324
        %v879 = vunpack.c.h.b16 %v324
        %v880 = vunpack.c.l.b16 %v325
        %v881 = vunpack.c.l.b16 %v326
        %v882 = vunpack.c.h.b16 %v326
        %v883 = vunpack.c.l.b16 %v327
        %v884 = vunpack.c.h.b16 %v327
        %v885 = vunpack.c.l.b16 %v328
        %v886 = vunpack.c.h.b16 %v328
        %v887 = vunpack.c.l.b16 %v329
        %v888 = vunpack.c.h.b16 %v329
        %v889 = vunpack.c.l.b16 %v330
        %v890 = vunpack.c.l.b16 %v331
        %v891 = vunpack.c.h.b16 %v331
        %v892 = vunpack.c.l.b16 %v332
        %v893 = vunpack.c.h.b16 %v332
        %v894 = vunpack.c.l.b16 %v333
        %v895 = vunpack.c.h.b16 %v333
        %v896 = vunpack.c.l.b16 %v334
        %v897 = vunpack.c.h.b16 %v334
        %v898 = vunpack.c.l.b16 %v335
        %v899 = vunpack.c.l.b16 %v336
        %v900 = vunpack.c.h.b16 %v336
        %v901 = vunpack.c.l.b16 %v337
        %v902 = vunpack.c.h.b16 %v337
        %v903 = vunpack.c.l.b16 %v338
        %v904 = vunpack.c.h.b16 %v338
        %v905 = vunpack.c.l.b16 %v339
        %v906 = vunpack.c.h.b16 %v339
        %v907 = vunpack.c.l.b16 %v340
        %v908 = vunpack.c.l.b16 %v341
        %v909 = vunpack.c.h.b16 %v341
        %v910 = vunpack.c.l.b16 %v342
        %v911 = vunpack.c.h.b16 %v342
        %v912 = vunpack.c.l.b16 %v343
        %v913 = vunpack.c.h.b16 %v343
        %v914 = vunpack.c.l.b16 %v344
        %v915 = vunpack.c.h.b16 %v344
        %v916 = vunpack.c.l.b16 %v345
        %v917 = vunpack.c.l.b16 %v346
        %v918 = vunpack.c.h.b16 %v346
        %v919 = vunpack.c.l.b16 %v347
        %v920 = vunpack.c.h.b16 %v347
        %v921 = vunpack.c.l.b16 %v348
        %v922 = vunpack.c.h.b16 %v348
        %v923 = vunpack.c.l.b16 %v349
        %v924 = vunpack.c.h.b16 %v349
        %v925 = vunpack.c.l.b16 %v350
        %v926 = vunpack.c.l.b16 %v351
        %v927 = vunpack.c.h.b16 %v351
        %v928 = vunpack.c.l.b16 %v352
        %v929 = vunpack.c.h.b16 %v352
        %v930 = vunpack.c.l.b16 %v353
        %v931 = vunpack.c.h.b16 %v353
        %v932 = vunpack.c.l.b16 %v354
        %v933 = vunpack.c.h.b16 %v354
        %v934 = vunpack.c.l.b16 %v355
        %v935 = vunpack.c.l.b16 %v356
        %v936 = vunpack.c.h.b16 %v356
        %v937 = vunpack.c.l.b16 %v357
        %v938 = vunpack.c.h.b16 %v357
        %v939 = vunpack.c.l.b16 %v358
        %v940 = vunpack.c.h.b16 %v358
        %v941 = vunpack.c.l.b16 %v359
        %v942 = vunpack.c.h.b16 %v359
        %v943 = vunpack.c.l.b16 %v360
        %v944 = vunpack.c.l.b16 %v361
        %v945 = vunpack.c.h.b16 %v361
        %v946 = vunpack.c.l.b16 %v362
        %v947 = vunpack.c.h.b16 %v362
        %v948 = vunpack.c.l.b16 %v363
        %v949 = vunpack.c.h.b16 %v363
        %v950 = vunpack.c.l.b16 %v364
        %v951 = vunpack.c.h.b16 %v364
        %v952 = vunpack.c.l.b16 %v365
        %v953 = vunpack.c.l.b16 %v366
        %v954 = vunpack.c.h.b16 %v366
        %v955 = vunpack.c.l.b16 %v367
        %v956 = vunpack.c.h.b16 %v367
        %v957 = vunpack.c.l.b16 %v368
        %v958 = vunpack.c.h.b16 %v368
        %v959 = vunpack.c.l.b16 %v369
        %v960 = vunpack.c.h.b16 %v369
        %v961 = vunpack.c.l.b16 %v370
        %v962 = vunpack.c.l.b16 %v371
        %v963 = vunpack.c.h.b16 %v371
        %v964 = vunpack.c.l.b16 %v372
        %v965 = vunpack.c.h.b16 %v372
        %v966 = vunpack.c.l.b16 %v373
        %v967 = vunpack.c.h.b16 %v373
        %v968 = vunpack.c.l.b16 %v374
        %v969 = vunpack.c.h.b16 %v374
        %v970 = vunpack.c.l.b16 %v375
        %v971 = vunpack.c.l.b16 %v376
        %v972 = vunpack.c.h.b16 %v376
        %v973 = vunpack.c.l.b16 %v377
        %v974 = vunpack.c.h.b16 %v377
        %v975 = vunpack.c.l.b16 %v378
        %v976 = vunpack.c.h.b16 %v378
        %v977 = vunpack.c.l.b16 %v379
        %v978 = vunpack.c.h.b16 %v379
        %v979 = vunpack.c.l.b16 %v380
        %v980 = vunpack.c.l.b16 %v381
        %v981 = vunpack.c.h.b16 %v381
        %v982 = vunpack.c.l.b16 %v382
        %v983 = vunpack.c.h.b16 %v382
        %v984 = vunpack.c.l.b16 %v383
        %v985 = vunpack.c.h.b16 %v383
        %v986 = vunpack.c.l.b16 %v384
        %v987 = vunpack.c.h.b16 %v384
        %v988 = vunpack.c.l.b16 %v385
        %v989 = vunpack.c.l.b16 %v386
        %v990 = vunpack.c.h.b16 %v386
        %v991 = vunpack.c.l.b16 %v387
        %v992 = vunpack.c.h.b16 %v387
        %v993 = vunpack.c.l.b16 %v388
        %v994 = vunpack.c.h.b16 %v388
        %v995 = vunpack.c.l.b16 %v389
        %v996 = vunpack.c.h.b16 %v389
        %v997 = vunpack.c.l.b16 %v390
        %v998 = vunpack.c.l.b16 %v391
        %v999 = vunpack.c.h.b16 %v391
        %v1000 = vunpack.c.l.b16 %v392
        %v1001 = vunpack.c.h.b16 %v392
        %v1002 = vunpack.c.l.b16 %v393
        %v1003 = vunpack.c.h.b16 %v393
        %v1004 = vunpack.c.l.b16 %v394
        %v1005 = vunpack.c.h.b16 %v394
        %v1006 = vunpack.c.l.b16 %v395
        %v1007 = vunpack.c.l.b16 %v396
        %v1008 = vunpack.c.h.b16 %v396
        %v1009 = vunpack.c.l.b16 %v397
        %v1010 = vunpack.c.h.b16 %v397
        %v1011 = vunpack.c.l.b16 %v398
        %v1012 = vunpack.c.h.b16 %v398
        %v1013 = vunpack.c.l.b16 %v399
        %v1014 = vunpack.c.h.b16 %v399
        %v1015 = vunpack.c.l.b16 %v400
        %v1016 = vunpack.c.l.b16 %v401
        %v1017 = vunpack.c.h.b16 %v401
        %v1018 = vunpack.c.l.b16 %v402
        %v1019 = vunpack.c.h.b16 %v402
        %v1020 = vunpack.c.l.b16 %v403
        %v1021 = vunpack.c.h.b16 %v403
        %v1022 = vunpack.c.l.b16 %v404
        %v1023 = vunpack.c.h.b16 %v404
        %v1024 = vunpack.c.l.b16 %v405
        %v1025 = vunpack.c.l.b16 %v406
        %v1026 = vunpack.c.h.b16 %v406
        %v1027 = vunpack.c.l.b16 %v407
        %v1028 = vunpack.c.h.b16 %v407
        %v1029 = vunpack.c.l.b16 %v408
        %v1030 = vunpack.c.h.b16 %v408
        %v1031 = vunpack.c.l.b16 %v409
        %v1032 = vunpack.c.h.b16 %v409
        %v1033 = vunpack.c.l.b16 %v410
        %v1034 = vunpack.c.l.b16 %v411
        %v1035 = vunpack.c.h.b16 %v411
        %v1036 = vunpack.c.l.b16 %v412
        %v1037 = vunpack.c.h.b16 %v412
        %v1038 = vunpack.c.l.b16 %v413
        %v1039 = vunpack.c.h.b16 %v413
        %v1040 = vunpack.c.l.b16 %v414
        %v1041 = vunpack.c.h.b16 %v414
        %v1042 = vunpack.c.l.b16 %v415
        %v1043 = vunpack.c.l.b16 %v416
        %v1044 = vunpack.c.h.b16 %v416
        %v1045 = vunpack.c.l.b16 %v417
        %v1046 = vunpack.c.h.b16 %v417
        %v1047 = vunpack.c.l.b16 %v418
        %v1048 = vunpack.c.h.b16 %v418
        %v1049 = vunpack.c.l.b16 %v419
        %v1050 = vunpack.c.h.b16 %v419
        %v1051 = vunpack.c.l.b16 %v420
        %v1052 = vunpack.c.l.b16 %v421
        %v1053 = vunpack.c.h.b16 %v421
        %v1054 = vunpack.c.l.b16 %v422
        %v1055 = vunpack.c.h.b16 %v422
        %v1056 = vunpack.c.l.b16 %v423
        %v1057 = vunpack.c.h.b16 %v423
        %v1058 = vunpack.c.l.b16 %v424
        %v1059 = vunpack.c.h.b16 %v424
        %v1060 = vunpack.c.l.b16 %v425
        %v1061 = vunpack.c.l.b16 %v426
        %v1062 = vunpack.c.h.b16 %v426
        %v1063 = vunpack.c.l.b16 %v427
        %v1064 = vunpack.c.h.b16 %v427
        %v1065 = vunpack.c.l.b16 %v428
        %v1066 = vunpack.c.h.b16 %v428
        %v1067 = vunpack.c.l.b16 %v429
        %v1068 = vunpack.c.h.b16 %v429
        %v1069 = vunpack.c.l.b16 %v430
        %v1070 = vunpack.c.l.b16 %v431
        %v1071 = vunpack.c.h.b16 %v431
        %v1072 = vunpack.c.l.b16 %v432
        %v1073 = vunpack.c.h.b16 %v432
        %v1074 = vunpack.c.l.b16 %v433
        %v1075 = vunpack.c.h.b16 %v433
        %v1076 = vunpack.c.l.b16 %v434
        %v1077 = vunpack.c.h.b16 %v434
        %v1078 = vunpack.c.l.b16 %v435
        %v1079 = vunpack.c.l.b16 %v436
        %v1080 = vunpack.c.h.b16 %v436
        %v1081 = vunpack.c.l.b16 %v437
        %v1082 = vunpack.c.h.b16 %v437
        %v1083 = vunpack.c.l.b16 %v438
        %v1084 = vunpack.c.h.b16 %v438
        %v1085 = vunpack.c.l.b16 %v439
        %v1086 = vunpack.c.h.b16 %v439
        %v1087 = vunpack.c.l.b16 %v440
        %v1088 = vunpack.c.l.b16 %v441
        %v1089 = vunpack.c.h.b16 %v441
        %v1090 = vunpack.c.l.b16 %v442
        %v1091 = vunpack.c.h.b16 %v442
        %v1092 = vunpack.c.l.b16 %v443
        %v1093 = vunpack.c.h.b16 %v443
        %v1094 = vunpack.c.l.b16 %v444
        %v1095 = vunpack.c.h.b16 %v444
        %v1096 = vunpack.c.l.b16 %v445
        %v1097 = vunpack.c.l.b16 %v446
        %v1098 = vunpack.c.h.b16 %v446
        %v1099 = vunpack.c.l.b16 %v447
        %v1100 = vunpack.c.h.b16 %v447
        %v1101 = vunpack.c.l.b16 %v448
        %v1102 = vunpack.c.h.b16 %v448
        %v1103 = vunpack.c.l.b16 %v449
        %v1104 = vunpack.c.h.b16 %v449
        %v1105 = vunpack.c.l.b16 %v450
        %v1106 = vunpack.c.l.b16 %v451
        %v1107 = vunpack.c.h.b16 %v451
        %v1108 = vunpack.c.l.b16 %v452
        %v1109 = vunpack.c.h.b16 %v452
        %v1110 = vunpack.c.l.b16 %v453
        %v1111 = vunpack.c.h.b16 %v453
        %v1112 = vunpack.c.l.b16 %v454
        %v1113 = vunpack.c.h.b16 %v454
        %v1114 = vunpack.c.l.b16 %v455
        %v1115 = vunpack.c.l.b16 %v456
        %v1116 = vunpack.c.h.b16 %v456
        %v1117 = vunpack.c.l.b16 %v457
        %v1118 = vunpack.c.h.b16 %v457
        %v1119 = vunpack.c.l.b16 %v458
        %v1120 = vunpack.c.h.b16 %v458
        %v1121 = vunpack.c.l.b16 %v459
        %v1122 = vunpack.c.h.b16 %v459
        %v1123 = vunpack.c.l.b16 %v460
        %v1124 = vunpack.c.l.b16 %v461
        %v1125 = vunpack.c.h.b16 %v461
        %v1126 = vunpack.c.l.b16 %v462
        %v1127 = vunpack.c.h.b16 %v462
        %v1128 = vunpack.c.l.b16 %v463
        %v1129 = vunpack.c.h.b16 %v463
        %v1130 = vunpack.c.l.b16 %v464
        %v1131 = vunpack.c.h.b16 %v464
        %v1132 = vunpack.c.l.b16 %v465
        %v1133 = vunpack.c.l.b16 %v466
        %v1134 = vunpack.c.h.b16 %v466
        %v1135 = vunpack.c.l.b16 %v467
        %v1136 = vunpack.c.h.b16 %v467
        %v1137 = vunpack.c.l.b16 %v468
        %v1138 = vunpack.c.h.b16 %v468
        %v1139 = vunpack.c.l.b16 %v469
        %v1140 = vunpack.c.h.b16 %v469
        %v1141 = vunpack.c.l.b16 %v470
        %v1142 = vunpack.c.l.b16 %v471
        %v1143 = vunpack.c.h.b16 %v471
        %v1144 = vunpack.c.l.b16 %v472
        %v1145 = vunpack.c.h.b16 %v472
        %v1146 = vunpack.c.l.b16 %v473
        %v1147 = vunpack.c.h.b16 %v473
        %v1148 = vunpack.c.l.b16 %v474
        %v1149 = vunpack.c.h.b16 %v474
        %v1150 = vunpack.c.l.b16 %v475
        %v1151 = vunpack.c.l.b16 %v476
        %v1152 = vunpack.c.h.b16 %v476
        %v1153 = vunpack.c.l.b16 %v477
        %v1154 = vunpack.c.h.b16 %v477
        %v1155 = vunpack.c.l.b16 %v478
        %v1156 = vunpack.c.h.b16 %v478
        %v1157 = vunpack.c.l.b16 %v479
        %v1158 = vunpack.c.h.b16 %v479
        %v1159 = vunpack.c.l.b16 %v480
        %v1160 = vunpack.c.l.b16 %v481
        %v1161 = vunpack.c.h.b16 %v481
        %v1162 = vunpack.c.l.b16 %v482
        %v1163 = vunpack.c.h.b16 %v482
        %v1164 = vunpack.c.l.b16 %v483
        %v1165 = vunpack.c.h.b16 %v483
        %v1166 = vunpack.c.l.b16 %v484
        %v1167 = vunpack.c.h.b16 %v484
        %v1168 = vunpack.c.l.b16 %v485
        %v1169 = vpack.c.b16 %v746, %v737
        %v1170 = vpack.c.b16 %v747, %v738
        %v1171 = vpack.c.b16 %v748, %v739
        %v1172 = vpack.c.b16 %v749, %v740
        %v1173 = vpack.c.b16 %v750, %v741
        %v1174 = vpack.c.b16 %v751, %v742
        %v1175 = vpack.c.b16 %v752, %v743
        %v1176 = vpack.c.b16 %v753, %v744
        %v1177 = vpack.c.b16 %v754, %v745
        %v1178 = vpack.c.b16 %v764, %v755
        %v1179 = vpack.c.b16 %v765, %v756
        %v1180 = vpack.c.b16 %v766, %v757
        %v1181 = vpack.c.b16 %v767, %v758
        %v1182 = vpack.c.b16 %v768, %v759
        %v1183 = vpack.c.b16 %v769, %v760
        %v1184 = vpack.c.b16 %v770, %v761
        %v1185 = vpack.c.b16 %v771, %v762
        %v1186 = vpack.c.b16 %v772, %v763
        %v1187 = vpack.c.b16 %v782, %v773
        %v1188 = vpack.c.b16 %v783, %v774
        %v1189 = vpack.c.b16 %v784, %v775
        %v1190 = vpack.c.b16 %v785, %v776
        %v1191 = vpack.c.b16 %v786, %v777
        %v1192 = vpack.c.b16 %v787, %v778
        %v1193 = vpack.c.b16 %v788, %v779
        %v1194 = vpack.c.b16 %v789, %v780
        %v1195 = vpack.c.b16 %v790, %v781
        %v1196 = vpack.c.b16 %v800, %v791
        %v1197 = vpack.c.b16 %v801, %v792
        %v1198 = vpack.c.b16 %v802, %v793
        %v1199 = vpack.c.b16 %v803, %v794
        %v1200 = vpack.c.b16 %v804, %v795
        %v1201 = vpack.c.b16 %v805, %v796
        %v1202 = vpack.c.b16 %v806, %v797
        %v1203 = vpack.c.b16 %v807, %v798
        %v1204 = vpack.c.b16 %v808, %v799
        %v1205 = vpack.c.b16 %v818, %v809
        %v1206 = vpack.c.b16 %v819, %v810
        %v1207 = vpack.c.b16 %v820, %v811
        %v1208 = vpack.c.b16 %v821, %v812
        %v1209 = vpack.c.b16 %v822, %v813
        %v1210 = vpack.c.b16 %v823, %v814
        %v1211 = vpack.c.b16 %v824, %v815
        %v1212 = vpack.c.b16 %v825, %v816
        %v1213 = vpack.c.b16 %v826, %v817
        %v1214 = vpack.c.b16 %v836, %v827
        %v1215 = vpack.c.b16 %v837, %v828
        %v1216 = vpack.c.b16 %v838, %v829
        %v1217 = vpack.c.b16 %v839, %v830
        %v1218 = vpack.c.b16 %v840, %v831
        %v1219 = vpack.c.b16 %v841, %v832
        %v1220 = vpack.c.b16 %v842, %v833
        %v1221 = vpack.c.b16 %v843, %v834
        %v1222 = vpack.c.b16 %v844, %v835
        %v1223 = vpack.c.b16 %v854, %v845
        %v1224 = vpack.c.b16 %v855, %v846
        %v1225 = vpack.c.b16 %v856, %v847
        %v1226 = vpack.c.b16 %v857, %v848
        %v1227 = vpack.c.b16 %v858, %v849
        %v1228 = vpack.c.b16 %v859, %v850
        %v1229 = vpack.c.b16 %v860, %v851
        %v1230 = vpack.c.b16 %v861, %v852
        %v1231 = vpack.c.b16 %v862, %v853
        %v1232 = vpack.c.b16 %v872, %v863
        %v1233 = vpack.c.b16 %v873, %v864
        %v1234 = vpack.c.b16 %v874, %v865
        %v1235 = vpack.c.b16 %v875, %v866
        %v1236 = vpack.c.b16 %v876, %v867
        %v1237 = vpack.c.b16 %v877, %v868
        %v1238 = vpack.c.b16 %v878, %v869
        %v1239 = vpack.c.b16 %v879, %v870
        %v1240 = vpack.c.b16 %v880, %v871
        %v1241 = vpack.c.b16 %v890, %v881
        %v1242 = vpack.c.b16 %v891, %v882
        %v1243 = vpack.c.b16 %v892, %v883
        %v1244 = vpack.c.b16 %v893, %v884
        %v1245 = vpack.c.b16 %v894, %v885
        %v1246 = vpack.c.b16 %v895, %v886
        %v1247 = vpack.c.b16 %v896, %v887
        %v1248 = vpack.c.b16 %v897, %v888
        %v1249 = vpack.c.b16 %v898, %v889
        %v1250 = vpack.c.b16 %v908, %v899
        %v1251 = vpack.c.b16 %v909, %v900
        %v1252 = vpack.c.b16 %v910, %v901
        %v1253 = vpack.c.b16 %v911, %v902
        %v1254 = vpack.c.b16 %v912, %v903
        %v1255 = vpack.c.b16 %v913, %v904
        %v1256 = vpack.c.b16 %v914, %v905
        %v1257 = vpack.c.b16 %v915, %v906
        %v1258 = vpack.c.b16 %v916, %v907
        %v1259 = vpack.c.b16 %v926, %v917
        %v1260 = vpack.c.b16 %v927, %v918
        %v1261 = vpack.c.b16 %v928, %v919
        %v1262 = vpack.c.b16 %v929, %v920
        %v1263 = vpack.c.b16 %v930, %v921
        %v1264 = vpack.c.b16 %v931, %v922
        %v1265 = vpack.c.b16 %v932, %v923
        %v1266 = vpack.c.b16 %v933, %v924
        %v1267 = vpack.c.b16 %v934, %v925
        %v1268 = vpack.c.b16 %v944, %v935
        %v1269 = vpack.c.b16 %v945, %v936
        %v1270 = vpack.c.b16 %v946, %v937
        %v1271 = vpack.c.b16 %v947, %v938
        %v1272 = vpack.c.b16 %v948, %v939
        %v1273 = vpack.c.b16 %v949, %v940
        %v1274 = vpack.c.b16 %v950, %v941
        %v1275 = vpack.c.b16 %v951, %v942
        %v1276 = vpack.c.b16 %v952, %v943
        %v1277 = vpack.c.b16 %v962, %v953
        %v1278 = vpack.c.b16 %v963, %v954
        %v1279 = vpack.c.b16 %v964, %v955
        %v1280 = vpack.c.b16 %v965, %v956
        %v1281 = vpack.c.b16 %v966, %v957
        %v1282 = vpack.c.b16 %v967, %v958
        %v1283 = vpack.c.b16 %v968, %v959
        %v1284 = vpack.c.b16 %v969, %v960
        %v1285 = vpack.c.b16 %v970, %v961
        %v1286 = vpack.c.b16 %v980, %v971
        %v1287 = vpack.c.b16 %v981, %v972
        %v1288 = vpack.c.b16 %v982, %v973
        %v1289 = vpack.c.b16 %v983, %v974
        %v1290 = vpack.c.b16 %v984, %v975
        %v1291 = vpack.c.b16 %v985, %v976
        %v1292 = vpack.c.b16 %v986, %v977
        %v1293 = vpack.c.b16 %v987, %v978
        %v1294 = vpack.c.b16 %v988, %v979
        %v1295 = vpack.c.b16 %v998, %v989
        %v1296 = vpack.c.b16 %v999, %v990
        %v1297 = vpack.c.b16 %v1000, %v991
        %v1298 = vpack.c.b16 %v1001, %v992
        %v1299 = vpack.c.b16 %v1002, %v993
        %v1300 = vpack.c.b16 %v1003, %v994
        %v1301 = vpack.c.b16 %v1004, %v995
        %v1302 = vpack.c.b16 %v1005, %v996
        %v1303 = vpack.c.b16 %v1006, %v997
        %v1304 = vpack.c.b16 %v1016, %v1007
        %v1305 = vpack.c.b16 %v1017, %v1008
        %v1306 = vpack.c.b16 %v1018, %v1009
        %v1307 = vpack.c.b16 %v1019, %v1010
        %v1308 = vpack.c.b16 %v1020, %v1011
        %v1309 = vpack.c.b16 %v1021, %v1012
        %v1310 = vpack.c.b16 %v1022, %v1013
        %v1311 = vpack.c.b16 %v1023, %v1014
        %v1312 = vpack.c.b16 %v1024, %v1015
        %v1313 = vpack.c.b16 %v1034, %v1025
        %v1314 = vpack.c.b16 %v1035, %v1026
        %v1315 = vpack.c.b16 %v1036, %v1027
        %v1316 = vpack.c.b16 %v1037, %v1028
        %v1317 = vpack.c.b16 %v1038, %v1029
        %v1318 = vpack.c.b16 %v1039, %v1030
        %v1319 = vpack.c.b16 %v1040, %v1031
        %v1320 = vpack.c.b16 %v1041, %v1032
        %v1321 = vpack.c.b16 %v1042, %v1033
        %v1322 = vpack.c.b16 %v1052, %v1043
        %v1323 = vpack.c.b16 %v1053, %v1044
        %v1324 = vpack.c.b16 %v1054, %v1045
        %v1325 = vpack.c.b16 %v1055, %v1046
        %v1326 = vpack.c.b16 %v1056, %v1047
        %v1327 = vpack.c.b16 %v1057, %v1048
        %v1328 = vpack.c.b16 %v1058, %v1049
        %v1329 = vpack.c.b16 %v1059, %v1050
        %v1330 = vpack.c.b16 %v1060, %v1051
        %v1331 = vpack.c.b16 %v1070, %v1061
        %v1332 = vpack.c.b16 %v1071, %v1062
        %v1333 = vpack.c.b16 %v1072, %v1063
        %v1334 = vpack.c.b16 %v1073, %v1064
        %v1335 = vpack.c.b16 %v1074, %v1065
        %v1336 = vpack.c.b16 %v1075, %v1066
        %v1337 = vpack.c.b16 %v1076, %v1067
        %v1338 = vpack.c.b16 %v1077, %v1068
        %v1339 = vpack.c.b16 %v1078, %v1069
        %v1340 = vpack.c.b16 %v1088, %v1079
        %v1341 = vpack.c.b16 %v1089, %v1080
        %v1342 = vpack.c.b16 %v1090, %v1081
        %v1343 = vpack.c.b16 %v1091, %v1082
        %v1344 = vpack.c.b16 %v1092, %v1083
        %v1345 = vpack.c.b16 %v1093, %v1084
        %v1346 = vpack.c.b16 %v1094, %v1085
        %v1347 = vpack.c.b16 %v1095, %v1086
        %v1348 = vpack.c.b16 %v1096, %v1087
        %v1349 = vpack.c.b16 %v1106, %v1097
        %v1350 = vpack.c.b16 %v1107, %v1098
        %v1351 = vpack.c.b16 %v1108, %v1099
        %v1352 = vpack.c.b16 %v1109, %v1100
        %v1353 = vpack.c.b16 %v1110, %v1101
        %v1354 = vpack.c.b16 %v1111, %v1102
        %v1355 = vpack.c.b16 %v1112, %v1103
        %v1356 = vpack.c.b16 %v1113, %v1104
        %v1357 = vpack.c.b16 %v1114, %v1105
        %v1358 = vpack.c.b16 %v1124, %v1115
        %v1359 = vpack.c.b16 %v1125, %v1116
        %v1360 = vpack.c.b16 %v1126, %v1117
        %v1361 = vpack.c.b16 %v1127, %v1118
        %v1362 = vpack.c.b16 %v1128, %v1119
        %v1363 = vpack.c.b16 %v1129, %v1120
        %v1364 = vpack.c.b16 %v1130, %v1121
        %v1365 = vpack.c.b16 %v1131, %v1122
        %v1366 = vpack.c.b16 %v1132, %v1123
        %v1367 = vpack.c.b16 %v1142, %v1133
        %v1368 = vpack.c.b16 %v1143, %v1134
        %v1369 = vpack.c.b16 %v1144, %v1135
        %v1370 = vpack.c.b16 %v1145, %v1136
        %v1371 = vpack.c.b16 %v1146, %v1137
        %v1372 = vpack.c.b16 %v1147, %v1138
        %v1373 = vpack.c.b16 %v1148, %v1139
        %v1374 = vpack.c.b16 %v1149, %v1140
        %v1375 = vpack.c.b16 %v1150, %v1141
        %v1376 = vpack.c.b16 %v1160, %v1151
        %v1377 = vpack.c.b16 %v1161, %v1152
        %v1378 = vpack.c.b16 %v1162, %v1153
        %v1379 = vpack.c.b16 %v1163, %v1154
        %v1380 = vpack.c.b16 %v1164, %v1155
        %v1381 = vpack.c.b16 %v1165, %v1156
        %v1382 = vpack.c.b16 %v1166, %v1157
        %v1383 = vpack.c.b16 %v1167, %v1158
        %v1384 = vpack.c.b16 %v1168, %v1159
        %1601 = vmatprep.subr.bf16.mxu0 %v1170
        %1602 = vmatpush1.bf16.msra.mxu0 %v1169
        %1603 = vmatprep.subr.bf16.mxu0 %v1179
        %1604 = vmatpush1.bf16.msra.mxu0 %v1178
        %1605 = vmatprep.subr.bf16.mxu0 %v1188
        %1606 = vmatpush1.bf16.msra.mxu0 %v1187
        %1607 = vmatprep.subr.bf16.mxu0 %v1197
        %1608 = vmatpush1.bf16.msra.mxu0 %v1196
        %1609 = vmatprep.subr.bf16.mxu0 %v1206
        %1610 = vmatpush1.bf16.msra.mxu0 %v1205
        %1611 = vmatprep.subr.bf16.mxu0 %v1215
        %1612 = vmatpush1.bf16.msra.mxu0 %v1214
        %1613 = vmatprep.subr.bf16.mxu0 %v1224
        %1614 = vmatpush1.bf16.msra.mxu0 %v1223
        %1615 = vmatprep.subr.bf16.mxu0 %v1233
        %1616 = vmatpush1.bf16.msra.mxu0 %v1232
        %1617 = vmatprep.subr.bf16.mxu0 %v1242
        %1618 = vmatpush1.bf16.msra.mxu0 %v1241
        %1619 = vmatprep.subr.bf16.mxu0 %v1251
        %1620 = vmatpush1.bf16.msra.mxu0 %v1250
        %1621 = vmatprep.subr.bf16.mxu0 %v1260
        %1622 = vmatpush1.bf16.msra.mxu0 %v1259
        %1623 = vmatprep.subr.bf16.mxu0 %v1269
        %1624 = vmatpush1.bf16.msra.mxu0 %v1268
        %1625 = vmatprep.subr.bf16.mxu0 %v1278
        %1626 = vmatpush1.bf16.msra.mxu0 %v1277
        %1627 = vmatprep.subr.bf16.mxu0 %v1287
        %1628 = vmatpush1.bf16.msra.mxu0 %v1286
        %1629 = vmatprep.subr.bf16.mxu0 %v1296
        %1630 = vmatpush1.bf16.msra.mxu0 %v1295
        %1631 = vmatprep.subr.bf16.mxu0 %v1305
        %1632 = vmatpush1.bf16.msra.mxu0 %v1304
        %1633 = vmatprep.mubr.bf16.mxu0 %v492
        %1634 = vmatmul.mubr.bf16.gmra.mrb[0].mxu0 %v491
        %v1635 = vpop.f32.mrb[0].mxu0
        %v1636 = vadd.f32 0.0, %v1635
        %v1637 = vpop.f32.mrb[0].mxu0
        %v1638 = vadd.f32 0.0, %v1637
        %v1639 = vpop.f32.mrb[0].mxu0
        %v1640 = vpop.f32.mrb[0].mxu0
        %1641 = vdwg.mxu0
        %1642 = vmatprep.subr.bf16.mxu0 %v1314
        %1643 = vmatpush1.bf16.msra.mxu0 %v1313
        %1644 = vmatprep.subr.bf16.mxu0 %v1323
        %1645 = vmatpush1.bf16.msra.mxu0 %v1322
        %1646 = vmatprep.subr.bf16.mxu0 %v1332
        %1647 = vmatpush1.bf16.msra.mxu0 %v1331
        %1648 = vmatprep.subr.bf16.mxu0 %v1341
        %1649 = vmatpush1.bf16.msra.mxu0 %v1340
        %1650 = vmatprep.subr.bf16.mxu0 %v1350
        %1651 = vmatpush1.bf16.msra.mxu0 %v1349
        %1652 = vmatprep.subr.bf16.mxu0 %v1359
        %1653 = vmatpush1.bf16.msra.mxu0 %v1358
        %1654 = vmatprep.subr.bf16.mxu0 %v1368
        %1655 = vmatpush1.bf16.msra.mxu0 %v1367
        %1656 = vmatprep.subr.bf16.mxu0 %v1377
        %1657 = vmatpush1.bf16.msra.mxu0 %v1376
        %1658 = vmatprep.subr.bf16.mxu0 0
        %1659 = vmatpush1.bf16.msra.mxu0 0
        %1660 = vmatprep.subr.bf16.mxu0 0
        %1661 = vmatpush1.bf16.msra.mxu0 0
        %1662 = vmatprep.subr.bf16.mxu0 0
        %1663 = vmatpush1.bf16.msra.mxu0 0
        %1664 = vmatprep.subr.bf16.mxu0 0
        %1665 = vmatpush1.bf16.msra.mxu0 0
        %1666 = vmatprep.subr.bf16.mxu0 0
        %1667 = vmatpush1.bf16.msra.mxu0 0
        %1668 = vmatprep.subr.bf16.mxu0 0
        %1669 = vmatpush1.bf16.msra.mxu0 0
        %1670 = vmatprep.subr.bf16.mxu0 0
        %1671 = vmatpush1.bf16.msra.mxu0 0
        %1672 = vmatprep.subr.bf16.mxu0 0
        %1673 = vmatpush1.bf16.msra.mxu0 0
        %1674 = vmatprep.mubr.bf16.mxu0 0
        %1675 = vmatmul.mubr.bf16.gmra.mrb[0].mxu0 %v493
        %v1676 = vpop.f32.mrb[0].mxu0
        %v1677 = vadd.f32 %v1636, %v1676
        %v1678 = vpop.f32.mrb[0].mxu0
        %v1679 = vadd.f32 %v1638, %v1678
        %v1680 = vpop.f32.mrb[0].mxu0
        %v1681 = vpop.f32.mrb[0].mxu0
        %1682 = vdwg.mxu0
        %1683 = vmatprep.subr.bf16.mxu0 %v1172
        %1684 = vmatpush1.bf16.msra.mxu0 %v1171
        %1685 = vmatprep.subr.bf16.mxu0 %v1181
        %1686 = vmatpush1.bf16.msra.mxu0 %v1180
        %1687 = vmatprep.subr.bf16.mxu0 %v1190
        %1688 = vmatpush1.bf16.msra.mxu0 %v1189
        %1689 = vmatprep.subr.bf16.mxu0 %v1199
        %1690 = vmatpush1.bf16.msra.mxu0 %v1198
        %1691 = vmatprep.subr.bf16.mxu0 %v1208
        %1692 = vmatpush1.bf16.msra.mxu0 %v1207
        %1693 = vmatprep.subr.bf16.mxu0 %v1217
        %1694 = vmatpush1.bf16.msra.mxu0 %v1216
        %1695 = vmatprep.subr.bf16.mxu0 %v1226
        %1696 = vmatpush1.bf16.msra.mxu0 %v1225
        %1697 = vmatprep.subr.bf16.mxu0 %v1235
        %1698 = vmatpush1.bf16.msra.mxu0 %v1234
        %1699 = vmatprep.subr.bf16.mxu0 %v1244
        %1700 = vmatpush1.bf16.msra.mxu0 %v1243
        %1701 = vmatprep.subr.bf16.mxu0 %v1253
        %1702 = vmatpush1.bf16.msra.mxu0 %v1252
        %1703 = vmatprep.subr.bf16.mxu0 %v1262
        %1704 = vmatpush1.bf16.msra.mxu0 %v1261
        %1705 = vmatprep.subr.bf16.mxu0 %v1271
        %1706 = vmatpush1.bf16.msra.mxu0 %v1270
        %1707 = vmatprep.subr.bf16.mxu0 %v1280
        %1708 = vmatpush1.bf16.msra.mxu0 %v1279
        %1709 = vmatprep.subr.bf16.mxu0 %v1289
        %1710 = vmatpush1.bf16.msra.mxu0 %v1288
        %1711 = vmatprep.subr.bf16.mxu0 %v1298
        %1712 = vmatpush1.bf16.msra.mxu0 %v1297
        %1713 = vmatprep.subr.bf16.mxu0 %v1307
        %1714 = vmatpush1.bf16.msra.mxu0 %v1306
        %1715 = vmatprep.mubr.bf16.mxu0 %v492
        %1716 = vmatmul.mubr.bf16.gmra.mrb[0].mxu0 %v491
        %v1717 = vpop.f32.mrb[0].mxu0
        %v1718 = vadd.f32 0.0, %v1717
        %v1719 = vpop.f32.mrb[0].mxu0
        %v1720 = vadd.f32 0.0, %v1719
        %v1721 = vpop.f32.mrb[0].mxu0
        %v1722 = vpop.f32.mrb[0].mxu0
        %1723 = vdwg.mxu0
        %1724 = vmatprep.subr.bf16.mxu0 %v1316
        %1725 = vmatpush1.bf16.msra.mxu0 %v1315
        %1726 = vmatprep.subr.bf16.mxu0 %v1325
        %1727 = vmatpush1.bf16.msra.mxu0 %v1324
        %1728 = vmatprep.subr.bf16.mxu0 %v1334
        %1729 = vmatpush1.bf16.msra.mxu0 %v1333
        %1730 = vmatprep.subr.bf16.mxu0 %v1343
        %1731 = vmatpush1.bf16.msra.mxu0 %v1342
        %1732 = vmatprep.subr.bf16.mxu0 %v1352
        %1733 = vmatpush1.bf16.msra.mxu0 %v1351
        %1734 = vmatprep.subr.bf16.mxu0 %v1361
        %1735 = vmatpush1.bf16.msra.mxu0 %v1360
        %1736 = vmatprep.subr.bf16.mxu0 %v1370
        %1737 = vmatpush1.bf16.msra.mxu0 %v1369
        %1738 = vmatprep.subr.bf16.mxu0 %v1379
        %1739 = vmatpush1.bf16.msra.mxu0 %v1378
        %1740 = vmatprep.subr.bf16.mxu0 0
        %1741 = vmatpush1.bf16.msra.mxu0 0
        %1742 = vmatprep.subr.bf16.mxu0 0
        %1743 = vmatpush1.bf16.msra.mxu0 0
        %1744 = vmatprep.subr.bf16.mxu0 0
        %1745 = vmatpush1.bf16.msra.mxu0 0
        %1746 = vmatprep.subr.bf16.mxu0 0
        %1747 = vmatpush1.bf16.msra.mxu0 0
        %1748 = vmatprep.subr.bf16.mxu0 0
        %1749 = vmatpush1.bf16.msra.mxu0 0
        %1750 = vmatprep.subr.bf16.mxu0 0
        %1751 = vmatpush1.bf16.msra.mxu0 0
        %1752 = vmatprep.subr.bf16.mxu0 0
        %1753 = vmatpush1.bf16.msra.mxu0 0
        %1754 = vmatprep.subr.bf16.mxu0 0
        %1755 = vmatpush1.bf16.msra.mxu0 0
        %1756 = vmatprep.mubr.bf16.mxu0 0
        %1757 = vmatmul.mubr.bf16.gmra.mrb[0].mxu0 %v493
        %v1758 = vpop.f32.mrb[0].mxu0
        %v1759 = vadd.f32 %v1718, %v1758
        %v1760 = vpop.f32.mrb[0].mxu0
        %v1761 = vadd.f32 %v1720, %v1760
        %v1762 = vpop.f32.mrb[0].mxu0
        %v1763 = vpop.f32.mrb[0].mxu0
        %1764 = vdwg.mxu0
        %1765 = vmatprep.subr.bf16.mxu0 %v1174
        %1766 = vmatpush1.bf16.msra.mxu0 %v1173
        %1767 = vmatprep.subr.bf16.mxu0 %v1183
        %1768 = vmatpush1.bf16.msra.mxu0 %v1182
        %1769 = vmatprep.subr.bf16.mxu0 %v1192
        %1770 = vmatpush1.bf16.msra.mxu0 %v1191
        %1771 = vmatprep.subr.bf16.mxu0 %v1201
        %1772 = vmatpush1.bf16.msra.mxu0 %v1200
        %1773 = vmatprep.subr.bf16.mxu0 %v1210
        %1774 = vmatpush1.bf16.msra.mxu0 %v1209
        %1775 = vmatprep.subr.bf16.mxu0 %v1219
        %1776 = vmatpush1.bf16.msra.mxu0 %v1218
        %1777 = vmatprep.subr.bf16.mxu0 %v1228
        %1778 = vmatpush1.bf16.msra.mxu0 %v1227
        %1779 = vmatprep.subr.bf16.mxu0 %v1237
        %1780 = vmatpush1.bf16.msra.mxu0 %v1236
        %1781 = vmatprep.subr.bf16.mxu0 %v1246
        %1782 = vmatpush1.bf16.msra.mxu0 %v1245
        %1783 = vmatprep.subr.bf16.mxu0 %v1255
        %1784 = vmatpush1.bf16.msra.mxu0 %v1254
        %1785 = vmatprep.subr.bf16.mxu0 %v1264
        %1786 = vmatpush1.bf16.msra.mxu0 %v1263
        %1787 = vmatprep.subr.bf16.mxu0 %v1273
        %1788 = vmatpush1.bf16.msra.mxu0 %v1272
        %1789 = vmatprep.subr.bf16.mxu0 %v1282
        %1790 = vmatpush1.bf16.msra.mxu0 %v1281
        %1791 = vmatprep.subr.bf16.mxu0 %v1291
        %1792 = vmatpush1.bf16.msra.mxu0 %v1290
        %1793 = vmatprep.subr.bf16.mxu0 %v1300
        %1794 = vmatpush1.bf16.msra.mxu0 %v1299
        %1795 = vmatprep.subr.bf16.mxu0 %v1309
        %1796 = vmatpush1.bf16.msra.mxu0 %v1308
        %1797 = vmatprep.mubr.bf16.mxu0 %v492
        %1798 = vmatmul.mubr.bf16.gmra.mrb[0].mxu0 %v491
        %v1799 = vpop.f32.mrb[0].mxu0
        %v1800 = vadd.f32 0.0, %v1799
        %v1801 = vpop.f32.mrb[0].mxu0
        %v1802 = vadd.f32 0.0, %v1801
        %v1803 = vpop.f32.mrb[0].mxu0
        %v1804 = vpop.f32.mrb[0].mxu0
        %1805 = vdwg.mxu0
        %1806 = vmatprep.subr.bf16.mxu0 %v1318
        %1807 = vmatpush1.bf16.msra.mxu0 %v1317
        %1808 = vmatprep.subr.bf16.mxu0 %v1327
        %1809 = vmatpush1.bf16.msra.mxu0 %v1326
        %1810 = vmatprep.subr.bf16.mxu0 %v1336
        %1811 = vmatpush1.bf16.msra.mxu0 %v1335
        %1812 = vmatprep.subr.bf16.mxu0 %v1345
        %1813 = vmatpush1.bf16.msra.mxu0 %v1344
        %1814 = vmatprep.subr.bf16.mxu0 %v1354
        %1815 = vmatpush1.bf16.msra.mxu0 %v1353
        %1816 = vmatprep.subr.bf16.mxu0 %v1363
        %1817 = vmatpush1.bf16.msra.mxu0 %v1362
        %1818 = vmatprep.subr.bf16.mxu0 %v1372
        %1819 = vmatpush1.bf16.msra.mxu0 %v1371
        %1820 = vmatprep.subr.bf16.mxu0 %v1381
        %1821 = vmatpush1.bf16.msra.mxu0 %v1380
        %1822 = vmatprep.subr.bf16.mxu0 0
        %1823 = vmatpush1.bf16.msra.mxu0 0
        %1824 = vmatprep.subr.bf16.mxu0 0
        %1825 = vmatpush1.bf16.msra.mxu0 0
        %1826 = vmatprep.subr.bf16.mxu0 0
        %1827 = vmatpush1.bf16.msra.mxu0 0
        %1828 = vmatprep.subr.bf16.mxu0 0
        %1829 = vmatpush1.bf16.msra.mxu0 0
        %1830 = vmatprep.subr.bf16.mxu0 0
        %1831 = vmatpush1.bf16.msra.mxu0 0
        %1832 = vmatprep.subr.bf16.mxu0 0
        %1833 = vmatpush1.bf16.msra.mxu0 0
        %1834 = vmatprep.subr.bf16.mxu0 0
        %1835 = vmatpush1.bf16.msra.mxu0 0
        %1836 = vmatprep.subr.bf16.mxu0 0
        %1837 = vmatpush1.bf16.msra.mxu0 0
        %1838 = vmatprep.mubr.bf16.mxu0 0
        %1839 = vmatmul.mubr.bf16.gmra.mrb[0].mxu0 %v493
        %v1840 = vpop.f32.mrb[0].mxu0
        %v1841 = vadd.f32 %v1800, %v1840
        %v1842 = vpop.f32.mrb[0].mxu0
        %v1843 = vadd.f32 %v1802, %v1842
        %v1844 = vpop.f32.mrb[0].mxu0
        %v1845 = vpop.f32.mrb[0].mxu0
        %1846 = vdwg.mxu0
        %1847 = vmatprep.subr.bf16.mxu0 %v1176
        %1848 = vmatpush1.bf16.msra.mxu0 %v1175
        %1849 = vmatprep.subr.bf16.mxu0 %v1185
        %1850 = vmatpush1.bf16.msra.mxu0 %v1184
        %1851 = vmatprep.subr.bf16.mxu0 %v1194
        %1852 = vmatpush1.bf16.msra.mxu0 %v1193
        %1853 = vmatprep.subr.bf16.mxu0 %v1203
        %1854 = vmatpush1.bf16.msra.mxu0 %v1202
        %1855 = vmatprep.subr.bf16.mxu0 %v1212
        %1856 = vmatpush1.bf16.msra.mxu0 %v1211
        %1857 = vmatprep.subr.bf16.mxu0 %v1221
        %1858 = vmatpush1.bf16.msra.mxu0 %v1220
        %1859 = vmatprep.subr.bf16.mxu0 %v1230
        %1860 = vmatpush1.bf16.msra.mxu0 %v1229
        %1861 = vmatprep.subr.bf16.mxu0 %v1239
        %1862 = vmatpush1.bf16.msra.mxu0 %v1238
        %1863 = vmatprep.subr.bf16.mxu0 %v1248
        %1864 = vmatpush1.bf16.msra.mxu0 %v1247
        %1865 = vmatprep.subr.bf16.mxu0 %v1257
        %1866 = vmatpush1.bf16.msra.mxu0 %v1256
        %1867 = vmatprep.subr.bf16.mxu0 %v1266
        %1868 = vmatpush1.bf16.msra.mxu0 %v1265
        %1869 = vmatprep.subr.bf16.mxu0 %v1275
        %1870 = vmatpush1.bf16.msra.mxu0 %v1274
        %1871 = vmatprep.subr.bf16.mxu0 %v1284
        %1872 = vmatpush1.bf16.msra.mxu0 %v1283
        %1873 = vmatprep.subr.bf16.mxu0 %v1293
        %1874 = vmatpush1.bf16.msra.mxu0 %v1292
        %1875 = vmatprep.subr.bf16.mxu0 %v1302
        %1876 = vmatpush1.bf16.msra.mxu0 %v1301
        %1877 = vmatprep.subr.bf16.mxu0 %v1311
        %1878 = vmatpush1.bf16.msra.mxu0 %v1310
        %1879 = vmatprep.mubr.bf16.mxu0 %v492
        %1880 = vmatmul.mubr.bf16.gmra.mrb[0].mxu0 %v491
        %v1881 = vpop.f32.mrb[0].mxu0
        %v1882 = vadd.f32 0.0, %v1881
        %v1883 = vpop.f32.mrb[0].mxu0
        %v1884 = vadd.f32 0.0, %v1883
        %v1885 = vpop.f32.mrb[0].mxu0
        %v1886 = vpop.f32.mrb[0].mxu0
        %1887 = vdwg.mxu0
        %1888 = vmatprep.subr.bf16.mxu0 %v1320
        %1889 = vmatpush1.bf16.msra.mxu0 %v1319
        %1890 = vmatprep.subr.bf16.mxu0 %v1329
        %1891 = vmatpush1.bf16.msra.mxu0 %v1328
        %1892 = vmatprep.subr.bf16.mxu0 %v1338
        %1893 = vmatpush1.bf16.msra.mxu0 %v1337
        %1894 = vmatprep.subr.bf16.mxu0 %v1347
        %1895 = vmatpush1.bf16.msra.mxu0 %v1346
        %1896 = vmatprep.subr.bf16.mxu0 %v1356
        %1897 = vmatpush1.bf16.msra.mxu0 %v1355
        %1898 = vmatprep.subr.bf16.mxu0 %v1365
        %1899 = vmatpush1.bf16.msra.mxu0 %v1364
        %1900 = vmatprep.subr.bf16.mxu0 %v1374
        %1901 = vmatpush1.bf16.msra.mxu0 %v1373
        %1902 = vmatprep.subr.bf16.mxu0 %v1383
        %1903 = vmatpush1.bf16.msra.mxu0 %v1382
        %1904 = vmatprep.subr.bf16.mxu0 0
        %1905 = vmatpush1.bf16.msra.mxu0 0
        %1906 = vmatprep.subr.bf16.mxu0 0
        %1907 = vmatpush1.bf16.msra.mxu0 0
        %1908 = vmatprep.subr.bf16.mxu0 0
        %1909 = vmatpush1.bf16.msra.mxu0 0
        %1910 = vmatprep.subr.bf16.mxu0 0
        %1911 = vmatpush1.bf16.msra.mxu0 0
        %1912 = vmatprep.subr.bf16.mxu0 0
        %1913 = vmatpush1.bf16.msra.mxu0 0
        %1914 = vmatprep.subr.bf16.mxu0 0
        %1915 = vmatpush1.bf16.msra.mxu0 0
        %1916 = vmatprep.subr.bf16.mxu0 0
        %1917 = vmatpush1.bf16.msra.mxu0 0
        %1918 = vmatprep.subr.bf16.mxu0 0
        %1919 = vmatpush1.bf16.msra.mxu0 0
        %1920 = vmatprep.mubr.bf16.mxu0 0
        %1921 = vmatmul.mubr.bf16.gmra.mrb[0].mxu0 %v493
        %v1922 = vpop.f32.mrb[0].mxu0
        %v1923 = vadd.f32 %v1882, %v1922
        %v1924 = vpop.f32.mrb[0].mxu0
        %v1925 = vadd.f32 %v1884, %v1924
        %v1926 = vpop.f32.mrb[0].mxu0
        %v1927 = vpop.f32.mrb[0].mxu0
        %1928 = vdwg.mxu0
        %1929 = vmatprep.subr.bf16.mxu0 0
        %1930 = vmatpush1.bf16.msra.mxu0 %v1177
        %1931 = vmatprep.subr.bf16.mxu0 0
        %1932 = vmatpush1.bf16.msra.mxu0 %v1186
        %1933 = vmatprep.subr.bf16.mxu0 0
        %1934 = vmatpush1.bf16.msra.mxu0 %v1195
        %1935 = vmatprep.subr.bf16.mxu0 0
        %1936 = vmatpush1.bf16.msra.mxu0 %v1204
        %1937 = vmatprep.subr.bf16.mxu0 0
        %1938 = vmatpush1.bf16.msra.mxu0 %v1213
        %1939 = vmatprep.subr.bf16.mxu0 0
        %1940 = vmatpush1.bf16.msra.mxu0 %v1222
        %1941 = vmatprep.subr.bf16.mxu0 0
        %1942 = vmatpush1.bf16.msra.mxu0 %v1231
        %1943 = vmatprep.subr.bf16.mxu0 0
        %1944 = vmatpush1.bf16.msra.mxu0 %v1240
        %1945 = vmatprep.subr.bf16.mxu0 0
        %1946 = vmatpush1.bf16.msra.mxu0 %v1249
        %1947 = vmatprep.subr.bf16.mxu0 0
        %1948 = vmatpush1.bf16.msra.mxu0 %v1258
        %1949 = vmatprep.subr.bf16.mxu0 0
        %1950 = vmatpush1.bf16.msra.mxu0 %v1267
        %1951 = vmatprep.subr.bf16.mxu0 0
        %1952 = vmatpush1.bf16.msra.mxu0 %v1276
        %1953 = vmatprep.subr.bf16.mxu0 0
        %1954 = vmatpush1.bf16.msra.mxu0 %v1285
        %1955 = vmatprep.subr.bf16.mxu0 0
        %1956 = vmatpush1.bf16.msra.mxu0 %v1294
        %1957 = vmatprep.subr.bf16.mxu0 0
        %1958 = vmatpush1.bf16.msra.mxu0 %v1303
        %1959 = vmatprep.subr.bf16.mxu0 0
        %1960 = vmatpush1.bf16.msra.mxu0 %v1312
        %1961 = vmatprep.mubr.bf16.mxu0 %v492
        %1962 = vmatmul.mubr.bf16.gmra.mrb[0].mxu0 %v491
        %v1963 = vpop.f32.mrb[0].mxu0
        %v1964 = vadd.f32 0.0, %v1963
        %v1965 = vpop.f32.mrb[0].mxu0
        %v1966 = vpop.f32.mrb[0].mxu0
        %v1967 = vpop.f32.mrb[0].mxu0
        %1968 = vdwg.mxu0
        %1969 = vmatprep.subr.bf16.mxu0 0
        %1970 = vmatpush1.bf16.msra.mxu0 %v1321
        %1971 = vmatprep.subr.bf16.mxu0 0
        %1972 = vmatpush1.bf16.msra.mxu0 %v1330
        %1973 = vmatprep.subr.bf16.mxu0 0
        %1974 = vmatpush1.bf16.msra.mxu0 %v1339
        %1975 = vmatprep.subr.bf16.mxu0 0
        %1976 = vmatpush1.bf16.msra.mxu0 %v1348
        %1977 = vmatprep.subr.bf16.mxu0 0
        %1978 = vmatpush1.bf16.msra.mxu0 %v1357
        %1979 = vmatprep.subr.bf16.mxu0 0
        %1980 = vmatpush1.bf16.msra.mxu0 %v1366
        %1981 = vmatprep.subr.bf16.mxu0 0
        %1982 = vmatpush1.bf16.msra.mxu0 %v1375
        %1983 = vmatprep.subr.bf16.mxu0 0
        %1984 = vmatpush1.bf16.msra.mxu0 %v1384
        %1985 = vmatprep.subr.bf16.mxu0 0
        %1986 = vmatpush1.bf16.msra.mxu0 0
        %1987 = vmatprep.subr.bf16.mxu0 0
        %1988 = vmatpush1.bf16.msra.mxu0 0
        %1989 = vmatprep.subr.bf16.mxu0 0
        %1990 = vmatpush1.bf16.msra.mxu0 0
        %1991 = vmatprep.subr.bf16.mxu0 0
        %1992 = vmatpush1.bf16.msra.mxu0 0
        %1993 = vmatprep.subr.bf16.mxu0 0
        %1994 = vmatpush1.bf16.msra.mxu0 0
        %1995 = vmatprep.subr.bf16.mxu0 0
        %1996 = vmatpush1.bf16.msra.mxu0 0
        %1997 = vmatprep.subr.bf16.mxu0 0
        %1998 = vmatpush1.bf16.msra.mxu0 0
        %1999 = vmatprep.subr.bf16.mxu0 0
        %2000 = vmatpush1.bf16.msra.mxu0 0
        %2001 = vmatprep.mubr.bf16.mxu0 0
        %2002 = vmatmul.mubr.bf16.gmra.mrb[0].mxu0 %v493
        %v2003 = vpop.f32.mrb[0].mxu0
        %v2004 = vadd.f32 %v1964, %v2003
        %v2005 = vpop.f32.mrb[0].mxu0
        %v2006 = vpop.f32.mrb[0].mxu0
        %v2007 = vpop.f32.mrb[0].mxu0
        %2008 = vdwg.mxu0
        %v2009 = vpack.c.bf16 %v1677, %v1677
        %v2010 = vpack.c.bf16 %v1679, %v1679
        %v2011 = vpack.c.bf16 %v1759, %v1759
        %v2012 = vpack.c.bf16 %v1761, %v1761
        %v2013 = vpack.c.bf16 %v1841, %v1841
        %v2014 = vpack.c.bf16 %v1843, %v1843
        %v2015 = vpack.c.bf16 %v1923, %v1923
        %v2016 = vpack.c.bf16 %v1925, %v1925
        %v2017 = vpack.c.bf16 %v2004, %v2004
        %v2018 = vlaneseq
        %v2019 = vshrl.u32 %v2018, 7
        %v2020 = vlaneseq
        %v2021 = vand.u32 %v2020, 127
        %vm2022 = vcmp.le.s32.totalorder %v2021, %v2019
        %vm2023 = vcmask 523264
        %v2025 = vsel %vm2023, %v2009, 0
        %v2028 = vsel %vm2023, %v2012, 0
        %2030 = vmatprep.subr.bf16.mxu0 0
        %2031 = vmatpush1.bf16.xpose.msra.mxu0 %v2028
        %2032 = vmatprep.subr.bf16.mxu0 0
        %2033 = vmatpush1.bf16.xpose.msra.mxu0 0
        %2034 = vmatprep.subr.bf16.mxu0 0
        %2035 = vmatpush1.bf16.xpose.msra.mxu0 0
        %2036 = vmatprep.subr.bf16.mxu0 0
        %2037 = vmatpush1.bf16.xpose.msra.mxu0 0
        %2038 = vmatprep.subr.bf16.mxu0 0
        %2039 = vmatpush1.bf16.xpose.msra.mxu0 0
        %2040 = vmatprep.subr.bf16.mxu0 0
        %2041 = vmatpush1.bf16.xpose.msra.mxu0 0
        %2042 = vmatprep.subr.bf16.mxu0 0
        %2043 = vmatpush1.bf16.xpose.msra.mxu0 0
        %2044 = vmatprep.subr.bf16.mxu0 0
        %2045 = vmatpush1.bf16.xpose.msra.mxu0 0
        %2046 = vmatprep.subr.bf16.mxu0 0
        %2047 = vmatpush1.bf16.xpose.msra.mxu0 0
        %2048 = vmatprep.subr.bf16.mxu0 0
        %2049 = vmatpush1.bf16.xpose.msra.mxu0 0
        %2050 = vmatprep.subr.bf16.mxu0 0
        %2051 = vmatpush1.bf16.xpose.msra.mxu0 0
        %2052 = vmatprep.subr.bf16.mxu0 0
        %2053 = vmatpush1.bf16.xpose.msra.mxu0 0
        %2054 = vmatprep.subr.bf16.mxu0 0
        %2055 = vmatpush1.bf16.xpose.msra.mxu0 0
        %2056 = vmatprep.subr.bf16.mxu0 0
        %2057 = vmatpush1.bf16.xpose.msra.mxu0 0
        %2058 = vmatprep.subr.bf16.mxu0 0
        %2059 = vmatpush1.bf16.xpose.msra.mxu0 0
        %2060 = vmatprep.subr.bf16.mxu0 0
        %2061 = vmatpush1.bf16.xpose.msra.mxu0 0
        %2062 = vmatprep.mubr.bf16.mxu0 0
        %2063 = vmatmul.mubr.bf16.gmra.mrb[0].mxu0 %v2025
        %v2064 = vpop.f32.mrb[0].mxu0
        %v2065 = vadd.f32 0.0, %v2064
        %v2066 = vpop.f32.mrb[0].mxu0
        %v2067 = vpop.f32.mrb[0].mxu0
        %v2068 = vpop.f32.mrb[0].mxu0
        %2069 = vdwg.mxu0
        %v2070 = vsel %vm2022, %v2065, -inf
        %vm2071 = vcmask 64512
        %v2072 = vsel %vm2071, %v2070, -inf
        %2073 = vmax.xlane.f32.xlu0 %v2072
        %v2074 = vpop.xlane.xlu0 %2073
        %v2075 = vsub.f32 %v2070, %v2074
        %v2076 = vmul.f32 %v2075, 1.442695
        %v2077 = vpow.pop %v2076
        %v2078 = vsel %vm2071, %v2077, 0.0
        %2079 = vadd.xlane.f32.xlu0 %v2078
        %v2080 = vpop.xlane.xlu0 %2079
        %v2081 = vpack.c.bf16 %v2077, %v2077
        %v2083 = vsel %vm2071, %v2081, 0
        %vm2085 = vcmask 1043456
        %v2087 = vsel %vm2085, %v2015, 0
        %2089 = vmatprep.subr.bf16.mxu0 0
        %2090 = vmatpush1.bf16.msra.mxu0 %v2087
        %2091 = vmatprep.subr.bf16.mxu0 0
        %2092 = vmatpush1.bf16.msra.mxu0 0
        %2093 = vmatprep.subr.bf16.mxu0 0
        %2094 = vmatpush1.bf16.msra.mxu0 0
        %2095 = vmatprep.subr.bf16.mxu0 0
        %2096 = vmatpush1.bf16.msra.mxu0 0
        %2097 = vmatprep.subr.bf16.mxu0 0
        %2098 = vmatpush1.bf16.msra.mxu0 0
        %2099 = vmatprep.subr.bf16.mxu0 0
        %2100 = vmatpush1.bf16.msra.mxu0 0
        %2101 = vmatprep.subr.bf16.mxu0 0
        %2102 = vmatpush1.bf16.msra.mxu0 0
        %2103 = vmatprep.subr.bf16.mxu0 0
        %2104 = vmatpush1.bf16.msra.mxu0 0
        %2105 = vmatprep.subr.bf16.mxu0 0
        %2106 = vmatpush1.bf16.msra.mxu0 0
        %2107 = vmatprep.subr.bf16.mxu0 0
        %2108 = vmatpush1.bf16.msra.mxu0 0
        %2109 = vmatprep.subr.bf16.mxu0 0
        %2110 = vmatpush1.bf16.msra.mxu0 0
        %2111 = vmatprep.subr.bf16.mxu0 0
        %2112 = vmatpush1.bf16.msra.mxu0 0
        %2113 = vmatprep.subr.bf16.mxu0 0
        %2114 = vmatpush1.bf16.msra.mxu0 0
        %2115 = vmatprep.subr.bf16.mxu0 0
        %2116 = vmatpush1.bf16.msra.mxu0 0
        %2117 = vmatprep.subr.bf16.mxu0 0
        %2118 = vmatpush1.bf16.msra.mxu0 0
        %2119 = vmatprep.subr.bf16.mxu0 0
        %2120 = vmatpush1.bf16.msra.mxu0 0
        %2121 = vmatprep.mubr.bf16.mxu0 0
        %2122 = vmatmul.mubr.bf16.gmra.mrb[0].mxu0 %v2083
        %v2123 = vpop.f32.mrb[0].mxu0
        %v2124 = vadd.f32 0.0, %v2123
        %v2125 = vpop.f32.mrb[0].mxu0
        %v2126 = vpop.f32.mrb[0].mxu0
        %v2127 = vpop.f32.mrb[0].mxu0
        %2128 = vdwg.mxu0
        %v2129 = vrcp.pop %v2080
        %v2130 = vmul.f32 %v2124, %v2129
        %v2131 = vpack.c.bf16 %v2130, %v2130
        %2133 = vrot.lane.b32.xlu0 %v2009, 64
        %v2134 = vpop.permute.xlu0 %2133
        %2136 = vrot.lane.b32.xlu0 %v2012, 64
        %v2137 = vpop.permute.xlu0 %2136
        %v2139 = vsel %vm2023, %v2134, 0
        %v2142 = vsel %vm2023, %v2137, 0
        %2144 = vmatprep.subr.bf16.mxu0 0
        %2145 = vmatpush1.bf16.xpose.msra.mxu0 %v2142
        %2146 = vmatprep.subr.bf16.mxu0 0
        %2147 = vmatpush1.bf16.xpose.msra.mxu0 0
        %2148 = vmatprep.subr.bf16.mxu0 0
        %2149 = vmatpush1.bf16.xpose.msra.mxu0 0
        %2150 = vmatprep.subr.bf16.mxu0 0
        %2151 = vmatpush1.bf16.xpose.msra.mxu0 0
        %2152 = vmatprep.subr.bf16.mxu0 0
        %2153 = vmatpush1.bf16.xpose.msra.mxu0 0
        %2154 = vmatprep.subr.bf16.mxu0 0
        %2155 = vmatpush1.bf16.xpose.msra.mxu0 0
        %2156 = vmatprep.subr.bf16.mxu0 0
        %2157 = vmatpush1.bf16.xpose.msra.mxu0 0
        %2158 = vmatprep.subr.bf16.mxu0 0
        %2159 = vmatpush1.bf16.xpose.msra.mxu0 0
        %2160 = vmatprep.subr.bf16.mxu0 0
        %2161 = vmatpush1.bf16.xpose.msra.mxu0 0
        %2162 = vmatprep.subr.bf16.mxu0 0
        %2163 = vmatpush1.bf16.xpose.msra.mxu0 0
        %2164 = vmatprep.subr.bf16.mxu0 0
        %2165 = vmatpush1.bf16.xpose.msra.mxu0 0
        %2166 = vmatprep.subr.bf16.mxu0 0
        %2167 = vmatpush1.bf16.xpose.msra.mxu0 0
        %2168 = vmatprep.subr.bf16.mxu0 0
        %2169 = vmatpush1.bf16.xpose.msra.mxu0 0
        %2170 = vmatprep.subr.bf16.mxu0 0
        %2171 = vmatpush1.bf16.xpose.msra.mxu0 0
        %2172 = vmatprep.subr.bf16.mxu0 0
        %2173 = vmatpush1.bf16.xpose.msra.mxu0 0
        %2174 = vmatprep.subr.bf16.mxu0 0
        %2175 = vmatpush1.bf16.xpose.msra.mxu0 0
        %2176 = vmatprep.mubr.bf16.mxu0 0
        %2177 = vmatmul.mubr.bf16.gmra.mrb[0].mxu0 %v2139
        %v2178 = vpop.f32.mrb[0].mxu0
        %v2179 = vadd.f32 0.0, %v2178
        %v2180 = vpop.f32.mrb[0].mxu0
        %v2181 = vpop.f32.mrb[0].mxu0
        %v2182 = vpop.f32.mrb[0].mxu0
        %2183 = vdwg.mxu0
        %v2184 = vsel %vm2022, %v2179, -inf
        %v2185 = vsel %vm2071, %v2184, -inf
        %2186 = vmax.xlane.f32.xlu0 %v2185
        %v2187 = vpop.xlane.xlu0 %2186
        %v2188 = vsub.f32 %v2184, %v2187
        %v2189 = vmul.f32 %v2188, 1.442695
        %v2190 = vpow.pop %v2189
        %v2191 = vsel %vm2071, %v2190, 0.0
        %2192 = vadd.xlane.f32.xlu0 %v2191
        %v2193 = vpop.xlane.xlu0 %2192
        %v2194 = vpack.c.bf16 %v2190, %v2190
        %2196 = vrot.lane.b32.xlu0 %v2015, 64
        %v2197 = vpop.permute.xlu0 %2196
        %v2199 = vsel %vm2071, %v2194, 0
        %v2202 = vsel %vm2085, %v2197, 0
        %2204 = vmatprep.subr.bf16.mxu0 0
        %2205 = vmatpush1.bf16.msra.mxu0 %v2202
        %2206 = vmatprep.subr.bf16.mxu0 0
        %2207 = vmatpush1.bf16.msra.mxu0 0
        %2208 = vmatprep.subr.bf16.mxu0 0
        %2209 = vmatpush1.bf16.msra.mxu0 0
        %2210 = vmatprep.subr.bf16.mxu0 0
        %2211 = vmatpush1.bf16.msra.mxu0 0
        %2212 = vmatprep.subr.bf16.mxu0 0
        %2213 = vmatpush1.bf16.msra.mxu0 0
        %2214 = vmatprep.subr.bf16.mxu0 0
        %2215 = vmatpush1.bf16.msra.mxu0 0
        %2216 = vmatprep.subr.bf16.mxu0 0
        %2217 = vmatpush1.bf16.msra.mxu0 0
        %2218 = vmatprep.subr.bf16.mxu0 0
        %2219 = vmatpush1.bf16.msra.mxu0 0
        %2220 = vmatprep.subr.bf16.mxu0 0
        %2221 = vmatpush1.bf16.msra.mxu0 0
        %2222 = vmatprep.subr.bf16.mxu0 0
        %2223 = vmatpush1.bf16.msra.mxu0 0
        %2224 = vmatprep.subr.bf16.mxu0 0
        %2225 = vmatpush1.bf16.msra.mxu0 0
        %2226 = vmatprep.subr.bf16.mxu0 0
        %2227 = vmatpush1.bf16.msra.mxu0 0
        %2228 = vmatprep.subr.bf16.mxu0 0
        %2229 = vmatpush1.bf16.msra.mxu0 0
        %2230 = vmatprep.subr.bf16.mxu0 0
        %2231 = vmatpush1.bf16.msra.mxu0 0
        %2232 = vmatprep.subr.bf16.mxu0 0
        %2233 = vmatpush1.bf16.msra.mxu0 0
        %2234 = vmatprep.subr.bf16.mxu0 0
        %2235 = vmatpush1.bf16.msra.mxu0 0
        %2236 = vmatprep.mubr.bf16.mxu0 0
        %2237 = vmatmul.mubr.bf16.gmra.mrb[0].mxu0 %v2199
        %v2238 = vpop.f32.mrb[0].mxu0
        %v2239 = vadd.f32 0.0, %v2238
        %v2240 = vpop.f32.mrb[0].mxu0
        %v2241 = vpop.f32.mrb[0].mxu0
        %v2242 = vpop.f32.mrb[0].mxu0
        %2243 = vdwg.mxu0
        %v2244 = vrcp.pop %v2193
        %v2245 = vmul.f32 %v2239, %v2244
        %v2246 = vpack.c.bf16 %v2245, %v2245
        %v2248 = vsel %vm2023, %v2010, 0
        %v2251 = vsel %vm2023, %v2013, 0
        %2253 = vmatprep.subr.bf16.mxu0 0
        %2254 = vmatpush1.bf16.xpose.msra.mxu0 %v2251
        %2255 = vmatprep.subr.bf16.mxu0 0
        %2256 = vmatpush1.bf16.xpose.msra.mxu0 0
        %2257 = vmatprep.subr.bf16.mxu0 0
        %2258 = vmatpush1.bf16.xpose.msra.mxu0 0
        %2259 = vmatprep.subr.bf16.mxu0 0
        %2260 = vmatpush1.bf16.xpose.msra.mxu0 0
        %2261 = vmatprep.subr.bf16.mxu0 0
        %2262 = vmatpush1.bf16.xpose.msra.mxu0 0
        %2263 = vmatprep.subr.bf16.mxu0 0
        %2264 = vmatpush1.bf16.xpose.msra.mxu0 0
        %2265 = vmatprep.subr.bf16.mxu0 0
        %2266 = vmatpush1.bf16.xpose.msra.mxu0 0
        %2267 = vmatprep.subr.bf16.mxu0 0
        %2268 = vmatpush1.bf16.xpose.msra.mxu0 0
        %2269 = vmatprep.subr.bf16.mxu0 0
        %2270 = vmatpush1.bf16.xpose.msra.mxu0 0
        %2271 = vmatprep.subr.bf16.mxu0 0
        %2272 = vmatpush1.bf16.xpose.msra.mxu0 0
        %2273 = vmatprep.subr.bf16.mxu0 0
        %2274 = vmatpush1.bf16.xpose.msra.mxu0 0
        %2275 = vmatprep.subr.bf16.mxu0 0
        %2276 = vmatpush1.bf16.xpose.msra.mxu0 0
        %2277 = vmatprep.subr.bf16.mxu0 0
        %2278 = vmatpush1.bf16.xpose.msra.mxu0 0
        %2279 = vmatprep.subr.bf16.mxu0 0
        %2280 = vmatpush1.bf16.xpose.msra.mxu0 0
        %2281 = vmatprep.subr.bf16.mxu0 0
        %2282 = vmatpush1.bf16.xpose.msra.mxu0 0
        %2283 = vmatprep.subr.bf16.mxu0 0
        %2284 = vmatpush1.bf16.xpose.msra.mxu0 0
        %2285 = vmatprep.mubr.bf16.mxu0 0
        %2286 = vmatmul.mubr.bf16.gmra.mrb[0].mxu0 %v2248
        %v2287 = vpop.f32.mrb[0].mxu0
        %v2288 = vadd.f32 0.0, %v2287
        %v2289 = vpop.f32.mrb[0].mxu0
        %v2290 = vpop.f32.mrb[0].mxu0
        %v2291 = vpop.f32.mrb[0].mxu0
        %2292 = vdwg.mxu0
        %v2293 = vsel %vm2022, %v2288, -inf
        %v2294 = vsel %vm2071, %v2293, -inf
        %2295 = vmax.xlane.f32.xlu0 %v2294
        %v2296 = vpop.xlane.xlu0 %2295
        %v2297 = vsub.f32 %v2293, %v2296
        %v2298 = vmul.f32 %v2297, 1.442695
        %v2299 = vpow.pop %v2298
        %v2300 = vsel %vm2071, %v2299, 0.0
        %2301 = vadd.xlane.f32.xlu0 %v2300
        %v2302 = vpop.xlane.xlu0 %2301
        %v2303 = vpack.c.bf16 %v2299, %v2299
        %v2305 = vsel %vm2071, %v2303, 0
        %v2308 = vsel %vm2085, %v2016, 0
        %2310 = vmatprep.subr.bf16.mxu0 0
        %2311 = vmatpush1.bf16.msra.mxu0 %v2308
        %2312 = vmatprep.subr.bf16.mxu0 0
        %2313 = vmatpush1.bf16.msra.mxu0 0
        %2314 = vmatprep.subr.bf16.mxu0 0
        %2315 = vmatpush1.bf16.msra.mxu0 0
        %2316 = vmatprep.subr.bf16.mxu0 0
        %2317 = vmatpush1.bf16.msra.mxu0 0
        %2318 = vmatprep.subr.bf16.mxu0 0
        %2319 = vmatpush1.bf16.msra.mxu0 0
        %2320 = vmatprep.subr.bf16.mxu0 0
        %2321 = vmatpush1.bf16.msra.mxu0 0
        %2322 = vmatprep.subr.bf16.mxu0 0
        %2323 = vmatpush1.bf16.msra.mxu0 0
        %2324 = vmatprep.subr.bf16.mxu0 0
        %2325 = vmatpush1.bf16.msra.mxu0 0
        %2326 = vmatprep.subr.bf16.mxu0 0
        %2327 = vmatpush1.bf16.msra.mxu0 0
        %2328 = vmatprep.subr.bf16.mxu0 0
        %2329 = vmatpush1.bf16.msra.mxu0 0
        %2330 = vmatprep.subr.bf16.mxu0 0
        %2331 = vmatpush1.bf16.msra.mxu0 0
        %2332 = vmatprep.subr.bf16.mxu0 0
        %2333 = vmatpush1.bf16.msra.mxu0 0
        %2334 = vmatprep.subr.bf16.mxu0 0
        %2335 = vmatpush1.bf16.msra.mxu0 0
        %2336 = vmatprep.subr.bf16.mxu0 0
        %2337 = vmatpush1.bf16.msra.mxu0 0
        %2338 = vmatprep.subr.bf16.mxu0 0
        %2339 = vmatpush1.bf16.msra.mxu0 0
        %2340 = vmatprep.subr.bf16.mxu0 0
        %2341 = vmatpush1.bf16.msra.mxu0 0
        %2342 = vmatprep.mubr.bf16.mxu0 0
        %2343 = vmatmul.mubr.bf16.gmra.mrb[0].mxu0 %v2305
        %v2344 = vpop.f32.mrb[0].mxu0
        %v2345 = vadd.f32 0.0, %v2344
        %v2346 = vpop.f32.mrb[0].mxu0
        %v2347 = vpop.f32.mrb[0].mxu0
        %v2348 = vpop.f32.mrb[0].mxu0
        %2349 = vdwg.mxu0
        %v2350 = vrcp.pop %v2302
        %v2351 = vmul.f32 %v2345, %v2350
        %v2352 = vpack.c.bf16 %v2351, %v2351
        %2354 = vrot.lane.b32.xlu0 %v2010, 64
        %v2355 = vpop.permute.xlu0 %2354
        %2357 = vrot.lane.b32.xlu0 %v2013, 64
        %v2358 = vpop.permute.xlu0 %2357
        %v2360 = vsel %vm2023, %v2355, 0
        %v2363 = vsel %vm2023, %v2358, 0
        %2365 = vmatprep.subr.bf16.mxu0 0
        %2366 = vmatpush1.bf16.xpose.msra.mxu0 %v2363
        %2367 = vmatprep.subr.bf16.mxu0 0
        %2368 = vmatpush1.bf16.xpose.msra.mxu0 0
        %2369 = vmatprep.subr.bf16.mxu0 0
        %2370 = vmatpush1.bf16.xpose.msra.mxu0 0
        %2371 = vmatprep.subr.bf16.mxu0 0
        %2372 = vmatpush1.bf16.xpose.msra.mxu0 0
        %2373 = vmatprep.subr.bf16.mxu0 0
        %2374 = vmatpush1.bf16.xpose.msra.mxu0 0
        %2375 = vmatprep.subr.bf16.mxu0 0
        %2376 = vmatpush1.bf16.xpose.msra.mxu0 0
        %2377 = vmatprep.subr.bf16.mxu0 0
        %2378 = vmatpush1.bf16.xpose.msra.mxu0 0
        %2379 = vmatprep.subr.bf16.mxu0 0
        %2380 = vmatpush1.bf16.xpose.msra.mxu0 0
        %2381 = vmatprep.subr.bf16.mxu0 0
        %2382 = vmatpush1.bf16.xpose.msra.mxu0 0
        %2383 = vmatprep.subr.bf16.mxu0 0
        %2384 = vmatpush1.bf16.xpose.msra.mxu0 0
        %2385 = vmatprep.subr.bf16.mxu0 0
        %2386 = vmatpush1.bf16.xpose.msra.mxu0 0
        %2387 = vmatprep.subr.bf16.mxu0 0
        %2388 = vmatpush1.bf16.xpose.msra.mxu0 0
        %2389 = vmatprep.subr.bf16.mxu0 0
        %2390 = vmatpush1.bf16.xpose.msra.mxu0 0
        %2391 = vmatprep.subr.bf16.mxu0 0
        %2392 = vmatpush1.bf16.xpose.msra.mxu0 0
        %2393 = vmatprep.subr.bf16.mxu0 0
        %2394 = vmatpush1.bf16.xpose.msra.mxu0 0
        %2395 = vmatprep.subr.bf16.mxu0 0
        %2396 = vmatpush1.bf16.xpose.msra.mxu0 0
        %2397 = vmatprep.mubr.bf16.mxu0 0
        %2398 = vmatmul.mubr.bf16.gmra.mrb[0].mxu0 %v2360
        %v2399 = vpop.f32.mrb[0].mxu0
        %v2400 = vadd.f32 0.0, %v2399
        %v2401 = vpop.f32.mrb[0].mxu0
        %v2402 = vpop.f32.mrb[0].mxu0
        %v2403 = vpop.f32.mrb[0].mxu0
        %2404 = vdwg.mxu0
        %v2405 = vsel %vm2022, %v2400, -inf
        %v2406 = vsel %vm2071, %v2405, -inf
        %2407 = vmax.xlane.f32.xlu0 %v2406
        %v2408 = vpop.xlane.xlu0 %2407
        %v2409 = vsub.f32 %v2405, %v2408
        %v2410 = vmul.f32 %v2409, 1.442695
        %v2411 = vpow.pop %v2410
        %v2412 = vsel %vm2071, %v2411, 0.0
        %2413 = vadd.xlane.f32.xlu0 %v2412
        %v2414 = vpop.xlane.xlu0 %2413
        %v2415 = vpack.c.bf16 %v2411, %v2411
        %2417 = vrot.lane.b32.xlu0 %v2016, 64
        %v2418 = vpop.permute.xlu0 %2417
        %v2420 = vsel %vm2071, %v2415, 0
        %v2423 = vsel %vm2085, %v2418, 0
        %2425 = vmatprep.subr.bf16.mxu0 0
        %2426 = vmatpush1.bf16.msra.mxu0 %v2423
        %2427 = vmatprep.subr.bf16.mxu0 0
        %2428 = vmatpush1.bf16.msra.mxu0 0
        %2429 = vmatprep.subr.bf16.mxu0 0
        %2430 = vmatpush1.bf16.msra.mxu0 0
        %2431 = vmatprep.subr.bf16.mxu0 0
        %2432 = vmatpush1.bf16.msra.mxu0 0
        %2433 = vmatprep.subr.bf16.mxu0 0
        %2434 = vmatpush1.bf16.msra.mxu0 0
        %2435 = vmatprep.subr.bf16.mxu0 0
        %2436 = vmatpush1.bf16.msra.mxu0 0
        %2437 = vmatprep.subr.bf16.mxu0 0
        %2438 = vmatpush1.bf16.msra.mxu0 0
        %2439 = vmatprep.subr.bf16.mxu0 0
        %2440 = vmatpush1.bf16.msra.mxu0 0
        %2441 = vmatprep.subr.bf16.mxu0 0
        %2442 = vmatpush1.bf16.msra.mxu0 0
        %2443 = vmatprep.subr.bf16.mxu0 0
        %2444 = vmatpush1.bf16.msra.mxu0 0
        %2445 = vmatprep.subr.bf16.mxu0 0
        %2446 = vmatpush1.bf16.msra.mxu0 0
        %2447 = vmatprep.subr.bf16.mxu0 0
        %2448 = vmatpush1.bf16.msra.mxu0 0
        %2449 = vmatprep.subr.bf16.mxu0 0
        %2450 = vmatpush1.bf16.msra.mxu0 0
        %2451 = vmatprep.subr.bf16.mxu0 0
        %2452 = vmatpush1.bf16.msra.mxu0 0
        %2453 = vmatprep.subr.bf16.mxu0 0
        %2454 = vmatpush1.bf16.msra.mxu0 0
        %2455 = vmatprep.subr.bf16.mxu0 0
        %2456 = vmatpush1.bf16.msra.mxu0 0
        %2457 = vmatprep.mubr.bf16.mxu0 0
        %2458 = vmatmul.mubr.bf16.gmra.mrb[0].mxu0 %v2420
        %v2459 = vpop.f32.mrb[0].mxu0
        %v2460 = vadd.f32 0.0, %v2459
        %v2461 = vpop.f32.mrb[0].mxu0
        %v2462 = vpop.f32.mrb[0].mxu0
        %v2463 = vpop.f32.mrb[0].mxu0
        %2464 = vdwg.mxu0
        %v2465 = vrcp.pop %v2414
        %v2466 = vmul.f32 %v2460, %v2465
        %v2467 = vpack.c.bf16 %v2466, %v2466
        %v2469 = vsel %vm2023, %v2011, 0
        %v2472 = vsel %vm2023, %v2014, 0
        %2474 = vmatprep.subr.bf16.mxu0 0
        %2475 = vmatpush1.bf16.xpose.msra.mxu0 %v2472
        %2476 = vmatprep.subr.bf16.mxu0 0
        %2477 = vmatpush1.bf16.xpose.msra.mxu0 0
        %2478 = vmatprep.subr.bf16.mxu0 0
        %2479 = vmatpush1.bf16.xpose.msra.mxu0 0
        %2480 = vmatprep.subr.bf16.mxu0 0
        %2481 = vmatpush1.bf16.xpose.msra.mxu0 0
        %2482 = vmatprep.subr.bf16.mxu0 0
        %2483 = vmatpush1.bf16.xpose.msra.mxu0 0
        %2484 = vmatprep.subr.bf16.mxu0 0
        %2485 = vmatpush1.bf16.xpose.msra.mxu0 0
        %2486 = vmatprep.subr.bf16.mxu0 0
        %2487 = vmatpush1.bf16.xpose.msra.mxu0 0
        %2488 = vmatprep.subr.bf16.mxu0 0
        %2489 = vmatpush1.bf16.xpose.msra.mxu0 0
        %2490 = vmatprep.subr.bf16.mxu0 0
        %2491 = vmatpush1.bf16.xpose.msra.mxu0 0
        %2492 = vmatprep.subr.bf16.mxu0 0
        %2493 = vmatpush1.bf16.xpose.msra.mxu0 0
        %2494 = vmatprep.subr.bf16.mxu0 0
        %2495 = vmatpush1.bf16.xpose.msra.mxu0 0
        %2496 = vmatprep.subr.bf16.mxu0 0
        %2497 = vmatpush1.bf16.xpose.msra.mxu0 0
        %2498 = vmatprep.subr.bf16.mxu0 0
        %2499 = vmatpush1.bf16.xpose.msra.mxu0 0
        %2500 = vmatprep.subr.bf16.mxu0 0
        %2501 = vmatpush1.bf16.xpose.msra.mxu0 0
        %2502 = vmatprep.subr.bf16.mxu0 0
        %2503 = vmatpush1.bf16.xpose.msra.mxu0 0
        %2504 = vmatprep.subr.bf16.mxu0 0
        %2505 = vmatpush1.bf16.xpose.msra.mxu0 0
        %2506 = vmatprep.mubr.bf16.mxu0 0
        %2507 = vmatmul.mubr.bf16.gmra.mrb[0].mxu0 %v2469
        %v2508 = vpop.f32.mrb[0].mxu0
        %v2509 = vadd.f32 0.0, %v2508
        %v2510 = vpop.f32.mrb[0].mxu0
        %v2511 = vpop.f32.mrb[0].mxu0
        %v2512 = vpop.f32.mrb[0].mxu0
        %2513 = vdwg.mxu0
        %v2514 = vsel %vm2022, %v2509, -inf
        %v2515 = vsel %vm2071, %v2514, -inf
        %2516 = vmax.xlane.f32.xlu0 %v2515
        %v2517 = vpop.xlane.xlu0 %2516
        %v2518 = vsub.f32 %v2514, %v2517
        %v2519 = vmul.f32 %v2518, 1.442695
        %v2520 = vpow.pop %v2519
        %v2521 = vsel %vm2071, %v2520, 0.0
        %2522 = vadd.xlane.f32.xlu0 %v2521
        %v2523 = vpop.xlane.xlu0 %2522
        %v2524 = vpack.c.bf16 %v2520, %v2520
        %v2526 = vsel %vm2071, %v2524, 0
        %v2529 = vsel %vm2085, %v2017, 0
        %2531 = vmatprep.subr.bf16.mxu0 0
        %2532 = vmatpush1.bf16.msra.mxu0 %v2529
        %2533 = vmatprep.subr.bf16.mxu0 0
        %2534 = vmatpush1.bf16.msra.mxu0 0
        %2535 = vmatprep.subr.bf16.mxu0 0
        %2536 = vmatpush1.bf16.msra.mxu0 0
        %2537 = vmatprep.subr.bf16.mxu0 0
        %2538 = vmatpush1.bf16.msra.mxu0 0
        %2539 = vmatprep.subr.bf16.mxu0 0
        %2540 = vmatpush1.bf16.msra.mxu0 0
        %2541 = vmatprep.subr.bf16.mxu0 0
        %2542 = vmatpush1.bf16.msra.mxu0 0
        %2543 = vmatprep.subr.bf16.mxu0 0
        %2544 = vmatpush1.bf16.msra.mxu0 0
        %2545 = vmatprep.subr.bf16.mxu0 0
        %2546 = vmatpush1.bf16.msra.mxu0 0
        %2547 = vmatprep.subr.bf16.mxu0 0
        %2548 = vmatpush1.bf16.msra.mxu0 0
        %2549 = vmatprep.subr.bf16.mxu0 0
        %2550 = vmatpush1.bf16.msra.mxu0 0
        %2551 = vmatprep.subr.bf16.mxu0 0
        %2552 = vmatpush1.bf16.msra.mxu0 0
        %2553 = vmatprep.subr.bf16.mxu0 0
        %2554 = vmatpush1.bf16.msra.mxu0 0
        %2555 = vmatprep.subr.bf16.mxu0 0
        %2556 = vmatpush1.bf16.msra.mxu0 0
        %2557 = vmatprep.subr.bf16.mxu0 0
        %2558 = vmatpush1.bf16.msra.mxu0 0
        %2559 = vmatprep.subr.bf16.mxu0 0
        %2560 = vmatpush1.bf16.msra.mxu0 0
        %2561 = vmatprep.subr.bf16.mxu0 0
        %2562 = vmatpush1.bf16.msra.mxu0 0
        %2563 = vmatprep.mubr.bf16.mxu0 0
        %2564 = vmatmul.mubr.bf16.gmra.mrb[0].mxu0 %v2526
        %v2565 = vpop.f32.mrb[0].mxu0
        %v2566 = vadd.f32 0.0, %v2565
        %v2567 = vpop.f32.mrb[0].mxu0
        %v2568 = vpop.f32.mrb[0].mxu0
        %v2569 = vpop.f32.mrb[0].mxu0
        %2570 = vdwg.mxu0
        %v2571 = vrcp.pop %v2523
        %v2572 = vmul.f32 %v2566, %v2571
        %v2573 = vpack.c.bf16 %v2572, %v2572
        %2575 = vrot.lane.b32.xlu0 %v2011, 64
        %v2576 = vpop.permute.xlu0 %2575
        %2578 = vrot.lane.b32.xlu0 %v2014, 64
        %v2579 = vpop.permute.xlu0 %2578
        %v2581 = vsel %vm2023, %v2576, 0
        %v2584 = vsel %vm2023, %v2579, 0
        %2586 = vmatprep.subr.bf16.mxu0 0
        %2587 = vmatpush1.bf16.xpose.msra.mxu0 %v2584
        %2588 = vmatprep.subr.bf16.mxu0 0
        %2589 = vmatpush1.bf16.xpose.msra.mxu0 0
        %2590 = vmatprep.subr.bf16.mxu0 0
        %2591 = vmatpush1.bf16.xpose.msra.mxu0 0
        %2592 = vmatprep.subr.bf16.mxu0 0
        %2593 = vmatpush1.bf16.xpose.msra.mxu0 0
        %2594 = vmatprep.subr.bf16.mxu0 0
        %2595 = vmatpush1.bf16.xpose.msra.mxu0 0
        %2596 = vmatprep.subr.bf16.mxu0 0
        %2597 = vmatpush1.bf16.xpose.msra.mxu0 0
        %2598 = vmatprep.subr.bf16.mxu0 0
        %2599 = vmatpush1.bf16.xpose.msra.mxu0 0
        %2600 = vmatprep.subr.bf16.mxu0 0
        %2601 = vmatpush1.bf16.xpose.msra.mxu0 0
        %2602 = vmatprep.subr.bf16.mxu0 0
        %2603 = vmatpush1.bf16.xpose.msra.mxu0 0
        %2604 = vmatprep.subr.bf16.mxu0 0
        %2605 = vmatpush1.bf16.xpose.msra.mxu0 0
        %2606 = vmatprep.subr.bf16.mxu0 0
        %2607 = vmatpush1.bf16.xpose.msra.mxu0 0
        %2608 = vmatprep.subr.bf16.mxu0 0
        %2609 = vmatpush1.bf16.xpose.msra.mxu0 0
        %2610 = vmatprep.subr.bf16.mxu0 0
        %2611 = vmatpush1.bf16.xpose.msra.mxu0 0
        %2612 = vmatprep.subr.bf16.mxu0 0
        %2613 = vmatpush1.bf16.xpose.msra.mxu0 0
        %2614 = vmatprep.subr.bf16.mxu0 0
        %2615 = vmatpush1.bf16.xpose.msra.mxu0 0
        %2616 = vmatprep.subr.bf16.mxu0 0
        %2617 = vmatpush1.bf16.xpose.msra.mxu0 0
        %2618 = vmatprep.mubr.bf16.mxu0 0
        %2619 = vmatmul.mubr.bf16.gmra.mrb[0].mxu0 %v2581
        %v2620 = vpop.f32.mrb[0].mxu0
        %v2621 = vadd.f32 0.0, %v2620
        %v2622 = vpop.f32.mrb[0].mxu0
        %v2623 = vpop.f32.mrb[0].mxu0
        %v2624 = vpop.f32.mrb[0].mxu0
        %2625 = vdwg.mxu0
        %v2626 = vsel %vm2022, %v2621, -inf
        %v2627 = vsel %vm2071, %v2626, -inf
        %2628 = vmax.xlane.f32.xlu0 %v2627
        %v2629 = vpop.xlane.xlu0 %2628
        %v2630 = vsub.f32 %v2626, %v2629
        %v2631 = vmul.f32 %v2630, 1.442695
        %v2632 = vpow.pop %v2631
        %v2633 = vsel %vm2071, %v2632, 0.0
        %2634 = vadd.xlane.f32.xlu0 %v2633
        %v2635 = vpop.xlane.xlu0 %2634
        %v2636 = vpack.c.bf16 %v2632, %v2632
        %2638 = vrot.lane.b32.xlu0 %v2017, 64
        %v2639 = vpop.permute.xlu0 %2638
        %v2641 = vsel %vm2071, %v2636, 0
        %v2644 = vsel %vm2085, %v2639, 0
        %2646 = vmatprep.subr.bf16.mxu0 0
        %2647 = vmatpush1.bf16.msra.mxu0 %v2644
        %2648 = vmatprep.subr.bf16.mxu0 0
        %2649 = vmatpush1.bf16.msra.mxu0 0
        %2650 = vmatprep.subr.bf16.mxu0 0
        %2651 = vmatpush1.bf16.msra.mxu0 0
        %2652 = vmatprep.subr.bf16.mxu0 0
        %2653 = vmatpush1.bf16.msra.mxu0 0
        %2654 = vmatprep.subr.bf16.mxu0 0
        %2655 = vmatpush1.bf16.msra.mxu0 0
        %2656 = vmatprep.subr.bf16.mxu0 0
        %2657 = vmatpush1.bf16.msra.mxu0 0
        %2658 = vmatprep.subr.bf16.mxu0 0
        %2659 = vmatpush1.bf16.msra.mxu0 0
        %2660 = vmatprep.subr.bf16.mxu0 0
        %2661 = vmatpush1.bf16.msra.mxu0 0
        %2662 = vmatprep.subr.bf16.mxu0 0
        %2663 = vmatpush1.bf16.msra.mxu0 0
        %2664 = vmatprep.subr.bf16.mxu0 0
        %2665 = vmatpush1.bf16.msra.mxu0 0
        %2666 = vmatprep.subr.bf16.mxu0 0
        %2667 = vmatpush1.bf16.msra.mxu0 0
        %2668 = vmatprep.subr.bf16.mxu0 0
        %2669 = vmatpush1.bf16.msra.mxu0 0
        %2670 = vmatprep.subr.bf16.mxu0 0
        %2671 = vmatpush1.bf16.msra.mxu0 0
        %2672 = vmatprep.subr.bf16.mxu0 0
        %2673 = vmatpush1.bf16.msra.mxu0 0
        %2674 = vmatprep.subr.bf16.mxu0 0
        %2675 = vmatpush1.bf16.msra.mxu0 0
        %2676 = vmatprep.subr.bf16.mxu0 0
        %2677 = vmatpush1.bf16.msra.mxu0 0
        %2678 = vmatprep.mubr.bf16.mxu0 0
        %2679 = vmatmul.mubr.bf16.gmra.mrb[0].mxu0 %v2641
        %v2680 = vpop.f32.mrb[0].mxu0
        %v2681 = vadd.f32 0.0, %v2680
        %v2682 = vpop.f32.mrb[0].mxu0
        %v2683 = vpop.f32.mrb[0].mxu0
        %v2684 = vpop.f32.mrb[0].mxu0
        %2685 = vdwg.mxu0
        %v2686 = vrcp.pop %v2635
        %v2687 = vmul.f32 %v2681, %v2686
        %v2688 = vpack.c.bf16 %v2687, %v2687
        %2690 = vrot.lane.b32.xlu0 %v2246, 64
        %v2691 = vpop.permute.xlu0 %2690
        %2693 = vrot.lane.b32.xlu0 %v2467, 64
        %v2694 = vpop.permute.xlu0 %2693
        %2696 = vrot.lane.b32.xlu0 %v2688, 64
        %v2697 = vpop.permute.xlu0 %2696
        %v2700 = vsel %vm2023, %v2131, %v2691
        %v2704 = vsel %vm2023, %v2352, %v2694
        %v2708 = vsel %vm2023, %v2573, %v2697
        %v2710 = vld [vmem:[#allocation7] sm:$0xff]
        %v2711 = vld [vmem:[#allocation7 + $0x8] sm:$0xf]
        %v2712 = vld [vmem:[#allocation7 + $0xc] sm:$0xff]
        %v2713 = vld [vmem:[#allocation7 + $0x14] sm:$0xf]
        %v2714 = vld [vmem:[#allocation7 + $0x18] sm:$0xff]
        %v2715 = vld [vmem:[#allocation7 + $0x20] sm:$0xf]
        %v2716 = vld [vmem:[#allocation7 + $0x24] sm:$0xff]
        %v2717 = vld [vmem:[#allocation7 + $0x2c] sm:$0xf]
        %v2718 = vld [vmem:[#allocation7 + $0x30] sm:$0xff]
        %v2719 = vld [vmem:[#allocation7 + $0x38] sm:$0xf]
        %v2720 = vld [vmem:[#allocation7 + $0x3c] sm:$0xff]
        %v2721 = vld [vmem:[#allocation7 + $0x44] sm:$0xf]
        %v2722 = vld [vmem:[#allocation7 + $0x48] sm:$0xff]
        %v2723 = vld [vmem:[#allocation7 + $0x50] sm:$0xf]
        %v2724 = vld [vmem:[#allocation7 + $0x54] sm:$0xff]
        %v2725 = vld [vmem:[#allocation7 + $0x5c] sm:$0xf]
        %v2726 = vld [vmem:[#allocation7 + $0x60] sm:$0xff]
        %v2727 = vld [vmem:[#allocation7 + $0x68] sm:$0xf]
        %v2728 = vld [vmem:[#allocation7 + $0x6c] sm:$0xff]
        %v2729 = vld [vmem:[#allocation7 + $0x74] sm:$0xf]
        %v2730 = vld [vmem:[#allocation7 + $0x78] sm:$0xff]
        %v2731 = vld [vmem:[#allocation7 + $0x80] sm:$0xf]
        %v2732 = vld [vmem:[#allocation7 + $0x84] sm:$0xff]
        %v2733 = vld [vmem:[#allocation7 + $0x8c] sm:$0xf]
        %v2734 = vld [vmem:[#allocation7 + $0x90] sm:$0xff]
        %v2735 = vld [vmem:[#allocation7 + $0x98] sm:$0xf]
        %v2736 = vld [vmem:[#allocation7 + $0x9c] sm:$0xff]
        %v2737 = vld [vmem:[#allocation7 + $0xa4] sm:$0xf]
        %v2738 = vld [vmem:[#allocation7 + $0xa8] sm:$0xff]
        %v2739 = vld [vmem:[#allocation7 + $0xb0] sm:$0xf]
        %v2740 = vld [vmem:[#allocation7 + $0xb4] sm:$0xff]
        %v2741 = vld [vmem:[#allocation7 + $0xbc] sm:$0xf]
        %v2742 = vld [vmem:[#allocation7 + $0xc0] sm:$0xff]
        %v2743 = vld [vmem:[#allocation7 + $0xc8] sm:$0xf]
        %v2744 = vld [vmem:[#allocation7 + $0xcc] sm:$0xff]
        %v2745 = vld [vmem:[#allocation7 + $0xd4] sm:$0xf]
        %v2746 = vld [vmem:[#allocation7 + $0xd8] sm:$0xff]
        %v2747 = vld [vmem:[#allocation7 + $0xe0] sm:$0xf]
        %v2748 = vld [vmem:[#allocation7 + $0xe4] sm:$0xff]
        %v2749 = vld [vmem:[#allocation7 + $0xec] sm:$0xf]
        %v2750 = vld [vmem:[#allocation7 + $0xf0] sm:$0xff]
        %v2751 = vld [vmem:[#allocation7 + $0xf8] sm:$0xf]
        %v2752 = vld [vmem:[#allocation7 + $0xfc] sm:$0xff]
        %v2753 = vld [vmem:[#allocation7 + $0x104] sm:$0xf]
        %v2754 = vld [vmem:[#allocation7 + $0x108] sm:$0xff]
        %v2755 = vld [vmem:[#allocation7 + $0x110] sm:$0xf]
        %v2756 = vld [vmem:[#allocation7 + $0x114] sm:$0xff]
        %v2757 = vld [vmem:[#allocation7 + $0x11c] sm:$0xf]
        %v2758 = vld [vmem:[#allocation7 + $0x120] sm:$0xff]
        %v2759 = vld [vmem:[#allocation7 + $0x128] sm:$0xf]
        %v2760 = vld [vmem:[#allocation7 + $0x12c] sm:$0xff]
        %v2761 = vld [vmem:[#allocation7 + $0x134] sm:$0xf]
        %v2762 = vld [vmem:[#allocation7 + $0x138] sm:$0xff]
        %v2763 = vld [vmem:[#allocation7 + $0x140] sm:$0xf]
        %v2764 = vld [vmem:[#allocation7 + $0x144] sm:$0xff]
        %v2765 = vld [vmem:[#allocation7 + $0x14c] sm:$0xf]
        %v2766 = vld [vmem:[#allocation7 + $0x150] sm:$0xff]
        %v2767 = vld [vmem:[#allocation7 + $0x158] sm:$0xf]
        %v2768 = vld [vmem:[#allocation7 + $0x15c] sm:$0xff]
        %v2769 = vld [vmem:[#allocation7 + $0x164] sm:$0xf]
        %v2770 = vld [vmem:[#allocation7 + $0x168] sm:$0xff]
        %v2771 = vld [vmem:[#allocation7 + $0x170] sm:$0xf]
        %v2772 = vld [vmem:[#allocation7 + $0x174] sm:$0xff]
        %v2773 = vld [vmem:[#allocation7 + $0x17c] sm:$0xf]
        %v2774 = vld [vmem:[#allocation7 + $0x180] sm:$0xff]
        %v2775 = vld [vmem:[#allocation7 + $0x188] sm:$0xf]
        %v2776 = vld [vmem:[#allocation7 + $0x18c] sm:$0xff]
        %v2777 = vld [vmem:[#allocation7 + $0x194] sm:$0xf]
        %v2778 = vld [vmem:[#allocation7 + $0x198] sm:$0xff]
        %v2779 = vld [vmem:[#allocation7 + $0x1a0] sm:$0xf]
        %v2780 = vld [vmem:[#allocation7 + $0x1a4] sm:$0xff]
        %v2781 = vld [vmem:[#allocation7 + $0x1ac] sm:$0xf]
        %v2782 = vld [vmem:[#allocation7 + $0x1b0] sm:$0xff]
        %v2783 = vld [vmem:[#allocation7 + $0x1b8] sm:$0xf]
        %v2784 = vld [vmem:[#allocation7 + $0x1bc] sm:$0xff]
        %v2785 = vld [vmem:[#allocation7 + $0x1c4] sm:$0xf]
        %v2786 = vld [vmem:[#allocation7 + $0x1c8] sm:$0xff]
        %v2787 = vld [vmem:[#allocation7 + $0x1d0] sm:$0xf]
        %v2788 = vld [vmem:[#allocation7 + $0x1d4] sm:$0xff]
        %v2789 = vld [vmem:[#allocation7 + $0x1dc] sm:$0xf]
        %v2790 = vld [vmem:[#allocation7 + $0x1e0] sm:$0xff]
        %v2791 = vld [vmem:[#allocation7 + $0x1e8] sm:$0xf]
        %v2792 = vld [vmem:[#allocation7 + $0x1ec] sm:$0xff]
        %v2793 = vld [vmem:[#allocation7 + $0x1f4] sm:$0xf]
        %v2794 = vld [vmem:[#allocation7 + $0x1f8] sm:$0xff]
        %v2795 = vld [vmem:[#allocation7 + $0x200] sm:$0xf]
        %v2796 = vld [vmem:[#allocation7 + $0x204] sm:$0xff]
        %v2797 = vld [vmem:[#allocation7 + $0x20c] sm:$0xf]
        %v2798 = vld [vmem:[#allocation7 + $0x210] sm:$0xff]
        %v2799 = vld [vmem:[#allocation7 + $0x218] sm:$0xf]
        %v2800 = vld [vmem:[#allocation7 + $0x21c] sm:$0xff]
        %v2801 = vld [vmem:[#allocation7 + $0x224] sm:$0xf]
        %v2802 = vld [vmem:[#allocation7 + $0x228] sm:$0xff]
        %v2803 = vld [vmem:[#allocation7 + $0x230] sm:$0xf]
        %v2804 = vld [vmem:[#allocation7 + $0x234] sm:$0xff]
        %v2805 = vld [vmem:[#allocation7 + $0x23c] sm:$0xf]
        %v2806 = vld [vmem:[%s3] sm:$0x7]
        %v2808 = vlaneseq
        %v2809 = vshrl.u32 %v2808, 7
        %v2810 = vsub.s32 0, %v2809
        %v2811 = vrot.slane %v2806, %v2810
        %v2812 = vlaneseq
        %v2813 = vshrl.u32 %v2812, 7
        %v2814 = vsub.s32 1, %v2813
        %v2815 = vrot.slane %v2806, %v2814
        %v2816 = vlaneseq
        %v2817 = vshrl.u32 %v2816, 7
        %v2818 = vsub.s32 2, %v2817
        %v2819 = vrot.slane %v2806, %v2818
        %v2919 = vunpack.c.l.b16 %v2710
        %v2920 = vunpack.c.h.b16 %v2710
        %v2921 = vunpack.c.l.b16 %v2711
        %v2922 = vunpack.c.l.b16 %v2712
        %v2923 = vunpack.c.h.b16 %v2712
        %v2924 = vunpack.c.l.b16 %v2713
        %v2925 = vunpack.c.l.b16 %v2714
        %v2926 = vunpack.c.h.b16 %v2714
        %v2927 = vunpack.c.l.b16 %v2715
        %v2928 = vunpack.c.l.b16 %v2716
        %v2929 = vunpack.c.h.b16 %v2716
        %v2930 = vunpack.c.l.b16 %v2717
        %v2931 = vunpack.c.l.b16 %v2718
        %v2932 = vunpack.c.h.b16 %v2718
        %v2933 = vunpack.c.l.b16 %v2719
        %v2934 = vunpack.c.l.b16 %v2720
        %v2935 = vunpack.c.h.b16 %v2720
        %v2936 = vunpack.c.l.b16 %v2721
        %v2937 = vunpack.c.l.b16 %v2722
        %v2938 = vunpack.c.h.b16 %v2722
        %v2939 = vunpack.c.l.b16 %v2723
        %v2940 = vunpack.c.l.b16 %v2724
        %v2941 = vunpack.c.h.b16 %v2724
        %v2942 = vunpack.c.l.b16 %v2725
        %v2943 = vunpack.c.l.b16 %v2726
        %v2944 = vunpack.c.h.b16 %v2726
        %v2945 = vunpack.c.l.b16 %v2727
        %v2946 = vunpack.c.l.b16 %v2728
        %v2947 = vunpack.c.h.b16 %v2728
        %v2948 = vunpack.c.l.b16 %v2729
        %v2949 = vunpack.c.l.b16 %v2730
        %v2950 = vunpack.c.h.b16 %v2730
        %v2951 = vunpack.c.l.b16 %v2731
        %v2952 = vunpack.c.l.b16 %v2732
        %v2953 = vunpack.c.h.b16 %v2732
        %v2954 = vunpack.c.l.b16 %v2733
        %v2955 = vunpack.c.l.b16 %v2734
        %v2956 = vunpack.c.h.b16 %v2734
        %v2957 = vunpack.c.l.b16 %v2735
        %v2958 = vunpack.c.l.b16 %v2736
        %v2959 = vunpack.c.h.b16 %v2736
        %v2960 = vunpack.c.l.b16 %v2737
        %v2961 = vunpack.c.l.b16 %v2738
        %v2962 = vunpack.c.h.b16 %v2738
        %v2963 = vunpack.c.l.b16 %v2739
        %v2964 = vunpack.c.l.b16 %v2740
        %v2965 = vunpack.c.h.b16 %v2740
        %v2966 = vunpack.c.l.b16 %v2741
        %v2967 = vunpack.c.l.b16 %v2742
        %v2968 = vunpack.c.h.b16 %v2742
        %v2969 = vunpack.c.l.b16 %v2743
        %v2970 = vunpack.c.l.b16 %v2744
        %v2971 = vunpack.c.h.b16 %v2744
        %v2972 = vunpack.c.l.b16 %v2745
        %v2973 = vunpack.c.l.b16 %v2746
        %v2974 = vunpack.c.h.b16 %v2746
        %v2975 = vunpack.c.l.b16 %v2747
        %v2976 = vunpack.c.l.b16 %v2748
        %v2977 = vunpack.c.h.b16 %v2748
        %v2978 = vunpack.c.l.b16 %v2749
        %v2979 = vunpack.c.l.b16 %v2750
        %v2980 = vunpack.c.h.b16 %v2750
        %v2981 = vunpack.c.l.b16 %v2751
        %v2982 = vunpack.c.l.b16 %v2752
        %v2983 = vunpack.c.h.b16 %v2752
        %v2984 = vunpack.c.l.b16 %v2753
        %v2985 = vunpack.c.l.b16 %v2754
        %v2986 = vunpack.c.h.b16 %v2754
        %v2987 = vunpack.c.l.b16 %v2755
        %v2988 = vunpack.c.l.b16 %v2756
        %v2989 = vunpack.c.h.b16 %v2756
        %v2990 = vunpack.c.l.b16 %v2757
        %v2991 = vunpack.c.l.b16 %v2758
        %v2992 = vunpack.c.h.b16 %v2758
        %v2993 = vunpack.c.l.b16 %v2759
        %v2994 = vunpack.c.l.b16 %v2760
        %v2995 = vunpack.c.h.b16 %v2760
        %v2996 = vunpack.c.l.b16 %v2761
        %v2997 = vunpack.c.l.b16 %v2762
        %v2998 = vunpack.c.h.b16 %v2762
        %v2999 = vunpack.c.l.b16 %v2763
        %v3000 = vunpack.c.l.b16 %v2764
        %v3001 = vunpack.c.h.b16 %v2764
        %v3002 = vunpack.c.l.b16 %v2765
        %v3003 = vunpack.c.l.b16 %v2766
        %v3004 = vunpack.c.h.b16 %v2766
        %v3005 = vunpack.c.l.b16 %v2767
        %v3006 = vunpack.c.l.b16 %v2768
        %v3007 = vunpack.c.h.b16 %v2768
        %v3008 = vunpack.c.l.b16 %v2769
        %v3009 = vunpack.c.l.b16 %v2770
        %v3010 = vunpack.c.h.b16 %v2770
        %v3011 = vunpack.c.l.b16 %v2771
        %v3012 = vunpack.c.l.b16 %v2772
        %v3013 = vunpack.c.h.b16 %v2772
        %v3014 = vunpack.c.l.b16 %v2773
        %v3015 = vunpack.c.l.b16 %v2774
        %v3016 = vunpack.c.h.b16 %v2774
        %v3017 = vunpack.c.l.b16 %v2775
        %v3018 = vunpack.c.l.b16 %v2776
        %v3019 = vunpack.c.h.b16 %v2776
        %v3020 = vunpack.c.l.b16 %v2777
        %v3021 = vunpack.c.l.b16 %v2778
        %v3022 = vunpack.c.h.b16 %v2778
        %v3023 = vunpack.c.l.b16 %v2779
        %v3024 = vunpack.c.l.b16 %v2780
        %v3025 = vunpack.c.h.b16 %v2780
        %v3026 = vunpack.c.l.b16 %v2781
        %v3027 = vunpack.c.l.b16 %v2782
        %v3028 = vunpack.c.h.b16 %v2782
        %v3029 = vunpack.c.l.b16 %v2783
        %v3030 = vunpack.c.l.b16 %v2784
        %v3031 = vunpack.c.h.b16 %v2784
        %v3032 = vunpack.c.l.b16 %v2785
        %v3033 = vunpack.c.l.b16 %v2786
        %v3034 = vunpack.c.h.b16 %v2786
        %v3035 = vunpack.c.l.b16 %v2787
        %v3036 = vunpack.c.l.b16 %v2788
        %v3037 = vunpack.c.h.b16 %v2788
        %v3038 = vunpack.c.l.b16 %v2789
        %v3039 = vunpack.c.l.b16 %v2790
        %v3040 = vunpack.c.h.b16 %v2790
        %v3041 = vunpack.c.l.b16 %v2791
        %v3042 = vunpack.c.l.b16 %v2792
        %v3043 = vunpack.c.h.b16 %v2792
        %v3044 = vunpack.c.l.b16 %v2793
        %v3045 = vunpack.c.l.b16 %v2794
        %v3046 = vunpack.c.h.b16 %v2794
        %v3047 = vunpack.c.l.b16 %v2795
        %v3048 = vunpack.c.l.b16 %v2796
        %v3049 = vunpack.c.h.b16 %v2796
        %v3050 = vunpack.c.l.b16 %v2797
        %v3051 = vunpack.c.l.b16 %v2798
        %v3052 = vunpack.c.h.b16 %v2798
        %v3053 = vunpack.c.l.b16 %v2799
        %v3054 = vunpack.c.l.b16 %v2800
        %v3055 = vunpack.c.h.b16 %v2800
        %v3056 = vunpack.c.l.b16 %v2801
        %v3057 = vunpack.c.l.b16 %v2802
        %v3058 = vunpack.c.h.b16 %v2802
        %v3059 = vunpack.c.l.b16 %v2803
        %v3060 = vunpack.c.l.b16 %v2804
        %v3061 = vunpack.c.h.b16 %v2804
        %v3062 = vunpack.c.l.b16 %v2805
        %v3063 = vpack.c.b16 %v2922, %v2919
        %v3064 = vpack.c.b16 %v2923, %v2920
        %v3065 = vpack.c.b16 %v2924, %v2921
        %v3066 = vpack.c.b16 %v2928, %v2925
        %v3067 = vpack.c.b16 %v2929, %v2926
        %v3068 = vpack.c.b16 %v2930, %v2927
        %v3069 = vpack.c.b16 %v2934, %v2931
        %v3070 = vpack.c.b16 %v2935, %v2932
        %v3071 = vpack.c.b16 %v2936, %v2933
        %v3072 = vpack.c.b16 %v2940, %v2937
        %v3073 = vpack.c.b16 %v2941, %v2938
        %v3074 = vpack.c.b16 %v2942, %v2939
        %v3075 = vpack.c.b16 %v2946, %v2943
        %v3076 = vpack.c.b16 %v2947, %v2944
        %v3077 = vpack.c.b16 %v2948, %v2945
        %v3078 = vpack.c.b16 %v2952, %v2949
        %v3079 = vpack.c.b16 %v2953, %v2950
        %v3080 = vpack.c.b16 %v2954, %v2951
        %v3081 = vpack.c.b16 %v2958, %v2955
        %v3082 = vpack.c.b16 %v2959, %v2956
        %v3083 = vpack.c.b16 %v2960, %v2957
        %v3084 = vpack.c.b16 %v2964, %v2961
        %v3085 = vpack.c.b16 %v2965, %v2962
        %v3086 = vpack.c.b16 %v2966, %v2963
        %v3087 = vpack.c.b16 %v2970, %v2967
        %v3088 = vpack.c.b16 %v2971, %v2968
        %v3089 = vpack.c.b16 %v2972, %v2969
        %v3090 = vpack.c.b16 %v2976, %v2973
        %v3091 = vpack.c.b16 %v2977, %v2974
        %v3092 = vpack.c.b16 %v2978, %v2975
        %v3093 = vpack.c.b16 %v2982, %v2979
        %v3094 = vpack.c.b16 %v2983, %v2980
        %v3095 = vpack.c.b16 %v2984, %v2981
        %v3096 = vpack.c.b16 %v2988, %v2985
        %v3097 = vpack.c.b16 %v2989, %v2986
        %v3098 = vpack.c.b16 %v2990, %v2987
        %v3099 = vpack.c.b16 %v2994, %v2991
        %v3100 = vpack.c.b16 %v2995, %v2992
        %v3101 = vpack.c.b16 %v2996, %v2993
        %v3102 = vpack.c.b16 %v3000, %v2997
        %v3103 = vpack.c.b16 %v3001, %v2998
        %v3104 = vpack.c.b16 %v3002, %v2999
        %v3105 = vpack.c.b16 %v3006, %v3003
        %v3106 = vpack.c.b16 %v3007, %v3004
        %v3107 = vpack.c.b16 %v3008, %v3005
        %v3108 = vpack.c.b16 %v3012, %v3009
        %v3109 = vpack.c.b16 %v3013, %v3010
        %v3110 = vpack.c.b16 %v3014, %v3011
        %v3111 = vpack.c.b16 %v3018, %v3015
        %v3112 = vpack.c.b16 %v3019, %v3016
        %v3113 = vpack.c.b16 %v3020, %v3017
        %v3114 = vpack.c.b16 %v3024, %v3021
        %v3115 = vpack.c.b16 %v3025, %v3022
        %v3116 = vpack.c.b16 %v3026, %v3023
        %v3117 = vpack.c.b16 %v3030, %v3027
        %v3118 = vpack.c.b16 %v3031, %v3028
        %v3119 = vpack.c.b16 %v3032, %v3029
        %v3120 = vpack.c.b16 %v3036, %v3033
        %v3121 = vpack.c.b16 %v3037, %v3034
        %v3122 = vpack.c.b16 %v3038, %v3035
        %v3123 = vpack.c.b16 %v3042, %v3039
        %v3124 = vpack.c.b16 %v3043, %v3040
        %v3125 = vpack.c.b16 %v3044, %v3041
        %v3126 = vpack.c.b16 %v3048, %v3045
        %v3127 = vpack.c.b16 %v3049, %v3046
        %v3128 = vpack.c.b16 %v3050, %v3047
        %v3129 = vpack.c.b16 %v3054, %v3051
        %v3130 = vpack.c.b16 %v3055, %v3052
        %v3131 = vpack.c.b16 %v3056, %v3053
        %v3132 = vpack.c.b16 %v3060, %v3057
        %v3133 = vpack.c.b16 %v3061, %v3058
        %v3134 = vpack.c.b16 %v3062, %v3059
        %3207 = vmatprep.subr.bf16.mxu0 %v3064
        %3208 = vmatpush1.bf16.msra.mxu0 %v3063
        %3209 = vmatprep.subr.bf16.mxu0 %v3067
        %3210 = vmatpush1.bf16.msra.mxu0 %v3066
        %3211 = vmatprep.subr.bf16.mxu0 %v3070
        %3212 = vmatpush1.bf16.msra.mxu0 %v3069
        %3213 = vmatprep.subr.bf16.mxu0 %v3073
        %3214 = vmatpush1.bf16.msra.mxu0 %v3072
        %3215 = vmatprep.subr.bf16.mxu0 %v3076
        %3216 = vmatpush1.bf16.msra.mxu0 %v3075
        %3217 = vmatprep.subr.bf16.mxu0 %v3079
        %3218 = vmatpush1.bf16.msra.mxu0 %v3078
        %3219 = vmatprep.subr.bf16.mxu0 %v3082
        %3220 = vmatpush1.bf16.msra.mxu0 %v3081
        %3221 = vmatprep.subr.bf16.mxu0 %v3085
        %3222 = vmatpush1.bf16.msra.mxu0 %v3084
        %3223 = vmatprep.subr.bf16.mxu0 %v3088
        %3224 = vmatpush1.bf16.msra.mxu0 %v3087
        %3225 = vmatprep.subr.bf16.mxu0 %v3091
        %3226 = vmatpush1.bf16.msra.mxu0 %v3090
        %3227 = vmatprep.subr.bf16.mxu0 %v3094
        %3228 = vmatpush1.bf16.msra.mxu0 %v3093
        %3229 = vmatprep.subr.bf16.mxu0 %v3097
        %3230 = vmatpush1.bf16.msra.mxu0 %v3096
        %3231 = vmatprep.subr.bf16.mxu0 %v3100
        %3232 = vmatpush1.bf16.msra.mxu0 %v3099
        %3233 = vmatprep.subr.bf16.mxu0 %v3103
        %3234 = vmatpush1.bf16.msra.mxu0 %v3102
        %3235 = vmatprep.subr.bf16.mxu0 %v3106
        %3236 = vmatpush1.bf16.msra.mxu0 %v3105
        %3237 = vmatprep.subr.bf16.mxu0 %v3109
        %3238 = vmatpush1.bf16.msra.mxu0 %v3108
        %3239 = vmatprep.mubr.bf16.mxu0 %v2704
        %3240 = vmatmul.mubr.bf16.gmra.mrb[0].mxu0 %v2700
        %v3241 = vpop.f32.mrb[0].mxu0
        %v3242 = vadd.f32 %v2811, %v3241
        %v3243 = vpop.f32.mrb[0].mxu0
        %v3244 = vadd.f32 %v2815, %v3243
        %v3245 = vpop.f32.mrb[0].mxu0
        %v3246 = vpop.f32.mrb[0].mxu0
        %3247 = vdwg.mxu0
        %3248 = vmatprep.subr.bf16.mxu0 %v3112
        %3249 = vmatpush1.bf16.msra.mxu0 %v3111
        %3250 = vmatprep.subr.bf16.mxu0 %v3115
        %3251 = vmatpush1.bf16.msra.mxu0 %v3114
        %3252 = vmatprep.subr.bf16.mxu0 %v3118
        %3253 = vmatpush1.bf16.msra.mxu0 %v3117
        %3254 = vmatprep.subr.bf16.mxu0 %v3121
        %3255 = vmatpush1.bf16.msra.mxu0 %v3120
        %3256 = vmatprep.subr.bf16.mxu0 %v3124
        %3257 = vmatpush1.bf16.msra.mxu0 %v3123
        %3258 = vmatprep.subr.bf16.mxu0 %v3127
        %3259 = vmatpush1.bf16.msra.mxu0 %v3126
        %3260 = vmatprep.subr.bf16.mxu0 %v3130
        %3261 = vmatpush1.bf16.msra.mxu0 %v3129
        %3262 = vmatprep.subr.bf16.mxu0 %v3133
        %3263 = vmatpush1.bf16.msra.mxu0 %v3132
        %3264 = vmatprep.subr.bf16.mxu0 0
        %3265 = vmatpush1.bf16.msra.mxu0 0
        %3266 = vmatprep.subr.bf16.mxu0 0
        %3267 = vmatpush1.bf16.msra.mxu0 0
        %3268 = vmatprep.subr.bf16.mxu0 0
        %3269 = vmatpush1.bf16.msra.mxu0 0
        %3270 = vmatprep.subr.bf16.mxu0 0
        %3271 = vmatpush1.bf16.msra.mxu0 0
        %3272 = vmatprep.subr.bf16.mxu0 0
        %3273 = vmatpush1.bf16.msra.mxu0 0
        %3274 = vmatprep.subr.bf16.mxu0 0
        %3275 = vmatpush1.bf16.msra.mxu0 0
        %3276 = vmatprep.subr.bf16.mxu0 0
        %3277 = vmatpush1.bf16.msra.mxu0 0
        %3278 = vmatprep.subr.bf16.mxu0 0
        %3279 = vmatpush1.bf16.msra.mxu0 0
        %3280 = vmatprep.mubr.bf16.mxu0 0
        %3281 = vmatmul.mubr.bf16.gmra.mrb[0].mxu0 %v2708
        %v3282 = vpop.f32.mrb[0].mxu0
        %v3283 = vadd.f32 %v3242, %v3282
        %v3284 = vpop.f32.mrb[0].mxu0
        %v3285 = vadd.f32 %v3244, %v3284
        %v3286 = vpop.f32.mrb[0].mxu0
        %v3287 = vpop.f32.mrb[0].mxu0
        %3288 = vdwg.mxu0
        %3289 = vmatprep.subr.bf16.mxu0 0
        %3290 = vmatpush1.bf16.msra.mxu0 %v3065
        %3291 = vmatprep.subr.bf16.mxu0 0
        %3292 = vmatpush1.bf16.msra.mxu0 %v3068
        %3293 = vmatprep.subr.bf16.mxu0 0
        %3294 = vmatpush1.bf16.msra.mxu0 %v3071
        %3295 = vmatprep.subr.bf16.mxu0 0
        %3296 = vmatpush1.bf16.msra.mxu0 %v3074
        %3297 = vmatprep.subr.bf16.mxu0 0
        %3298 = vmatpush1.bf16.msra.mxu0 %v3077
        %3299 = vmatprep.subr.bf16.mxu0 0
        %3300 = vmatpush1.bf16.msra.mxu0 %v3080
        %3301 = vmatprep.subr.bf16.mxu0 0
        %3302 = vmatpush1.bf16.msra.mxu0 %v3083
        %3303 = vmatprep.subr.bf16.mxu0 0
        %3304 = vmatpush1.bf16.msra.mxu0 %v3086
        %3305 = vmatprep.subr.bf16.mxu0 0
        %3306 = vmatpush1.bf16.msra.mxu0 %v3089
        %3307 = vmatprep.subr.bf16.mxu0 0
        %3308 = vmatpush1.bf16.msra.mxu0 %v3092
        %3309 = vmatprep.subr.bf16.mxu0 0
        %3310 = vmatpush1.bf16.msra.mxu0 %v3095
        %3311 = vmatprep.subr.bf16.mxu0 0
        %3312 = vmatpush1.bf16.msra.mxu0 %v3098
        %3313 = vmatprep.subr.bf16.mxu0 0
        %3314 = vmatpush1.bf16.msra.mxu0 %v3101
        %3315 = vmatprep.subr.bf16.mxu0 0
        %3316 = vmatpush1.bf16.msra.mxu0 %v3104
        %3317 = vmatprep.subr.bf16.mxu0 0
        %3318 = vmatpush1.bf16.msra.mxu0 %v3107
        %3319 = vmatprep.subr.bf16.mxu0 0
        %3320 = vmatpush1.bf16.msra.mxu0 %v3110
        %3321 = vmatprep.mubr.bf16.mxu0 %v2704
        %3322 = vmatmul.mubr.bf16.gmra.mrb[0].mxu0 %v2700
        %v3323 = vpop.f32.mrb[0].mxu0
        %v3324 = vadd.f32 %v2819, %v3323
        %v3325 = vpop.f32.mrb[0].mxu0
        %v3326 = vpop.f32.mrb[0].mxu0
        %v3327 = vpop.f32.mrb[0].mxu0
        %3328 = vdwg.mxu0
        %3329 = vmatprep.subr.bf16.mxu0 0
        %3330 = vmatpush1.bf16.msra.mxu0 %v3113
        %3331 = vmatprep.subr.bf16.mxu0 0
        %3332 = vmatpush1.bf16.msra.mxu0 %v3116
        %3333 = vmatprep.subr.bf16.mxu0 0
        %3334 = vmatpush1.bf16.msra.mxu0 %v3119
        %3335 = vmatprep.subr.bf16.mxu0 0
        %3336 = vmatpush1.bf16.msra.mxu0 %v3122
        %3337 = vmatprep.subr.bf16.mxu0 0
        %3338 = vmatpush1.bf16.msra.mxu0 %v3125
        %3339 = vmatprep.subr.bf16.mxu0 0
        %3340 = vmatpush1.bf16.msra.mxu0 %v3128
        %3341 = vmatprep.subr.bf16.mxu0 0
        %3342 = vmatpush1.bf16.msra.mxu0 %v3131
        %3343 = vmatprep.subr.bf16.mxu0 0
        %3344 = vmatpush1.bf16.msra.mxu0 %v3134
        %3345 = vmatprep.subr.bf16.mxu0 0
        %3346 = vmatpush1.bf16.msra.mxu0 0
        %3347 = vmatprep.subr.bf16.mxu0 0
        %3348 = vmatpush1.bf16.msra.mxu0 0
        %3349 = vmatprep.subr.bf16.mxu0 0
        %3350 = vmatpush1.bf16.msra.mxu0 0
        %3351 = vmatprep.subr.bf16.mxu0 0
        %3352 = vmatpush1.bf16.msra.mxu0 0
        %3353 = vmatprep.subr.bf16.mxu0 0
        %3354 = vmatpush1.bf16.msra.mxu0 0
        %3355 = vmatprep.subr.bf16.mxu0 0
        %3356 = vmatpush1.bf16.msra.mxu0 0
        %3357 = vmatprep.subr.bf16.mxu0 0
        %3358 = vmatpush1.bf16.msra.mxu0 0
        %3359 = vmatprep.subr.bf16.mxu0 0
        %3360 = vmatpush1.bf16.msra.mxu0 0
        %3361 = vmatprep.mubr.bf16.mxu0 0
        %3362 = vmatmul.mubr.bf16.gmra.mrb[0].mxu0 %v2708
        %v3363 = vpop.f32.mrb[0].mxu0
        %v3364 = vadd.f32 %v3324, %v3363
        %v3365 = vpop.f32.mrb[0].mxu0
        %v3366 = vpop.f32.mrb[0].mxu0
        %v3367 = vpop.f32.mrb[0].mxu0
        %3368 = vdwg.mxu0
        %3369 = vst [vmem:[%s242] sm:$0xff] %v3283
        %3370 = vst [vmem:[%s242 + $0x8] sm:$0xff] %v3285
        %3371 = vst [vmem:[%s242 + $0x10] sm:$0xff] %v3364
        %s3372 = sand.u32 %s119, 1
        %s3373 = scalar_lea.sflag [#allocation4], %s3372
        %s3374 = sand.u32 %s119, 1
        %s3375 = smul.addr %s3374, 24
        %s3376 = scalar_lea.vmem [#allocation8], %s3375
        // Predicated region
        $region49: #{tpu_custom_call.1} parent=35 // pred_check
          %p3377 = pneg %p129
        $region50: #{tpu_custom_call.1} parent=35 // pred_check_branch
          %3379 = sbr.rel (%p3377) target = $region52
        $region51: #{tpu_custom_call.1} parent=35 // pred_region
          %s3381 = ssub.s32 384, 384
          %3382 = vsyncadd %s3373, %s3381
          %s3383 = smul.addr %s22, 3
          %s3384 = smul.addr %s3383, 128
          %s3385 = scalar_lea.hbm %s4, %s3384
          %s3387 = sshll.u32 %s3376, 4
          %s3388 = int_to_ptr.vmem [resolvable:$true] %s3387
          %3390 = dma.vmem_to_hbm [thread:$0]  %s3388, 384, %s3385, %s3373
        $region52: #{tpu_custom_call.1} parent=35 // pred_fallthru
          _
      $region36: #{tpu_custom_call.1} parent=5 // pred_fallthru
        _
      %p3391 = scmp.le.s32.totalorder 2, %s17
      // Predicated region
      $region53: #{tpu_custom_call.1} parent=5 // pred_check
        %p3392 = pneg %p3391
      $region54: #{tpu_custom_call.1} parent=5 // pred_check_branch
        %3394 = sbr.rel (%p3392) target = $region56
      $region55: #{tpu_custom_call.1} parent=5 // pred_region
        %s3395 = ssub.s32 %s17, 2
        // Predicated region
        $region57: #{tpu_custom_call.1} parent=55 // pred_check
          %p3396 = pneg %p135
        $region58: #{tpu_custom_call.1} parent=55 // pred_check_branch
          %3398 = sbr.rel (%p3396) target = $region60
        $region59: #{tpu_custom_call.1} parent=55 // pred_region
          %s3399 = sand.u32 %s120, 1
          %s3400 = scalar_lea.sflag [#allocation4], %s3399
          %s3401 = sand.u32 %s120, 1
          %s3402 = smul.addr %s3401, 24
          %s3403 = scalar_lea.vmem [#allocation8], %s3402
          %3404 = dma.done %s3400, 384
        $region60: #{tpu_custom_call.1} parent=55 // pred_fallthru
          _
      $region56: #{tpu_custom_call.1} parent=5 // pred_fallthru
        _
    $region6: #{tpu_custom_call.1} parent=1 // loop_footer
      %s21 = sadd.s32 1, %s17
    $region7: #{tpu_custom_call.1} parent=1 // loop_footer_branch
      %16 = sbr.rel target = $region3
    $region8: #{tpu_custom_call.1} parent=1 // loop_exit
      _
    %3405 = vsyncpa [#allocation3], 1
    %s3406 = scalar_lea.sflag [#allocation3], 1
    %3407 = vsyncpa %s3406, 1
    %3408 = vsyncpa [#allocation6], 1
    %3409 = vsyncpa [#allocation4], 1
    %s3410 = scalar_lea.sflag [#allocation4], 1
    %3411 = vsyncpa %s3410, 1

</llo_original>
